<compile_context>
chip_gen: v7x
topology: tpu7x:2x2x1
jax: 0.10.0
libtpu: 0.0.40
codegen_flags: <defaults>
</compile_context>

<pallas_src>
import jax
import jax.numpy as jnp
from jax import lax
from jax.experimental import pallas as pl
from jax.experimental.pallas import tpu as pltpu


def _encdec_kernel(emb_x_ref,    # (S*B, E) time-major flattened encoder embeddings
                   emb_tbl_ref,  # (V, E)   embedding table (decoder lookups)
                   wih_e_ref,    # (E, 4H)
                   whh_e_ref,    # (H, 4H)
                   b_e_ref,      # (1, 4H)  bias_ih + bias_hh (encoder)
                   wih_d_ref,    # (E, 4H)
                   b_d_ref,      # (1, 4H)  bias_ih + bias_hh (decoder)
                   w_comb_ref,   # (H, 5H)  concat([whh_d, wfc], axis=1)
                   bfc_ref,      # (1, H)
                   out_ref):     # (B, T, H)
    B, T, H = out_ref.shape
    SB, E = emb_x_ref.shape
    S = SB // B
    V = emb_tbl_ref.shape[0]
    H4 = 4 * H

    # ---- hoisted loads / broadcasts (done once, outside the unrolled loops) ----
    whh_e = whh_e_ref[...]
    w_comb = w_comb_ref[...]
    bfc_b = jnp.broadcast_to(bfc_ref[...], (B, H))        # hoisted bias broadcast

    # ---- encoder input projection hoisted out of the time loop (one MXU op) ----
    gates_x = (jnp.dot(emb_x_ref[...], wih_e_ref[...],
                       preferred_element_type=jnp.float32)
               + b_e_ref[...])                             # (S*B, 4H), b_e folded

    def apply_gates(gates, c):
        # full-width nonlinearities over the 4H-lane gates vreg (2 EUP passes)
        sig = jax.nn.sigmoid(gates)
        th = jnp.tanh(gates)
        i = sig[:, 0:H]
        f = sig[:, H:2 * H]
        g = th[:, 2 * H:3 * H]
        o = sig[:, 3 * H:4 * H]
        c_new = f * c + i * g
        h_new = o * jnp.tanh(c_new)
        return h_new, c_new

    # ---- encoder: fully unrolled LSTM over S steps, zero initial state ----
    h = jnp.zeros((B, H), jnp.float32)
    c = jnp.zeros((B, H), jnp.float32)
    for t in range(S):
        gates = gates_x[t * B:(t + 1) * B, :] + jnp.dot(
            h, whh_e, preferred_element_type=jnp.float32)
        h, c = apply_gates(gates, c)

    # ---- decoder hidden init: only batch row B-1 inherits the encoder state ----
    row_ids = lax.broadcasted_iota(jnp.int32, (B, H), 0)
    is_last = row_ids == (B - 1)
    h_d = jnp.where(is_last, h, 0.0)
    c_d = jnp.where(is_last, c, 0.0)

    # ---- decoder input projection precomputed once: (V, 4H), b_d folded in ----
    emb_proj = (jnp.dot(emb_tbl_ref[...], wih_d_ref[...],
                        preferred_element_type=jnp.float32)
                + b_d_ref[...])

    # seed the fused recurrent/fc projection: rec = h_d0 @ whh_d
    proj = jnp.dot(h_d, w_comb, preferred_element_type=jnp.float32)    # (B, 5H)
    rec = proj[:, :H4]

    tok_iota = lax.broadcasted_iota(jnp.int32, (B, V), 1)              # hoisted
    tok = jnp.zeros((B, 1), jnp.int32)        # decoder_input = zeros_like(x)[:, 0]

    # ---- greedy decode: fully unrolled, 2 serialized MXU ops per step ----
    for t in range(T):
        onehot = (tok_iota == tok).astype(jnp.float32)                 # (B, V)
        gates = jnp.dot(onehot, emb_proj,
                        preferred_element_type=jnp.float32) + rec
        h_d, c_d = apply_gates(gates, c_d)
        # fused:  h @ [whh_d | wfc]  ->  next-step recurrent gates + logits
        proj = jnp.dot(h_d, w_comb, preferred_element_type=jnp.float32)
        rec = proj[:, :H4]
        logits = proj[:, H4:] + bfc_b
        out_ref[:, t, :] = logits            # direct (B, T, H) layout, static t
        tok = jnp.argmax(logits, axis=1).astype(jnp.int32).reshape(B, 1)


def encdec_recall_forward(x_tokens, target_len, params):
    """Wrapper: glue (embedding gather, layout/weight plumbing) + pallas_call."""
    emb = params["emb"]                              # (V, E)
    wfc = params["wfc"]                              # (H, H), stored as W^T
    B, S = x_tokens.shape
    V, E = emb.shape
    H = wfc.shape[0]

    # decoded tokens are argmax over H-wide logits and are fed back as vocab ids
    assert H <= V, "fc width (hidden_dim) must not exceed vocab_size for greedy feedback"

    # glue: encoder embedding gather + time-major flatten (row t*B + b == emb[x[b, t]])
    emb_x = jnp.take(emb, x_tokens, axis=0)                       # (B, S, E)
    emb_x_flat = jnp.transpose(emb_x, (1, 0, 2)).reshape(S * B, E)

    # weight plumbing: fused recurrent + fc projection matrix (H, 5H)
    w_comb = jnp.concatenate([params["whh_d"], wfc], axis=1)

    args = (emb_x_flat, emb,
            params["wih_e"], params["whh_e"], params["b_e"],
            params["wih_d"], params["b_d"],
            w_comb, params["bfc"])

    vmem = pl.BlockSpec(memory_space=pltpu.MemorySpace.VMEM)
    out = pl.pallas_call(
        _encdec_kernel,
        out_shape=jax.ShapeDtypeStruct((B, target_len, H), jnp.float32),
        in_specs=[vmem] * len(args),
        out_specs=vmem,
    )(*args)

    # episodic_buffer.read treated as identity (see TODO at top of file).
    return out


def reference_forward(x_tokens, target_len, p):
    """Pure-JAX reference mirroring the PyTorch forward (for verification)."""
    emb = p["emb"]
    B = x_tokens.shape[0]
    H = p["wfc"].shape[0]

    def cell(xe, h, c, wih, whh, b):
        g = xe @ wih + h @ whh + b
        i = jax.nn.sigmoid(g[:, :H])
        f = jax.nn.sigmoid(g[:, H:2 * H])
        gg = jnp.tanh(g[:, 2 * H:3 * H])
        o = jax.nn.sigmoid(g[:, 3 * H:])
        c2 = f * c + i * gg
        return o * jnp.tanh(c2), c2

    h = jnp.zeros((B, H), jnp.float32)
    c = jnp.zeros((B, H), jnp.float32)
    ex = emb[x_tokens]
    for t in range(x_tokens.shape[1]):
        h, c = cell(ex[:, t], h, c, p["wih_e"], p["whh_e"], p["b_e"])

    mask = jnp.arange(B)[:, None] == (B - 1)
    hd = jnp.where(mask, h, 0.0)
    cd = jnp.where(mask, c, 0.0)
    tok = jnp.zeros((B,), jnp.int32)
    outs = []
    for _ in range(target_len):
        xe = emb[tok]
        hd, cd = cell(xe, hd, cd, p["wih_d"], p["whh_d"], p["b_d"])
        logits = hd @ p["wfc"] + p["bfc"]
        outs.append(logits)
        tok = jnp.argmax(logits, axis=1).astype(jnp.int32)
    return jnp.stack(outs, axis=1)


def init_params(key, vocab_size, embedding_dim, hidden_dim):
    V, E, H = vocab_size, embedding_dim, hidden_dim
    ks = jax.random.split(key, 11)
    k = 1.0 / jnp.sqrt(jnp.float32(H))

    def u(kk, shape):
        return jax.random.uniform(kk, shape, jnp.float32, -k, k)

    return {
        "emb": jax.random.normal(ks[0], (V, E), jnp.float32),          # nn.Embedding
        # encoder LSTM (weights stored transposed: x @ W)
        "wih_e": u(ks[1], (E, 4 * H)),
        "whh_e": u(ks[2], (H, 4 * H)),
        "b_e": u(ks[3], (1, 4 * H)) + u(ks[4], (1, 4 * H)),            # bias_ih + bias_hh
        # decoder LSTM
        "wih_d": u(ks[5], (E, 4 * H)),
        "whh_d": u(ks[6], (H, 4 * H)),
        "b_d": u(ks[7], (1, 4 * H)) + u(ks[8], (1, 4 * H)),
        # decoder.fc : Linear(H, H)
        "wfc": u(ks[9], (H, H)),                                       # already W^T
        "bfc": u(ks[10], (1, H)),
    }


if __name__ == "__main__":
    B, S, E, H, V = 2, 8, 32, 32, 64
    target_len = 8

    key = jax.random.PRNGKey(0)
    pkey, xkey = jax.random.split(key)
    params = init_params(pkey, V, E, H)
    x = jax.random.randint(xkey, (B, S), 0, V, dtype=jnp.int32)

    out = jax.block_until_ready(encdec_recall_forward(x, target_len, params))
    ref = jax.block_until_ready(reference_forward(x, target_len, params))

    assert out.shape == (B, target_len, H), out.shape
    assert jnp.allclose(out, ref, atol=1e-3, rtol=1e-3), float(jnp.max(jnp.abs(out - ref)))

    print("KERNEL_OK")
</pallas_src>

<mosaic_0001>
module attributes {stable_mosaic.version = 11 : i64} {
  func.func @_encdec_kernel(%arg0: memref<16x32xf32, #tpu.memory_space<vmem>>, %arg1: memref<64x32xf32, #tpu.memory_space<vmem>>, %arg2: memref<32x128xf32, #tpu.memory_space<vmem>>, %arg3: memref<32x128xf32, #tpu.memory_space<vmem>>, %arg4: memref<1x128xf32, #tpu.memory_space<vmem>>, %arg5: memref<32x128xf32, #tpu.memory_space<vmem>>, %arg6: memref<1x128xf32, #tpu.memory_space<vmem>>, %arg7: memref<32x160xf32, #tpu.memory_space<vmem>>, %arg8: memref<1x32xf32, #tpu.memory_space<vmem>>, %arg9: memref<2x8x32xf32, #tpu.memory_space<vmem>>) attributes {dimension_semantics = [], scalar_prefetch = 0 : i64, scratch_operands = 0 : i64, tpu.core_type = #tpu.core_type<tc>} {
    %c0 = arith.constant 0 : index
    %c0_0 = arith.constant 0 : index
    %0 = vector.load %arg3[%c0, %c0_0] : memref<32x128xf32, #tpu.memory_space<vmem>>, vector<32x128xf32>
    %c0_1 = arith.constant 0 : index
    %c0_2 = arith.constant 0 : index
    %1 = vector.load %arg7[%c0_1, %c0_2] : memref<32x160xf32, #tpu.memory_space<vmem>>, vector<32x160xf32>
    %c0_3 = arith.constant 0 : index
    %c0_4 = arith.constant 0 : index
    %2 = vector.load %arg8[%c0_3, %c0_4] : memref<1x32xf32, #tpu.memory_space<vmem>>, vector<1x32xf32>
    %3 = vector.shape_cast %2 : vector<1x32xf32> to vector<1x32xf32>
    %4 = vector.broadcast %3 : vector<1x32xf32> to vector<2x32xf32>
    %c0_5 = arith.constant 0 : index
    %c0_6 = arith.constant 0 : index
    %5 = vector.load %arg0[%c0_5, %c0_6] : memref<16x32xf32, #tpu.memory_space<vmem>>, vector<16x32xf32>
    %c0_7 = arith.constant 0 : index
    %c0_8 = arith.constant 0 : index
    %6 = vector.load %arg2[%c0_7, %c0_8] : memref<32x128xf32, #tpu.memory_space<vmem>>, vector<32x128xf32>
    %cst = arith.constant dense<0.000000e+00> : vector<16x128xf32>
    %7 = tpu.matmul %5, %6, %cst {dimension_numbers = #tpu.dot_dimension_numbers<[1], [0], [0], [1], [0, 0, 1, 1], [], []>} : vector<16x32xf32>, vector<32x128xf32>, vector<16x128xf32> -> vector<16x128xf32>
    %c0_9 = arith.constant 0 : index
    %c0_10 = arith.constant 0 : index
    %8 = vector.load %arg4[%c0_9, %c0_10] : memref<1x128xf32, #tpu.memory_space<vmem>>, vector<1x128xf32>
    %9 = vector.broadcast %8 : vector<1x128xf32> to vector<16x128xf32>
    %10 = arith.addf %7, %9 : vector<16x128xf32>
    %cst_11 = arith.constant 0.000000e+00 : f32
    %11 = vector.broadcast %cst_11 : f32 to vector<2x32xf32>
    %cst_12 = arith.constant 0.000000e+00 : f32
    %12 = vector.broadcast %cst_12 : f32 to vector<2x32xf32>
    %13 = vector.extract_strided_slice %10 {offsets = [0, 0], sizes = [2, 128], strides = [1, 1]} : vector<16x128xf32> to vector<2x128xf32>
    %cst_13 = arith.constant dense<0.000000e+00> : vector<2x128xf32>
    %14 = tpu.matmul %11, %0, %cst_13 {dimension_numbers = #tpu.dot_dimension_numbers<[1], [0], [0], [1], [0, 0, 1, 1], [], []>} : vector<2x32xf32>, vector<32x128xf32>, vector<2x128xf32> -> vector<2x128xf32>
    %15 = arith.addf %13, %14 : vector<2x128xf32>
    %16 = arith.negf %15 : vector<2x128xf32>
    %17 = math.exp %16 : vector<2x128xf32>
    %cst_14 = arith.constant 1.000000e+00 : f32
    %18 = vector.broadcast %cst_14 : f32 to vector<2x128xf32>
    %19 = arith.addf %18, %17 : vector<2x128xf32>
    %20 = arith.divf %18, %19 : vector<2x128xf32>
    %21 = math.tanh %15 : vector<2x128xf32>
    %22 = vector.extract_strided_slice %20 {offsets = [0, 0], sizes = [2, 32], strides = [1, 1]} : vector<2x128xf32> to vector<2x32xf32>
    %23 = vector.extract_strided_slice %20 {offsets = [0, 32], sizes = [2, 32], strides = [1, 1]} : vector<2x128xf32> to vector<2x32xf32>
    %24 = vector.extract_strided_slice %21 {offsets = [0, 64], sizes = [2, 32], strides = [1, 1]} : vector<2x128xf32> to vector<2x32xf32>
    %25 = vector.extract_strided_slice %20 {offsets = [0, 96], sizes = [2, 32], strides = [1, 1]} : vector<2x128xf32> to vector<2x32xf32>
    %26 = arith.mulf %23, %12 : vector<2x32xf32>
    %27 = arith.mulf %22, %24 : vector<2x32xf32>
    %28 = arith.addf %26, %27 : vector<2x32xf32>
    %29 = math.tanh %28 : vector<2x32xf32>
    %30 = arith.mulf %25, %29 : vector<2x32xf32>
    %31 = vector.extract_strided_slice %10 {offsets = [2, 0], sizes = [2, 128], strides = [1, 1]} : vector<16x128xf32> to vector<2x128xf32>
    %cst_15 = arith.constant dense<0.000000e+00> : vector<2x128xf32>
    %32 = tpu.matmul %30, %0, %cst_15 {dimension_numbers = #tpu.dot_dimension_numbers<[1], [0], [0], [1], [0, 0, 1, 1], [], []>} : vector<2x32xf32>, vector<32x128xf32>, vector<2x128xf32> -> vector<2x128xf32>
    %33 = arith.addf %31, %32 : vector<2x128xf32>
    %34 = arith.negf %33 : vector<2x128xf32>
    %35 = math.exp %34 : vector<2x128xf32>
    %cst_16 = arith.constant 1.000000e+00 : f32
    %36 = vector.broadcast %cst_16 : f32 to vector<2x128xf32>
    %37 = arith.addf %36, %35 : vector<2x128xf32>
    %38 = arith.divf %36, %37 : vector<2x128xf32>
    %39 = math.tanh %33 : vector<2x128xf32>
    %40 = vector.extract_strided_slice %38 {offsets = [0, 0], sizes = [2, 32], strides = [1, 1]} : vector<2x128xf32> to vector<2x32xf32>
    %41 = vector.extract_strided_slice %38 {offsets = [0, 32], sizes = [2, 32], strides = [1, 1]} : vector<2x128xf32> to vector<2x32xf32>
    %42 = vector.extract_strided_slice %39 {offsets = [0, 64], sizes = [2, 32], strides = [1, 1]} : vector<2x128xf32> to vector<2x32xf32>
    %43 = vector.extract_strided_slice %38 {offsets = [0, 96], sizes = [2, 32], strides = [1, 1]} : vector<2x128xf32> to vector<2x32xf32>
    %44 = arith.mulf %41, %28 : vector<2x32xf32>
    %45 = arith.mulf %40, %42 : vector<2x32xf32>
    %46 = arith.addf %44, %45 : vector<2x32xf32>
    %47 = math.tanh %46 : vector<2x32xf32>
    %48 = arith.mulf %43, %47 : vector<2x32xf32>
    %49 = vector.extract_strided_slice %10 {offsets = [4, 0], sizes = [2, 128], strides = [1, 1]} : vector<16x128xf32> to vector<2x128xf32>
    %cst_17 = arith.constant dense<0.000000e+00> : vector<2x128xf32>
    %50 = tpu.matmul %48, %0, %cst_17 {dimension_numbers = #tpu.dot_dimension_numbers<[1], [0], [0], [1], [0, 0, 1, 1], [], []>} : vector<2x32xf32>, vector<32x128xf32>, vector<2x128xf32> -> vector<2x128xf32>
    %51 = arith.addf %49, %50 : vector<2x128xf32>
    %52 = arith.negf %51 : vector<2x128xf32>
    %53 = math.exp %52 : vector<2x128xf32>
    %cst_18 = arith.constant 1.000000e+00 : f32
    %54 = vector.broadcast %cst_18 : f32 to vector<2x128xf32>
    %55 = arith.addf %54, %53 : vector<2x128xf32>
    %56 = arith.divf %54, %55 : vector<2x128xf32>
    %57 = math.tanh %51 : vector<2x128xf32>
    %58 = vector.extract_strided_slice %56 {offsets = [0, 0], sizes = [2, 32], strides = [1, 1]} : vector<2x128xf32> to vector<2x32xf32>
    %59 = vector.extract_strided_slice %56 {offsets = [0, 32], sizes = [2, 32], strides = [1, 1]} : vector<2x128xf32> to vector<2x32xf32>
    %60 = vector.extract_strided_slice %57 {offsets = [0, 64], sizes = [2, 32], strides = [1, 1]} : vector<2x128xf32> to vector<2x32xf32>
    %61 = vector.extract_strided_slice %56 {offsets = [0, 96], sizes = [2, 32], strides = [1, 1]} : vector<2x128xf32> to vector<2x32xf32>
    %62 = arith.mulf %59, %46 : vector<2x32xf32>
    %63 = arith.mulf %58, %60 : vector<2x32xf32>
    %64 = arith.addf %62, %63 : vector<2x32xf32>
    %65 = math.tanh %64 : vector<2x32xf32>
    %66 = arith.mulf %61, %65 : vector<2x32xf32>
    %67 = vector.extract_strided_slice %10 {offsets = [6, 0], sizes = [2, 128], strides = [1, 1]} : vector<16x128xf32> to vector<2x128xf32>
    %cst_19 = arith.constant dense<0.000000e+00> : vector<2x128xf32>
    %68 = tpu.matmul %66, %0, %cst_19 {dimension_numbers = #tpu.dot_dimension_numbers<[1], [0], [0], [1], [0, 0, 1, 1], [], []>} : vector<2x32xf32>, vector<32x128xf32>, vector<2x128xf32> -> vector<2x128xf32>
    %69 = arith.addf %67, %68 : vector<2x128xf32>
    %70 = arith.negf %69 : vector<2x128xf32>
    %71 = math.exp %70 : vector<2x128xf32>
    %cst_20 = arith.constant 1.000000e+00 : f32
    %72 = vector.broadcast %cst_20 : f32 to vector<2x128xf32>
    %73 = arith.addf %72, %71 : vector<2x128xf32>
    %74 = arith.divf %72, %73 : vector<2x128xf32>
    %75 = math.tanh %69 : vector<2x128xf32>
    %76 = vector.extract_strided_slice %74 {offsets = [0, 0], sizes = [2, 32], strides = [1, 1]} : vector<2x128xf32> to vector<2x32xf32>
    %77 = vector.extract_strided_slice %74 {offsets = [0, 32], sizes = [2, 32], strides = [1, 1]} : vector<2x128xf32> to vector<2x32xf32>
    %78 = vector.extract_strided_slice %75 {offsets = [0, 64], sizes = [2, 32], strides = [1, 1]} : vector<2x128xf32> to vector<2x32xf32>
    %79 = vector.extract_strided_slice %74 {offsets = [0, 96], sizes = [2, 32], strides = [1, 1]} : vector<2x128xf32> to vector<2x32xf32>
    %80 = arith.mulf %77, %64 : vector<2x32xf32>
    %81 = arith.mulf %76, %78 : vector<2x32xf32>
    %82 = arith.addf %80, %81 : vector<2x32xf32>
    %83 = math.tanh %82 : vector<2x32xf32>
    %84 = arith.mulf %79, %83 : vector<2x32xf32>
    %85 = vector.extract_strided_slice %10 {offsets = [8, 0], sizes = [2, 128], strides = [1, 1]} : vector<16x128xf32> to vector<2x128xf32>
    %cst_21 = arith.constant dense<0.000000e+00> : vector<2x128xf32>
    %86 = tpu.matmul %84, %0, %cst_21 {dimension_numbers = #tpu.dot_dimension_numbers<[1], [0], [0], [1], [0, 0, 1, 1], [], []>} : vector<2x32xf32>, vector<32x128xf32>, vector<2x128xf32> -> vector<2x128xf32>
    %87 = arith.addf %85, %86 : vector<2x128xf32>
    %88 = arith.negf %87 : vector<2x128xf32>
    %89 = math.exp %88 : vector<2x128xf32>
    %cst_22 = arith.constant 1.000000e+00 : f32
    %90 = vector.broadcast %cst_22 : f32 to vector<2x128xf32>
    %91 = arith.addf %90, %89 : vector<2x128xf32>
    %92 = arith.divf %90, %91 : vector<2x128xf32>
    %93 = math.tanh %87 : vector<2x128xf32>
    %94 = vector.extract_strided_slice %92 {offsets = [0, 0], sizes = [2, 32], strides = [1, 1]} : vector<2x128xf32> to vector<2x32xf32>
    %95 = vector.extract_strided_slice %92 {offsets = [0, 32], sizes = [2, 32], strides = [1, 1]} : vector<2x128xf32> to vector<2x32xf32>
    %96 = vector.extract_strided_slice %93 {offsets = [0, 64], sizes = [2, 32], strides = [1, 1]} : vector<2x128xf32> to vector<2x32xf32>
    %97 = vector.extract_strided_slice %92 {offsets = [0, 96], sizes = [2, 32], strides = [1, 1]} : vector<2x128xf32> to vector<2x32xf32>
    %98 = arith.mulf %95, %82 : vector<2x32xf32>
    %99 = arith.mulf %94, %96 : vector<2x32xf32>
    %100 = arith.addf %98, %99 : vector<2x32xf32>
    %101 = math.tanh %100 : vector<2x32xf32>
    %102 = arith.mulf %97, %101 : vector<2x32xf32>
    %103 = vector.extract_strided_slice %10 {offsets = [10, 0], sizes = [2, 128], strides = [1, 1]} : vector<16x128xf32> to vector<2x128xf32>
    %cst_23 = arith.constant dense<0.000000e+00> : vector<2x128xf32>
    %104 = tpu.matmul %102, %0, %cst_23 {dimension_numbers = #tpu.dot_dimension_numbers<[1], [0], [0], [1], [0, 0, 1, 1], [], []>} : vector<2x32xf32>, vector<32x128xf32>, vector<2x128xf32> -> vector<2x128xf32>
    %105 = arith.addf %103, %104 : vector<2x128xf32>
    %106 = arith.negf %105 : vector<2x128xf32>
    %107 = math.exp %106 : vector<2x128xf32>
    %cst_24 = arith.constant 1.000000e+00 : f32
    %108 = vector.broadcast %cst_24 : f32 to vector<2x128xf32>
    %109 = arith.addf %108, %107 : vector<2x128xf32>
    %110 = arith.divf %108, %109 : vector<2x128xf32>
    %111 = math.tanh %105 : vector<2x128xf32>
    %112 = vector.extract_strided_slice %110 {offsets = [0, 0], sizes = [2, 32], strides = [1, 1]} : vector<2x128xf32> to vector<2x32xf32>
    %113 = vector.extract_strided_slice %110 {offsets = [0, 32], sizes = [2, 32], strides = [1, 1]} : vector<2x128xf32> to vector<2x32xf32>
    %114 = vector.extract_strided_slice %111 {offsets = [0, 64], sizes = [2, 32], strides = [1, 1]} : vector<2x128xf32> to vector<2x32xf32>
    %115 = vector.extract_strided_slice %110 {offsets = [0, 96], sizes = [2, 32], strides = [1, 1]} : vector<2x128xf32> to vector<2x32xf32>
    %116 = arith.mulf %113, %100 : vector<2x32xf32>
    %117 = arith.mulf %112, %114 : vector<2x32xf32>
    %118 = arith.addf %116, %117 : vector<2x32xf32>
    %119 = math.tanh %118 : vector<2x32xf32>
    %120 = arith.mulf %115, %119 : vector<2x32xf32>
    %121 = vector.extract_strided_slice %10 {offsets = [12, 0], sizes = [2, 128], strides = [1, 1]} : vector<16x128xf32> to vector<2x128xf32>
    %cst_25 = arith.constant dense<0.000000e+00> : vector<2x128xf32>
    %122 = tpu.matmul %120, %0, %cst_25 {dimension_numbers = #tpu.dot_dimension_numbers<[1], [0], [0], [1], [0, 0, 1, 1], [], []>} : vector<2x32xf32>, vector<32x128xf32>, vector<2x128xf32> -> vector<2x128xf32>
    %123 = arith.addf %121, %122 : vector<2x128xf32>
    %124 = arith.negf %123 : vector<2x128xf32>
    %125 = math.exp %124 : vector<2x128xf32>
    %cst_26 = arith.constant 1.000000e+00 : f32
    %126 = vector.broadcast %cst_26 : f32 to vector<2x128xf32>
    %127 = arith.addf %126, %125 : vector<2x128xf32>
    %128 = arith.divf %126, %127 : vector<2x128xf32>
    %129 = math.tanh %123 : vector<2x128xf32>
    %130 = vector.extract_strided_slice %128 {offsets = [0, 0], sizes = [2, 32], strides = [1, 1]} : vector<2x128xf32> to vector<2x32xf32>
    %131 = vector.extract_strided_slice %128 {offsets = [0, 32], sizes = [2, 32], strides = [1, 1]} : vector<2x128xf32> to vector<2x32xf32>
    %132 = vector.extract_strided_slice %129 {offsets = [0, 64], sizes = [2, 32], strides = [1, 1]} : vector<2x128xf32> to vector<2x32xf32>
    %133 = vector.extract_strided_slice %128 {offsets = [0, 96], sizes = [2, 32], strides = [1, 1]} : vector<2x128xf32> to vector<2x32xf32>
    %134 = arith.mulf %131, %118 : vector<2x32xf32>
    %135 = arith.mulf %130, %132 : vector<2x32xf32>
    %136 = arith.addf %134, %135 : vector<2x32xf32>
    %137 = math.tanh %136 : vector<2x32xf32>
    %138 = arith.mulf %133, %137 : vector<2x32xf32>
    %139 = vector.extract_strided_slice %10 {offsets = [14, 0], sizes = [2, 128], strides = [1, 1]} : vector<16x128xf32> to vector<2x128xf32>
    %cst_27 = arith.constant dense<0.000000e+00> : vector<2x128xf32>
    %140 = tpu.matmul %138, %0, %cst_27 {dimension_numbers = #tpu.dot_dimension_numbers<[1], [0], [0], [1], [0, 0, 1, 1], [], []>} : vector<2x32xf32>, vector<32x128xf32>, vector<2x128xf32> -> vector<2x128xf32>
    %141 = arith.addf %139, %140 : vector<2x128xf32>
    %142 = arith.negf %141 : vector<2x128xf32>
    %143 = math.exp %142 : vector<2x128xf32>
    %cst_28 = arith.constant 1.000000e+00 : f32
    %144 = vector.broadcast %cst_28 : f32 to vector<2x128xf32>
    %145 = arith.addf %144, %143 : vector<2x128xf32>
    %146 = arith.divf %144, %145 : vector<2x128xf32>
    %147 = math.tanh %141 : vector<2x128xf32>
    %148 = vector.extract_strided_slice %146 {offsets = [0, 0], sizes = [2, 32], strides = [1, 1]} : vector<2x128xf32> to vector<2x32xf32>
    %149 = vector.extract_strided_slice %146 {offsets = [0, 32], sizes = [2, 32], strides = [1, 1]} : vector<2x128xf32> to vector<2x32xf32>
    %150 = vector.extract_strided_slice %147 {offsets = [0, 64], sizes = [2, 32], strides = [1, 1]} : vector<2x128xf32> to vector<2x32xf32>
    %151 = vector.extract_strided_slice %146 {offsets = [0, 96], sizes = [2, 32], strides = [1, 1]} : vector<2x128xf32> to vector<2x32xf32>
    %152 = arith.mulf %149, %136 : vector<2x32xf32>
    %153 = arith.mulf %148, %150 : vector<2x32xf32>
    %154 = arith.addf %152, %153 : vector<2x32xf32>
    %155 = math.tanh %154 : vector<2x32xf32>
    %156 = arith.mulf %151, %155 : vector<2x32xf32>
    %157 = tpu.iota {dimensions = array<i32: 0>} : vector<2x32xi32>
    %c1_i32 = arith.constant 1 : i32
    %158 = vector.broadcast %c1_i32 : i32 to vector<2x32xi32>
    %159 = arith.cmpi eq, %157, %158 : vector<2x32xi32>
    %cst_29 = arith.constant 0.000000e+00 : f32
    %160 = vector.broadcast %cst_29 : f32 to vector<2x32xf32>
    %161 = arith.select %159, %156, %160 : vector<2x32xi1>, vector<2x32xf32>
    %cst_30 = arith.constant 0.000000e+00 : f32
    %162 = vector.broadcast %cst_30 : f32 to vector<2x32xf32>
    %163 = arith.select %159, %154, %162 : vector<2x32xi1>, vector<2x32xf32>
    %c0_31 = arith.constant 0 : index
    %c0_32 = arith.constant 0 : index
    %164 = vector.load %arg1[%c0_31, %c0_32] : memref<64x32xf32, #tpu.memory_space<vmem>>, vector<64x32xf32>
    %c0_33 = arith.constant 0 : index
    %c0_34 = arith.constant 0 : index
    %165 = vector.load %arg5[%c0_33, %c0_34] : memref<32x128xf32, #tpu.memory_space<vmem>>, vector<32x128xf32>
    %cst_35 = arith.constant dense<0.000000e+00> : vector<64x128xf32>
    %166 = tpu.matmul %164, %165, %cst_35 {dimension_numbers = #tpu.dot_dimension_numbers<[1], [0], [0], [1], [0, 0, 1, 1], [], []>} : vector<64x32xf32>, vector<32x128xf32>, vector<64x128xf32> -> vector<64x128xf32>
    %c0_36 = arith.constant 0 : index
    %c0_37 = arith.constant 0 : index
    %167 = vector.load %arg6[%c0_36, %c0_37] : memref<1x128xf32, #tpu.memory_space<vmem>>, vector<1x128xf32>
    %168 = vector.broadcast %167 : vector<1x128xf32> to vector<64x128xf32>
    %169 = arith.addf %166, %168 : vector<64x128xf32>
    %cst_38 = arith.constant dense<0.000000e+00> : vector<2x160xf32>
    %170 = tpu.matmul %161, %1, %cst_38 {dimension_numbers = #tpu.dot_dimension_numbers<[1], [0], [0], [1], [0, 0, 1, 1], [], []>} : vector<2x32xf32>, vector<32x160xf32>, vector<2x160xf32> -> vector<2x160xf32>
    %171 = vector.extract_strided_slice %170 {offsets = [0, 0], sizes = [2, 128], strides = [1, 1]} : vector<2x160xf32> to vector<2x128xf32>
    %172 = tpu.iota {dimensions = array<i32: 1>} : vector<2x64xi32>
    %c0_i32 = arith.constant 0 : i32
    %173 = vector.broadcast %c0_i32 : i32 to vector<2x1xi32>
    %174 = vector.broadcast %173 : vector<2x1xi32> to vector<2x64xi32>
    %175 = arith.cmpi eq, %172, %174 : vector<2x64xi32>
    %176 = arith.extui %175 : vector<2x64xi1> to vector<2x64xi32>
    %177 = arith.sitofp %176 : vector<2x64xi32> to vector<2x64xf32>
    %cst_39 = arith.constant dense<0.000000e+00> : vector<2x128xf32>
    %178 = tpu.matmul %177, %169, %cst_39 {dimension_numbers = #tpu.dot_dimension_numbers<[1], [0], [0], [1], [0, 0, 1, 1], [], []>} : vector<2x64xf32>, vector<64x128xf32>, vector<2x128xf32> -> vector<2x128xf32>
    %179 = arith.addf %178, %171 : vector<2x128xf32>
    %180 = arith.negf %179 : vector<2x128xf32>
    %181 = math.exp %180 : vector<2x128xf32>
    %cst_40 = arith.constant 1.000000e+00 : f32
    %182 = vector.broadcast %cst_40 : f32 to vector<2x128xf32>
    %183 = arith.addf %182, %181 : vector<2x128xf32>
    %184 = arith.divf %182, %183 : vector<2x128xf32>
    %185 = math.tanh %179 : vector<2x128xf32>
    %186 = vector.extract_strided_slice %184 {offsets = [0, 0], sizes = [2, 32], strides = [1, 1]} : vector<2x128xf32> to vector<2x32xf32>
    %187 = vector.extract_strided_slice %184 {offsets = [0, 32], sizes = [2, 32], strides = [1, 1]} : vector<2x128xf32> to vector<2x32xf32>
    %188 = vector.extract_strided_slice %185 {offsets = [0, 64], sizes = [2, 32], strides = [1, 1]} : vector<2x128xf32> to vector<2x32xf32>
    %189 = vector.extract_strided_slice %184 {offsets = [0, 96], sizes = [2, 32], strides = [1, 1]} : vector<2x128xf32> to vector<2x32xf32>
    %190 = arith.mulf %187, %163 : vector<2x32xf32>
    %191 = arith.mulf %186, %188 : vector<2x32xf32>
    %192 = arith.addf %190, %191 : vector<2x32xf32>
    %193 = math.tanh %192 : vector<2x32xf32>
    %194 = arith.mulf %189, %193 : vector<2x32xf32>
    %cst_41 = arith.constant dense<0.000000e+00> : vector<2x160xf32>
    %195 = tpu.matmul %194, %1, %cst_41 {dimension_numbers = #tpu.dot_dimension_numbers<[1], [0], [0], [1], [0, 0, 1, 1], [], []>} : vector<2x32xf32>, vector<32x160xf32>, vector<2x160xf32> -> vector<2x160xf32>
    %196 = vector.extract_strided_slice %195 {offsets = [0, 0], sizes = [2, 128], strides = [1, 1]} : vector<2x160xf32> to vector<2x128xf32>
    %197 = vector.extract_strided_slice %195 {offsets = [0, 128], sizes = [2, 32], strides = [1, 1]} : vector<2x160xf32> to vector<2x32xf32>
    %198 = arith.addf %197, %4 : vector<2x32xf32>
    %c0_42 = arith.constant 0 : index
    %c0_43 = arith.constant 0 : index
    %c0_44 = arith.constant 0 : index
    %199 = vector.load %arg9[%c0_42, %c0_43, %c0_44] : memref<2x8x32xf32, #tpu.memory_space<vmem>>, vector<2x1x32xf32>
    %200 = vector.shape_cast %199 : vector<2x1x32xf32> to vector<2x32xf32>
    %201 = vector.shape_cast %198 : vector<2x32xf32> to vector<2x1x32xf32>
    tpu.vector_store %arg9[%c0_42, %c0_43, %c0_44], %201 {strides = array<i32>} : memref<2x8x32xf32, #tpu.memory_space<vmem>>, vector<2x1x32xf32>,
    %202 = tpu.reduce_index %198 {axis = 1 : i32, kind = #tpu.reduction_kind<arg_max>} : vector<2x32xf32> -> vector<2xi32>
    %203 = vector.shape_cast %202 : vector<2xi32> to vector<2x1xi32>
    %204 = vector.broadcast %203 : vector<2x1xi32> to vector<2x64xi32>
    %205 = arith.cmpi eq, %172, %204 : vector<2x64xi32>
    %206 = arith.extui %205 : vector<2x64xi1> to vector<2x64xi32>
    %207 = arith.sitofp %206 : vector<2x64xi32> to vector<2x64xf32>
    %cst_45 = arith.constant dense<0.000000e+00> : vector<2x128xf32>
    %208 = tpu.matmul %207, %169, %cst_45 {dimension_numbers = #tpu.dot_dimension_numbers<[1], [0], [0], [1], [0, 0, 1, 1], [], []>} : vector<2x64xf32>, vector<64x128xf32>, vector<2x128xf32> -> vector<2x128xf32>
    %209 = arith.addf %208, %196 : vector<2x128xf32>
    %210 = arith.negf %209 : vector<2x128xf32>
    %211 = math.exp %210 : vector<2x128xf32>
    %cst_46 = arith.constant 1.000000e+00 : f32
    %212 = vector.broadcast %cst_46 : f32 to vector<2x128xf32>
    %213 = arith.addf %212, %211 : vector<2x128xf32>
    %214 = arith.divf %212, %213 : vector<2x128xf32>
    %215 = math.tanh %209 : vector<2x128xf32>
    %216 = vector.extract_strided_slice %214 {offsets = [0, 0], sizes = [2, 32], strides = [1, 1]} : vector<2x128xf32> to vector<2x32xf32>
    %217 = vector.extract_strided_slice %214 {offsets = [0, 32], sizes = [2, 32], strides = [1, 1]} : vector<2x128xf32> to vector<2x32xf32>
    %218 = vector.extract_strided_slice %215 {offsets = [0, 64], sizes = [2, 32], strides = [1, 1]} : vector<2x128xf32> to vector<2x32xf32>
    %219 = vector.extract_strided_slice %214 {offsets = [0, 96], sizes = [2, 32], strides = [1, 1]} : vector<2x128xf32> to vector<2x32xf32>
    %220 = arith.mulf %217, %192 : vector<2x32xf32>
    %221 = arith.mulf %216, %218 : vector<2x32xf32>
    %222 = arith.addf %220, %221 : vector<2x32xf32>
    %223 = math.tanh %222 : vector<2x32xf32>
    %224 = arith.mulf %219, %223 : vector<2x32xf32>
    %cst_47 = arith.constant dense<0.000000e+00> : vector<2x160xf32>
    %225 = tpu.matmul %224, %1, %cst_47 {dimension_numbers = #tpu.dot_dimension_numbers<[1], [0], [0], [1], [0, 0, 1, 1], [], []>} : vector<2x32xf32>, vector<32x160xf32>, vector<2x160xf32> -> vector<2x160xf32>
    %226 = vector.extract_strided_slice %225 {offsets = [0, 0], sizes = [2, 128], strides = [1, 1]} : vector<2x160xf32> to vector<2x128xf32>
    %227 = vector.extract_strided_slice %225 {offsets = [0, 128], sizes = [2, 32], strides = [1, 1]} : vector<2x160xf32> to vector<2x32xf32>
    %228 = arith.addf %227, %4 : vector<2x32xf32>
    %c0_48 = arith.constant 0 : index
    %c1 = arith.constant 1 : index
    %c0_49 = arith.constant 0 : index
    %229 = vector.load %arg9[%c0_48, %c1, %c0_49] : memref<2x8x32xf32, #tpu.memory_space<vmem>>, vector<2x1x32xf32>
    %230 = vector.shape_cast %229 : vector<2x1x32xf32> to vector<2x32xf32>
    %231 = vector.shape_cast %228 : vector<2x32xf32> to vector<2x1x32xf32>
    tpu.vector_store %arg9[%c0_48, %c1, %c0_49], %231 {strides = array<i32>} : memref<2x8x32xf32, #tpu.memory_space<vmem>>, vector<2x1x32xf32>,
    %232 = tpu.reduce_index %228 {axis = 1 : i32, kind = #tpu.reduction_kind<arg_max>} : vector<2x32xf32> -> vector<2xi32>
    %233 = vector.shape_cast %232 : vector<2xi32> to vector<2x1xi32>
    %234 = vector.broadcast %233 : vector<2x1xi32> to vector<2x64xi32>
    %235 = arith.cmpi eq, %172, %234 : vector<2x64xi32>
    %236 = arith.extui %235 : vector<2x64xi1> to vector<2x64xi32>
    %237 = arith.sitofp %236 : vector<2x64xi32> to vector<2x64xf32>
    %cst_50 = arith.constant dense<0.000000e+00> : vector<2x128xf32>
    %238 = tpu.matmul %237, %169, %cst_50 {dimension_numbers = #tpu.dot_dimension_numbers<[1], [0], [0], [1], [0, 0, 1, 1], [], []>} : vector<2x64xf32>, vector<64x128xf32>, vector<2x128xf32> -> vector<2x128xf32>
    %239 = arith.addf %238, %226 : vector<2x128xf32>
    %240 = arith.negf %239 : vector<2x128xf32>
    %241 = math.exp %240 : vector<2x128xf32>
    %cst_51 = arith.constant 1.000000e+00 : f32
    %242 = vector.broadcast %cst_51 : f32 to vector<2x128xf32>
    %243 = arith.addf %242, %241 : vector<2x128xf32>
    %244 = arith.divf %242, %243 : vector<2x128xf32>
    %245 = math.tanh %239 : vector<2x128xf32>
    %246 = vector.extract_strided_slice %244 {offsets = [0, 0], sizes = [2, 32], strides = [1, 1]} : vector<2x128xf32> to vector<2x32xf32>
    %247 = vector.extract_strided_slice %244 {offsets = [0, 32], sizes = [2, 32], strides = [1, 1]} : vector<2x128xf32> to vector<2x32xf32>
    %248 = vector.extract_strided_slice %245 {offsets = [0, 64], sizes = [2, 32], strides = [1, 1]} : vector<2x128xf32> to vector<2x32xf32>
    %249 = vector.extract_strided_slice %244 {offsets = [0, 96], sizes = [2, 32], strides = [1, 1]} : vector<2x128xf32> to vector<2x32xf32>
    %250 = arith.mulf %247, %222 : vector<2x32xf32>
    %251 = arith.mulf %246, %248 : vector<2x32xf32>
    %252 = arith.addf %250, %251 : vector<2x32xf32>
    %253 = math.tanh %252 : vector<2x32xf32>
    %254 = arith.mulf %249, %253 : vector<2x32xf32>
    %cst_52 = arith.constant dense<0.000000e+00> : vector<2x160xf32>
    %255 = tpu.matmul %254, %1, %cst_52 {dimension_numbers = #tpu.dot_dimension_numbers<[1], [0], [0], [1], [0, 0, 1, 1], [], []>} : vector<2x32xf32>, vector<32x160xf32>, vector<2x160xf32> -> vector<2x160xf32>
    %256 = vector.extract_strided_slice %255 {offsets = [0, 0], sizes = [2, 128], strides = [1, 1]} : vector<2x160xf32> to vector<2x128xf32>
    %257 = vector.extract_strided_slice %255 {offsets = [0, 128], sizes = [2, 32], strides = [1, 1]} : vector<2x160xf32> to vector<2x32xf32>
    %258 = arith.addf %257, %4 : vector<2x32xf32>
    %c0_53 = arith.constant 0 : index
    %c2 = arith.constant 2 : index
    %c0_54 = arith.constant 0 : index
    %259 = vector.load %arg9[%c0_53, %c2, %c0_54] : memref<2x8x32xf32, #tpu.memory_space<vmem>>, vector<2x1x32xf32>
    %260 = vector.shape_cast %259 : vector<2x1x32xf32> to vector<2x32xf32>
    %261 = vector.shape_cast %258 : vector<2x32xf32> to vector<2x1x32xf32>
    tpu.vector_store %arg9[%c0_53, %c2, %c0_54], %261 {strides = array<i32>} : memref<2x8x32xf32, #tpu.memory_space<vmem>>, vector<2x1x32xf32>,
    %262 = tpu.reduce_index %258 {axis = 1 : i32, kind = #tpu.reduction_kind<arg_max>} : vector<2x32xf32> -> vector<2xi32>
    %263 = vector.shape_cast %262 : vector<2xi32> to vector<2x1xi32>
    %264 = vector.broadcast %263 : vector<2x1xi32> to vector<2x64xi32>
    %265 = arith.cmpi eq, %172, %264 : vector<2x64xi32>
    %266 = arith.extui %265 : vector<2x64xi1> to vector<2x64xi32>
    %267 = arith.sitofp %266 : vector<2x64xi32> to vector<2x64xf32>
    %cst_55 = arith.constant dense<0.000000e+00> : vector<2x128xf32>
    %268 = tpu.matmul %267, %169, %cst_55 {dimension_numbers = #tpu.dot_dimension_numbers<[1], [0], [0], [1], [0, 0, 1, 1], [], []>} : vector<2x64xf32>, vector<64x128xf32>, vector<2x128xf32> -> vector<2x128xf32>
    %269 = arith.addf %268, %256 : vector<2x128xf32>
    %270 = arith.negf %269 : vector<2x128xf32>
    %271 = math.exp %270 : vector<2x128xf32>
    %cst_56 = arith.constant 1.000000e+00 : f32
    %272 = vector.broadcast %cst_56 : f32 to vector<2x128xf32>
    %273 = arith.addf %272, %271 : vector<2x128xf32>
    %274 = arith.divf %272, %273 : vector<2x128xf32>
    %275 = math.tanh %269 : vector<2x128xf32>
    %276 = vector.extract_strided_slice %274 {offsets = [0, 0], sizes = [2, 32], strides = [1, 1]} : vector<2x128xf32> to vector<2x32xf32>
    %277 = vector.extract_strided_slice %274 {offsets = [0, 32], sizes = [2, 32], strides = [1, 1]} : vector<2x128xf32> to vector<2x32xf32>
    %278 = vector.extract_strided_slice %275 {offsets = [0, 64], sizes = [2, 32], strides = [1, 1]} : vector<2x128xf32> to vector<2x32xf32>
    %279 = vector.extract_strided_slice %274 {offsets = [0, 96], sizes = [2, 32], strides = [1, 1]} : vector<2x128xf32> to vector<2x32xf32>
    %280 = arith.mulf %277, %252 : vector<2x32xf32>
    %281 = arith.mulf %276, %278 : vector<2x32xf32>
    %282 = arith.addf %280, %281 : vector<2x32xf32>
    %283 = math.tanh %282 : vector<2x32xf32>
    %284 = arith.mulf %279, %283 : vector<2x32xf32>
    %cst_57 = arith.constant dense<0.000000e+00> : vector<2x160xf32>
    %285 = tpu.matmul %284, %1, %cst_57 {dimension_numbers = #tpu.dot_dimension_numbers<[1], [0], [0], [1], [0, 0, 1, 1], [], []>} : vector<2x32xf32>, vector<32x160xf32>, vector<2x160xf32> -> vector<2x160xf32>
    %286 = vector.extract_strided_slice %285 {offsets = [0, 0], sizes = [2, 128], strides = [1, 1]} : vector<2x160xf32> to vector<2x128xf32>
    %287 = vector.extract_strided_slice %285 {offsets = [0, 128], sizes = [2, 32], strides = [1, 1]} : vector<2x160xf32> to vector<2x32xf32>
    %288 = arith.addf %287, %4 : vector<2x32xf32>
    %c0_58 = arith.constant 0 : index
    %c3 = arith.constant 3 : index
    %c0_59 = arith.constant 0 : index
    %289 = vector.load %arg9[%c0_58, %c3, %c0_59] : memref<2x8x32xf32, #tpu.memory_space<vmem>>, vector<2x1x32xf32>
    %290 = vector.shape_cast %289 : vector<2x1x32xf32> to vector<2x32xf32>
    %291 = vector.shape_cast %288 : vector<2x32xf32> to vector<2x1x32xf32>
    tpu.vector_store %arg9[%c0_58, %c3, %c0_59], %291 {strides = array<i32>} : memref<2x8x32xf32, #tpu.memory_space<vmem>>, vector<2x1x32xf32>,
    %292 = tpu.reduce_index %288 {axis = 1 : i32, kind = #tpu.reduction_kind<arg_max>} : vector<2x32xf32> -> vector<2xi32>
    %293 = vector.shape_cast %292 : vector<2xi32> to vector<2x1xi32>
    %294 = vector.broadcast %293 : vector<2x1xi32> to vector<2x64xi32>
    %295 = arith.cmpi eq, %172, %294 : vector<2x64xi32>
    %296 = arith.extui %295 : vector<2x64xi1> to vector<2x64xi32>
    %297 = arith.sitofp %296 : vector<2x64xi32> to vector<2x64xf32>
    %cst_60 = arith.constant dense<0.000000e+00> : vector<2x128xf32>
    %298 = tpu.matmul %297, %169, %cst_60 {dimension_numbers = #tpu.dot_dimension_numbers<[1], [0], [0], [1], [0, 0, 1, 1], [], []>} : vector<2x64xf32>, vector<64x128xf32>, vector<2x128xf32> -> vector<2x128xf32>
    %299 = arith.addf %298, %286 : vector<2x128xf32>
    %300 = arith.negf %299 : vector<2x128xf32>
    %301 = math.exp %300 : vector<2x128xf32>
    %cst_61 = arith.constant 1.000000e+00 : f32
    %302 = vector.broadcast %cst_61 : f32 to vector<2x128xf32>
    %303 = arith.addf %302, %301 : vector<2x128xf32>
    %304 = arith.divf %302, %303 : vector<2x128xf32>
    %305 = math.tanh %299 : vector<2x128xf32>
    %306 = vector.extract_strided_slice %304 {offsets = [0, 0], sizes = [2, 32], strides = [1, 1]} : vector<2x128xf32> to vector<2x32xf32>
    %307 = vector.extract_strided_slice %304 {offsets = [0, 32], sizes = [2, 32], strides = [1, 1]} : vector<2x128xf32> to vector<2x32xf32>
    %308 = vector.extract_strided_slice %305 {offsets = [0, 64], sizes = [2, 32], strides = [1, 1]} : vector<2x128xf32> to vector<2x32xf32>
    %309 = vector.extract_strided_slice %304 {offsets = [0, 96], sizes = [2, 32], strides = [1, 1]} : vector<2x128xf32> to vector<2x32xf32>
    %310 = arith.mulf %307, %282 : vector<2x32xf32>
    %311 = arith.mulf %306, %308 : vector<2x32xf32>
    %312 = arith.addf %310, %311 : vector<2x32xf32>
    %313 = math.tanh %312 : vector<2x32xf32>
    %314 = arith.mulf %309, %313 : vector<2x32xf32>
    %cst_62 = arith.constant dense<0.000000e+00> : vector<2x160xf32>
    %315 = tpu.matmul %314, %1, %cst_62 {dimension_numbers = #tpu.dot_dimension_numbers<[1], [0], [0], [1], [0, 0, 1, 1], [], []>} : vector<2x32xf32>, vector<32x160xf32>, vector<2x160xf32> -> vector<2x160xf32>
    %316 = vector.extract_strided_slice %315 {offsets = [0, 0], sizes = [2, 128], strides = [1, 1]} : vector<2x160xf32> to vector<2x128xf32>
    %317 = vector.extract_strided_slice %315 {offsets = [0, 128], sizes = [2, 32], strides = [1, 1]} : vector<2x160xf32> to vector<2x32xf32>
    %318 = arith.addf %317, %4 : vector<2x32xf32>
    %c0_63 = arith.constant 0 : index
    %c4 = arith.constant 4 : index
    %c0_64 = arith.constant 0 : index
    %319 = vector.load %arg9[%c0_63, %c4, %c0_64] : memref<2x8x32xf32, #tpu.memory_space<vmem>>, vector<2x1x32xf32>
    %320 = vector.shape_cast %319 : vector<2x1x32xf32> to vector<2x32xf32>
    %321 = vector.shape_cast %318 : vector<2x32xf32> to vector<2x1x32xf32>
    tpu.vector_store %arg9[%c0_63, %c4, %c0_64], %321 {strides = array<i32>} : memref<2x8x32xf32, #tpu.memory_space<vmem>>, vector<2x1x32xf32>,
    %322 = tpu.reduce_index %318 {axis = 1 : i32, kind = #tpu.reduction_kind<arg_max>} : vector<2x32xf32> -> vector<2xi32>
    %323 = vector.shape_cast %322 : vector<2xi32> to vector<2x1xi32>
    %324 = vector.broadcast %323 : vector<2x1xi32> to vector<2x64xi32>
    %325 = arith.cmpi eq, %172, %324 : vector<2x64xi32>
    %326 = arith.extui %325 : vector<2x64xi1> to vector<2x64xi32>
    %327 = arith.sitofp %326 : vector<2x64xi32> to vector<2x64xf32>
    %cst_65 = arith.constant dense<0.000000e+00> : vector<2x128xf32>
    %328 = tpu.matmul %327, %169, %cst_65 {dimension_numbers = #tpu.dot_dimension_numbers<[1], [0], [0], [1], [0, 0, 1, 1], [], []>} : vector<2x64xf32>, vector<64x128xf32>, vector<2x128xf32> -> vector<2x128xf32>
    %329 = arith.addf %328, %316 : vector<2x128xf32>
    %330 = arith.negf %329 : vector<2x128xf32>
    %331 = math.exp %330 : vector<2x128xf32>
    %cst_66 = arith.constant 1.000000e+00 : f32
    %332 = vector.broadcast %cst_66 : f32 to vector<2x128xf32>
    %333 = arith.addf %332, %331 : vector<2x128xf32>
    %334 = arith.divf %332, %333 : vector<2x128xf32>
    %335 = math.tanh %329 : vector<2x128xf32>
    %336 = vector.extract_strided_slice %334 {offsets = [0, 0], sizes = [2, 32], strides = [1, 1]} : vector<2x128xf32> to vector<2x32xf32>
    %337 = vector.extract_strided_slice %334 {offsets = [0, 32], sizes = [2, 32], strides = [1, 1]} : vector<2x128xf32> to vector<2x32xf32>
    %338 = vector.extract_strided_slice %335 {offsets = [0, 64], sizes = [2, 32], strides = [1, 1]} : vector<2x128xf32> to vector<2x32xf32>
    %339 = vector.extract_strided_slice %334 {offsets = [0, 96], sizes = [2, 32], strides = [1, 1]} : vector<2x128xf32> to vector<2x32xf32>
    %340 = arith.mulf %337, %312 : vector<2x32xf32>
    %341 = arith.mulf %336, %338 : vector<2x32xf32>
    %342 = arith.addf %340, %341 : vector<2x32xf32>
    %343 = math.tanh %342 : vector<2x32xf32>
    %344 = arith.mulf %339, %343 : vector<2x32xf32>
    %cst_67 = arith.constant dense<0.000000e+00> : vector<2x160xf32>
    %345 = tpu.matmul %344, %1, %cst_67 {dimension_numbers = #tpu.dot_dimension_numbers<[1], [0], [0], [1], [0, 0, 1, 1], [], []>} : vector<2x32xf32>, vector<32x160xf32>, vector<2x160xf32> -> vector<2x160xf32>
    %346 = vector.extract_strided_slice %345 {offsets = [0, 0], sizes = [2, 128], strides = [1, 1]} : vector<2x160xf32> to vector<2x128xf32>
    %347 = vector.extract_strided_slice %345 {offsets = [0, 128], sizes = [2, 32], strides = [1, 1]} : vector<2x160xf32> to vector<2x32xf32>
    %348 = arith.addf %347, %4 : vector<2x32xf32>
    %c0_68 = arith.constant 0 : index
    %c5 = arith.constant 5 : index
    %c0_69 = arith.constant 0 : index
    %349 = vector.load %arg9[%c0_68, %c5, %c0_69] : memref<2x8x32xf32, #tpu.memory_space<vmem>>, vector<2x1x32xf32>
    %350 = vector.shape_cast %349 : vector<2x1x32xf32> to vector<2x32xf32>
    %351 = vector.shape_cast %348 : vector<2x32xf32> to vector<2x1x32xf32>
    tpu.vector_store %arg9[%c0_68, %c5, %c0_69], %351 {strides = array<i32>} : memref<2x8x32xf32, #tpu.memory_space<vmem>>, vector<2x1x32xf32>,
    %352 = tpu.reduce_index %348 {axis = 1 : i32, kind = #tpu.reduction_kind<arg_max>} : vector<2x32xf32> -> vector<2xi32>
    %353 = vector.shape_cast %352 : vector<2xi32> to vector<2x1xi32>
    %354 = vector.broadcast %353 : vector<2x1xi32> to vector<2x64xi32>
    %355 = arith.cmpi eq, %172, %354 : vector<2x64xi32>
    %356 = arith.extui %355 : vector<2x64xi1> to vector<2x64xi32>
    %357 = arith.sitofp %356 : vector<2x64xi32> to vector<2x64xf32>
    %cst_70 = arith.constant dense<0.000000e+00> : vector<2x128xf32>
    %358 = tpu.matmul %357, %169, %cst_70 {dimension_numbers = #tpu.dot_dimension_numbers<[1], [0], [0], [1], [0, 0, 1, 1], [], []>} : vector<2x64xf32>, vector<64x128xf32>, vector<2x128xf32> -> vector<2x128xf32>
    %359 = arith.addf %358, %346 : vector<2x128xf32>
    %360 = arith.negf %359 : vector<2x128xf32>
    %361 = math.exp %360 : vector<2x128xf32>
    %cst_71 = arith.constant 1.000000e+00 : f32
    %362 = vector.broadcast %cst_71 : f32 to vector<2x128xf32>
    %363 = arith.addf %362, %361 : vector<2x128xf32>
    %364 = arith.divf %362, %363 : vector<2x128xf32>
    %365 = math.tanh %359 : vector<2x128xf32>
    %366 = vector.extract_strided_slice %364 {offsets = [0, 0], sizes = [2, 32], strides = [1, 1]} : vector<2x128xf32> to vector<2x32xf32>
    %367 = vector.extract_strided_slice %364 {offsets = [0, 32], sizes = [2, 32], strides = [1, 1]} : vector<2x128xf32> to vector<2x32xf32>
    %368 = vector.extract_strided_slice %365 {offsets = [0, 64], sizes = [2, 32], strides = [1, 1]} : vector<2x128xf32> to vector<2x32xf32>
    %369 = vector.extract_strided_slice %364 {offsets = [0, 96], sizes = [2, 32], strides = [1, 1]} : vector<2x128xf32> to vector<2x32xf32>
    %370 = arith.mulf %367, %342 : vector<2x32xf32>
    %371 = arith.mulf %366, %368 : vector<2x32xf32>
    %372 = arith.addf %370, %371 : vector<2x32xf32>
    %373 = math.tanh %372 : vector<2x32xf32>
    %374 = arith.mulf %369, %373 : vector<2x32xf32>
    %cst_72 = arith.constant dense<0.000000e+00> : vector<2x160xf32>
    %375 = tpu.matmul %374, %1, %cst_72 {dimension_numbers = #tpu.dot_dimension_numbers<[1], [0], [0], [1], [0, 0, 1, 1], [], []>} : vector<2x32xf32>, vector<32x160xf32>, vector<2x160xf32> -> vector<2x160xf32>
    %376 = vector.extract_strided_slice %375 {offsets = [0, 0], sizes = [2, 128], strides = [1, 1]} : vector<2x160xf32> to vector<2x128xf32>
    %377 = vector.extract_strided_slice %375 {offsets = [0, 128], sizes = [2, 32], strides = [1, 1]} : vector<2x160xf32> to vector<2x32xf32>
    %378 = arith.addf %377, %4 : vector<2x32xf32>
    %c0_73 = arith.constant 0 : index
    %c6 = arith.constant 6 : index
    %c0_74 = arith.constant 0 : index
    %379 = vector.load %arg9[%c0_73, %c6, %c0_74] : memref<2x8x32xf32, #tpu.memory_space<vmem>>, vector<2x1x32xf32>
    %380 = vector.shape_cast %379 : vector<2x1x32xf32> to vector<2x32xf32>
    %381 = vector.shape_cast %378 : vector<2x32xf32> to vector<2x1x32xf32>
    tpu.vector_store %arg9[%c0_73, %c6, %c0_74], %381 {strides = array<i32>} : memref<2x8x32xf32, #tpu.memory_space<vmem>>, vector<2x1x32xf32>,
    %382 = tpu.reduce_index %378 {axis = 1 : i32, kind = #tpu.reduction_kind<arg_max>} : vector<2x32xf32> -> vector<2xi32>
    %383 = vector.shape_cast %382 : vector<2xi32> to vector<2x1xi32>
    %384 = vector.broadcast %383 : vector<2x1xi32> to vector<2x64xi32>
    %385 = arith.cmpi eq, %172, %384 : vector<2x64xi32>
    %386 = arith.extui %385 : vector<2x64xi1> to vector<2x64xi32>
    %387 = arith.sitofp %386 : vector<2x64xi32> to vector<2x64xf32>
    %cst_75 = arith.constant dense<0.000000e+00> : vector<2x128xf32>
    %388 = tpu.matmul %387, %169, %cst_75 {dimension_numbers = #tpu.dot_dimension_numbers<[1], [0], [0], [1], [0, 0, 1, 1], [], []>} : vector<2x64xf32>, vector<64x128xf32>, vector<2x128xf32> -> vector<2x128xf32>
    %389 = arith.addf %388, %376 : vector<2x128xf32>
    %390 = arith.negf %389 : vector<2x128xf32>
    %391 = math.exp %390 : vector<2x128xf32>
    %cst_76 = arith.constant 1.000000e+00 : f32
    %392 = vector.broadcast %cst_76 : f32 to vector<2x128xf32>
    %393 = arith.addf %392, %391 : vector<2x128xf32>
    %394 = arith.divf %392, %393 : vector<2x128xf32>
    %395 = math.tanh %389 : vector<2x128xf32>
    %396 = vector.extract_strided_slice %394 {offsets = [0, 0], sizes = [2, 32], strides = [1, 1]} : vector<2x128xf32> to vector<2x32xf32>
    %397 = vector.extract_strided_slice %394 {offsets = [0, 32], sizes = [2, 32], strides = [1, 1]} : vector<2x128xf32> to vector<2x32xf32>
    %398 = vector.extract_strided_slice %395 {offsets = [0, 64], sizes = [2, 32], strides = [1, 1]} : vector<2x128xf32> to vector<2x32xf32>
    %399 = vector.extract_strided_slice %394 {offsets = [0, 96], sizes = [2, 32], strides = [1, 1]} : vector<2x128xf32> to vector<2x32xf32>
    %400 = arith.mulf %397, %372 : vector<2x32xf32>
    %401 = arith.mulf %396, %398 : vector<2x32xf32>
    %402 = arith.addf %400, %401 : vector<2x32xf32>
    %403 = math.tanh %402 : vector<2x32xf32>
    %404 = arith.mulf %399, %403 : vector<2x32xf32>
    %cst_77 = arith.constant dense<0.000000e+00> : vector<2x160xf32>
    %405 = tpu.matmul %404, %1, %cst_77 {dimension_numbers = #tpu.dot_dimension_numbers<[1], [0], [0], [1], [0, 0, 1, 1], [], []>} : vector<2x32xf32>, vector<32x160xf32>, vector<2x160xf32> -> vector<2x160xf32>
    %406 = vector.extract_strided_slice %405 {offsets = [0, 128], sizes = [2, 32], strides = [1, 1]} : vector<2x160xf32> to vector<2x32xf32>
    %407 = arith.addf %406, %4 : vector<2x32xf32>
    %c0_78 = arith.constant 0 : index
    %c7 = arith.constant 7 : index
    %c0_79 = arith.constant 0 : index
    %408 = vector.load %arg9[%c0_78, %c7, %c0_79] : memref<2x8x32xf32, #tpu.memory_space<vmem>>, vector<2x1x32xf32>
    %409 = vector.shape_cast %408 : vector<2x1x32xf32> to vector<2x32xf32>
    %410 = vector.shape_cast %407 : vector<2x32xf32> to vector<2x1x32xf32>
    tpu.vector_store %arg9[%c0_78, %c7, %c0_79], %410 {strides = array<i32>} : memref<2x8x32xf32, #tpu.memory_space<vmem>>, vector<2x1x32xf32>,
    return
  }
}

</mosaic_0001>

<llo_original>
// kernel: tpu_custom_call.1
$region0: #{tpu_custom_call.1}
  #allocation0 [shape = 'u32[]', space=smem, size = 0x4, offset = 0x4, fixed_abs, tag = 'smem constant byte address 0x4 - core index']
  #allocation1 [shape = 'u32[144,128]{1,0:T(1,128)}', space=vmem, size = 0x12000, scoped, tag = 'internal scratch']
  %s0 = inlined_call_operand.vmem [shape: f32[16,32], index: 0, kind: input, shape index: {}]
  %s1 = inlined_call_operand.vmem [shape: f32[64,32], index: 1, kind: input, shape index: {}]
  %s2 = inlined_call_operand.vmem [shape: f32[32,128], index: 2, kind: input, shape index: {}]
  %s3 = inlined_call_operand.hbm [shape: f32[32,128], index: 3, kind: input, shape index: {}]
  %s4 = inlined_call_operand.vmem [shape: f32[1,128], index: 4, kind: input, shape index: {}]
  %s5 = inlined_call_operand.hbm [shape: f32[32,128], index: 5, kind: input, shape index: {}]
  %s6 = inlined_call_operand.vmem [shape: f32[1,128], index: 6, kind: input, shape index: {}]
  %s7 = inlined_call_operand.vmem [shape: f32[32,160], index: 7, kind: input, shape index: {}]
  %s8 = inlined_call_operand.vmem [shape: f32[1,32], index: 8, kind: input, shape index: {}]
  %s9 = inlined_call_operand.hbm [shape: f32[2,8,32], index: 9, kind: output, shape index: {}]
  %s10 = sld [smem:[#allocation0]]
  $region54: #{tpu_custom_call.1} parent=0
    _
  %s12 = ssub.s32 1, %s10
  %s13 = scalar_select 0, %s12, %s10
  $region1: #{tpu_custom_call.1} parent=0
    #allocation2 [shape = 'u8[16384]{0}', space=vmem, size = 0x4000, scoped, tag = 'input window, operand 3, single buffered']
    #allocation3 [shape = 's32[1]{0}', space=sflag, size = 0x4, scoped, tag = 'scoped memory for tpu_custom_call.1']
    #allocation4 [shape = 's32[1]{0}', space=sflag, size = 0x4, scoped, tag = 'scoped memory for tpu_custom_call.1']
    #allocation5 [shape = 'u8[16384]{0}', space=vmem, size = 0x4000, scoped, tag = 'input window, operand 5, single buffered']
    #allocation6 [shape = 's32[1]{0}', space=sflag, size = 0x4, scoped, tag = 'scoped memory for tpu_custom_call.1']
    #allocation7 [shape = 'u8[8192]{0}', space=vmem, size = 0x2000, scoped, tag = 'output window, operand 0, single buffered']
    %14 = vsyncpa [#allocation3], 0
    %15 = vsyncpa [#allocation6], 0
    %16 = vsyncpa [#allocation4], 0
    // Predicated region
    $region2: #{tpu_custom_call.1} parent=1 // pred_check
      _
    $region3: #{tpu_custom_call.1} parent=1 // pred_check_branch
      %18 = sbr.rel (0) target = $region5
    $region4: #{tpu_custom_call.1} parent=1 // pred_region
      _
    $region5: #{tpu_custom_call.1} parent=1 // pred_fallthru
      _
    // Predicated region
    $region6: #{tpu_custom_call.1} parent=1 // pred_check
      _
    $region7: #{tpu_custom_call.1} parent=1 // pred_check_branch
      %20 = sbr.rel (0) target = $region9
    $region8: #{tpu_custom_call.1} parent=1 // pred_region
      _
    $region9: #{tpu_custom_call.1} parent=1 // pred_fallthru
      _
    // Predicated region
    $region10: #{tpu_custom_call.1} parent=1 // pred_check
      _
    $region11: #{tpu_custom_call.1} parent=1 // pred_check_branch
      %22 = sbr.rel (0) target = $region13
    $region12: #{tpu_custom_call.1} parent=1 // pred_region
      _
    $region13: #{tpu_custom_call.1} parent=1 // pred_fallthru
      _
    // Predicated region
    $region14: #{tpu_custom_call.1} parent=1 // pred_check
      _
    $region15: #{tpu_custom_call.1} parent=1 // pred_check_branch
      %24 = sbr.rel (0) target = $region17
    $region16: #{tpu_custom_call.1} parent=1 // pred_region
      %s26 = ssub.s32 512, 512
      %27 = vsyncadd [#allocation3], %s26
      %s28 = sshll.u32 [#allocation2], 4
      %s29 = int_to_ptr.vmem [resolvable:$true] %s28
      %34 = dma.hbm_to_vmem [thread:$0]  %s3, 512, %s29, [#allocation3], 128, 128, 8
    $region17: #{tpu_custom_call.1} parent=1 // pred_fallthru
      _
    // Predicated region
    $region18: #{tpu_custom_call.1} parent=1 // pred_check
      _
    $region19: #{tpu_custom_call.1} parent=1 // pred_check_branch
      %36 = sbr.rel (0) target = $region21
    $region20: #{tpu_custom_call.1} parent=1 // pred_region
      _
    $region21: #{tpu_custom_call.1} parent=1 // pred_fallthru
      _
    // Predicated region
    $region22: #{tpu_custom_call.1} parent=1 // pred_check
      _
    $region23: #{tpu_custom_call.1} parent=1 // pred_check_branch
      %38 = sbr.rel (0) target = $region25
    $region24: #{tpu_custom_call.1} parent=1 // pred_region
      %s40 = ssub.s32 512, 512
      %41 = vsyncadd [#allocation6], %s40
      %s42 = sshll.u32 [#allocation5], 4
      %s43 = int_to_ptr.vmem [resolvable:$true] %s42
      %48 = dma.hbm_to_vmem [thread:$0]  %s5, 512, %s43, [#allocation6], 128, 128, 8
    $region25: #{tpu_custom_call.1} parent=1 // pred_fallthru
      _
    // Predicated region
    $region26: #{tpu_custom_call.1} parent=1 // pred_check
      _
    $region27: #{tpu_custom_call.1} parent=1 // pred_check_branch
      %50 = sbr.rel (0) target = $region29
    $region28: #{tpu_custom_call.1} parent=1 // pred_region
      _
    $region29: #{tpu_custom_call.1} parent=1 // pred_fallthru
      _
    // Predicated region
    $region30: #{tpu_custom_call.1} parent=1 // pred_check
      _
    $region31: #{tpu_custom_call.1} parent=1 // pred_check_branch
      %52 = sbr.rel (0) target = $region33
    $region32: #{tpu_custom_call.1} parent=1 // pred_region
      _
    $region33: #{tpu_custom_call.1} parent=1 // pred_fallthru
      _
    // Predicated region
    $region34: #{tpu_custom_call.1} parent=1 // pred_check
      _
    $region35: #{tpu_custom_call.1} parent=1 // pred_check_branch
      %54 = sbr.rel (0) target = $region37
    $region36: #{tpu_custom_call.1} parent=1 // pred_region
      _
    $region37: #{tpu_custom_call.1} parent=1 // pred_fallthru
      _
    // Predicated region
    $region38: #{tpu_custom_call.1} parent=1 // pred_check
      _
    $region39: #{tpu_custom_call.1} parent=1 // pred_check_branch
      %56 = sbr.rel (0) target = $region41
    $region40: #{tpu_custom_call.1} parent=1 // pred_region
      %57 = dma.done [#allocation3], 512
    $region41: #{tpu_custom_call.1} parent=1 // pred_fallthru
      _
    // Predicated region
    $region42: #{tpu_custom_call.1} parent=1 // pred_check
      _
    $region43: #{tpu_custom_call.1} parent=1 // pred_check_branch
      %59 = sbr.rel (0) target = $region45
    $region44: #{tpu_custom_call.1} parent=1 // pred_region
      %60 = dma.done [#allocation6], 512
    $region45: #{tpu_custom_call.1} parent=1 // pred_fallthru
      _
    %v61 = vld [vmem:[#allocation2] sm:$0xff]
    %v62 = vld [vmem:[#allocation2 + $0x8] sm:$0xff]
    %v63 = vld [vmem:[#allocation2 + $0x10] sm:$0xff]
    %v64 = vld [vmem:[#allocation2 + $0x18] sm:$0xff]
    %v65 = vld [vmem:[%s7] sm:$0xff]
    %v66 = vld [vmem:[%s7 + $0x8] sm:$0xff]
    %v67 = vld [vmem:[%s7 + $0x10] sm:$0xff]
    %v68 = vld [vmem:[%s7 + $0x18] sm:$0xff]
    %v69 = vld [vmem:[%s7 + $0x20] sm:$0xff]
    %v70 = vld [vmem:[%s7 + $0x28] sm:$0xff]
    %v71 = vld [vmem:[%s7 + $0x30] sm:$0xff]
    %v72 = vld [vmem:[%s7 + $0x38] sm:$0xff]
    %v73 = vld [vmem:[%s8] sm:$0x1]
    %v75 = vlaneseq
    %v76 = vshrl.u32 %v75, 7
    %v77 = vsub.s32 0, %v76
    %v78 = vrot.slane %v73, %v77
    %v80 = vld [vmem:[%s0] sm:$0xff]
    %v81 = vld [vmem:[%s0 + $0x8] sm:$0xff]
    %v82 = vld [vmem:[%s2] sm:$0xff]
    %v83 = vld [vmem:[%s2 + $0x8] sm:$0xff]
    %v84 = vld [vmem:[%s2 + $0x10] sm:$0xff]
    %v85 = vld [vmem:[%s2 + $0x18] sm:$0xff]
    %v86 = vld [vmem:[%s4] sm:$0x1]
    %v88 = vlaneseq
    %v89 = vshrl.u32 %v88, 7
    %v90 = vsub.s32 0, %v89
    %v91 = vrot.slane %v86, %v90
    %vm93 = vcmask 261120
    %v95 = vsel %vm93, %v80, 0
    %v98 = vsel %vm93, %v81, 0
    %100 = vmatprep.subr.mxu0 0.0
    %101 = vmatpush1.msra.mxu0 %v82
    %102 = vmatprep.subr.mxu0 0.0
    %103 = vmatpush1.msra.mxu0 %v83
    %104 = vmatprep.subr.mxu0 0.0
    %105 = vmatpush1.msra.mxu0 %v84
    %106 = vmatprep.subr.mxu0 0.0
    %107 = vmatpush1.msra.mxu0 %v85
    %108 = vmatprep.subr.mxu0 0.0
    %109 = vmatpush1.msra.mxu0 0.0
    %110 = vmatprep.subr.mxu0 0.0
    %111 = vmatpush1.msra.mxu0 0.0
    %112 = vmatprep.subr.mxu0 0.0
    %113 = vmatpush1.msra.mxu0 0.0
    %114 = vmatprep.subr.mxu0 0.0
    %115 = vmatpush1.msra.mxu0 0.0
    %116 = vmatprep.subr.mxu0 0.0
    %117 = vmatpush1.msra.mxu0 0.0
    %118 = vmatprep.subr.mxu0 0.0
    %119 = vmatpush1.msra.mxu0 0.0
    %120 = vmatprep.subr.mxu0 0.0
    %121 = vmatpush1.msra.mxu0 0.0
    %122 = vmatprep.subr.mxu0 0.0
    %123 = vmatpush1.msra.mxu0 0.0
    %124 = vmatprep.subr.mxu0 0.0
    %125 = vmatpush1.msra.mxu0 0.0
    %126 = vmatprep.subr.mxu0 0.0
    %127 = vmatpush1.msra.mxu0 0.0
    %128 = vmatprep.subr.mxu0 0.0
    %129 = vmatpush1.msra.mxu0 0.0
    %130 = vmatprep.subr.mxu0 0.0
    %131 = vmatpush1.msra.mxu0 0.0
    %132 = vmatprep.subr.mxu0 0.0
    %133 = vmatpush1.msra.mxu0 0.0
    %134 = vmatprep.subr.mxu0 0.0
    %135 = vmatpush1.msra.mxu0 0.0
    %136 = vmatprep.subr.mxu0 0.0
    %137 = vmatpush1.msra.mxu0 0.0
    %138 = vmatprep.subr.mxu0 0.0
    %139 = vmatpush1.msra.mxu0 0.0
    %140 = vmatprep.subr.mxu0 0.0
    %141 = vmatpush1.msra.mxu0 0.0
    %142 = vmatprep.subr.mxu0 0.0
    %143 = vmatpush1.msra.mxu0 0.0
    %144 = vmatprep.subr.mxu0 0.0
    %145 = vmatpush1.msra.mxu0 0.0
    %146 = vmatprep.subr.mxu0 0.0
    %147 = vmatpush1.msra.mxu0 0.0
    %148 = vmatprep.subr.mxu0 0.0
    %149 = vmatpush1.msra.mxu0 0.0
    %150 = vmatprep.subr.mxu0 0.0
    %151 = vmatpush1.msra.mxu0 0.0
    %152 = vmatprep.subr.mxu0 0.0
    %153 = vmatpush1.msra.mxu0 0.0
    %154 = vmatprep.subr.mxu0 0.0
    %155 = vmatpush1.msra.mxu0 0.0
    %156 = vmatprep.subr.mxu0 0.0
    %157 = vmatpush1.msra.mxu0 0.0
    %158 = vmatprep.subr.mxu0 0.0
    %159 = vmatpush1.msra.mxu0 0.0
    %160 = vmatprep.subr.mxu0 0.0
    %161 = vmatpush1.msra.mxu0 0.0
    %162 = vmatprep.subr.mxu0 0.0
    %163 = vmatpush1.msra.mxu0 0.0
    %164 = vmatprep.mubr.f32.mxu0 0.0
    %165 = vmatmul.mubr.f32.gmra.mrb[0].mxu0 %v95
    %v166 = vpop.f32.mrb[0].mxu0
    %v167 = vadd.f32 %v91, %v166
    %v168 = vpop.f32.mrb[0].mxu0
    %169 = vmatprep.mubr.f32.mxu0 0.0
    %170 = vmatmul.mubr.f32.gmra.mrb[0].mxu0 %v98
    %v171 = vpop.f32.mrb[0].mxu0
    %v172 = vadd.f32 %v91, %v171
    %v173 = vpop.f32.mrb[0].mxu0
    %174 = vdwg.mxu0
    %v176 = vsel %vm93, 0.0, 0
    %178 = vmatprep.subr.mxu0 0.0
    %179 = vmatpush1.msra.mxu0 %v61
    %180 = vmatprep.subr.mxu0 0.0
    %181 = vmatpush1.msra.mxu0 %v62
    %182 = vmatprep.subr.mxu0 0.0
    %183 = vmatpush1.msra.mxu0 %v63
    %184 = vmatprep.subr.mxu0 0.0
    %185 = vmatpush1.msra.mxu0 %v64
    %186 = vmatprep.subr.mxu0 0.0
    %187 = vmatpush1.msra.mxu0 0.0
    %188 = vmatprep.subr.mxu0 0.0
    %189 = vmatpush1.msra.mxu0 0.0
    %190 = vmatprep.subr.mxu0 0.0
    %191 = vmatpush1.msra.mxu0 0.0
    %192 = vmatprep.subr.mxu0 0.0
    %193 = vmatpush1.msra.mxu0 0.0
    %194 = vmatprep.subr.mxu0 0.0
    %195 = vmatpush1.msra.mxu0 0.0
    %196 = vmatprep.subr.mxu0 0.0
    %197 = vmatpush1.msra.mxu0 0.0
    %198 = vmatprep.subr.mxu0 0.0
    %199 = vmatpush1.msra.mxu0 0.0
    %200 = vmatprep.subr.mxu0 0.0
    %201 = vmatpush1.msra.mxu0 0.0
    %202 = vmatprep.subr.mxu0 0.0
    %203 = vmatpush1.msra.mxu0 0.0
    %204 = vmatprep.subr.mxu0 0.0
    %205 = vmatpush1.msra.mxu0 0.0
    %206 = vmatprep.subr.mxu0 0.0
    %207 = vmatpush1.msra.mxu0 0.0
    %208 = vmatprep.subr.mxu0 0.0
    %209 = vmatpush1.msra.mxu0 0.0
    %210 = vmatprep.subr.mxu0 0.0
    %211 = vmatpush1.msra.mxu0 0.0
    %212 = vmatprep.subr.mxu0 0.0
    %213 = vmatpush1.msra.mxu0 0.0
    %214 = vmatprep.subr.mxu0 0.0
    %215 = vmatpush1.msra.mxu0 0.0
    %216 = vmatprep.subr.mxu0 0.0
    %217 = vmatpush1.msra.mxu0 0.0
    %218 = vmatprep.subr.mxu0 0.0
    %219 = vmatpush1.msra.mxu0 0.0
    %220 = vmatprep.subr.mxu0 0.0
    %221 = vmatpush1.msra.mxu0 0.0
    %222 = vmatprep.subr.mxu0 0.0
    %223 = vmatpush1.msra.mxu0 0.0
    %224 = vmatprep.subr.mxu0 0.0
    %225 = vmatpush1.msra.mxu0 0.0
    %226 = vmatprep.subr.mxu0 0.0
    %227 = vmatpush1.msra.mxu0 0.0
    %228 = vmatprep.subr.mxu0 0.0
    %229 = vmatpush1.msra.mxu0 0.0
    %230 = vmatprep.subr.mxu0 0.0
    %231 = vmatpush1.msra.mxu0 0.0
    %232 = vmatprep.subr.mxu0 0.0
    %233 = vmatpush1.msra.mxu0 0.0
    %234 = vmatprep.subr.mxu0 0.0
    %235 = vmatpush1.msra.mxu0 0.0
    %236 = vmatprep.subr.mxu0 0.0
    %237 = vmatpush1.msra.mxu0 0.0
    %238 = vmatprep.subr.mxu0 0.0
    %239 = vmatpush1.msra.mxu0 0.0
    %240 = vmatprep.subr.mxu0 0.0
    %241 = vmatpush1.msra.mxu0 0.0
    %242 = vmatprep.mubr.f32.mxu0 0.0
    %243 = vmatmul.mubr.f32.gmra.mrb[0].mxu0 %v176
    %v244 = vpop.f32.mrb[0].mxu0
    %v245 = vadd.f32 0.0, %v244
    %v246 = vpop.f32.mrb[0].mxu0
    %247 = vdwg.mxu0
    %v248 = vadd.f32 %v167, %v245
    %v249 = vxor.u32 %v248, 2147483648
    %v250 = vmul.f32 %v249, 1.442695
    %v251 = vpow.pop %v250
    %v252 = vadd.f32 %v251, 1.0
    %v253 = vrcp.pop %v252
    %v254 = vmul.f32 1.0, %v253
    %v255 = vtanh.pop %v248
    %v256 = vmul.f32 %v254, 0.0
    %258 = vrot.lane.b32.xlu0 %v255, 64
    %v259 = vpop.permute.xlu0 %258
    %v261 = vmul.f32 %v254, %v259
    %263 = vrot.lane.b32.xlu0 %v261, 32
    %v264 = vpop.permute.xlu0 %263
    %v266 = vadd.f32 %v256, %v264
    %v267 = vtanh.pop %v266
    %269 = vrot.lane.b32.xlu0 %v267, 64
    %v270 = vpop.permute.xlu0 %269
    %v272 = vmul.f32 %v254, %v270
    %274 = vrot.lane.b32.xlu0 %v272, 32
    %v275 = vpop.permute.xlu0 %274
    %v276 = vsel %vm93, %v275, 0
    %278 = vmatprep.subr.mxu0 0.0
    %279 = vmatpush1.msra.mxu0 %v61
    %280 = vmatprep.subr.mxu0 0.0
    %281 = vmatpush1.msra.mxu0 %v62
    %282 = vmatprep.subr.mxu0 0.0
    %283 = vmatpush1.msra.mxu0 %v63
    %284 = vmatprep.subr.mxu0 0.0
    %285 = vmatpush1.msra.mxu0 %v64
    %286 = vmatprep.subr.mxu0 0.0
    %287 = vmatpush1.msra.mxu0 0.0
    %288 = vmatprep.subr.mxu0 0.0
    %289 = vmatpush1.msra.mxu0 0.0
    %290 = vmatprep.subr.mxu0 0.0
    %291 = vmatpush1.msra.mxu0 0.0
    %292 = vmatprep.subr.mxu0 0.0
    %293 = vmatpush1.msra.mxu0 0.0
    %294 = vmatprep.subr.mxu0 0.0
    %295 = vmatpush1.msra.mxu0 0.0
    %296 = vmatprep.subr.mxu0 0.0
    %297 = vmatpush1.msra.mxu0 0.0
    %298 = vmatprep.subr.mxu0 0.0
    %299 = vmatpush1.msra.mxu0 0.0
    %300 = vmatprep.subr.mxu0 0.0
    %301 = vmatpush1.msra.mxu0 0.0
    %302 = vmatprep.subr.mxu0 0.0
    %303 = vmatpush1.msra.mxu0 0.0
    %304 = vmatprep.subr.mxu0 0.0
    %305 = vmatpush1.msra.mxu0 0.0
    %306 = vmatprep.subr.mxu0 0.0
    %307 = vmatpush1.msra.mxu0 0.0
    %308 = vmatprep.subr.mxu0 0.0
    %309 = vmatpush1.msra.mxu0 0.0
    %310 = vmatprep.subr.mxu0 0.0
    %311 = vmatpush1.msra.mxu0 0.0
    %312 = vmatprep.subr.mxu0 0.0
    %313 = vmatpush1.msra.mxu0 0.0
    %314 = vmatprep.subr.mxu0 0.0
    %315 = vmatpush1.msra.mxu0 0.0
    %316 = vmatprep.subr.mxu0 0.0
    %317 = vmatpush1.msra.mxu0 0.0
    %318 = vmatprep.subr.mxu0 0.0
    %319 = vmatpush1.msra.mxu0 0.0
    %320 = vmatprep.subr.mxu0 0.0
    %321 = vmatpush1.msra.mxu0 0.0
    %322 = vmatprep.subr.mxu0 0.0
    %323 = vmatpush1.msra.mxu0 0.0
    %324 = vmatprep.subr.mxu0 0.0
    %325 = vmatpush1.msra.mxu0 0.0
    %326 = vmatprep.subr.mxu0 0.0
    %327 = vmatpush1.msra.mxu0 0.0
    %328 = vmatprep.subr.mxu0 0.0
    %329 = vmatpush1.msra.mxu0 0.0
    %330 = vmatprep.subr.mxu0 0.0
    %331 = vmatpush1.msra.mxu0 0.0
    %332 = vmatprep.subr.mxu0 0.0
    %333 = vmatpush1.msra.mxu0 0.0
    %334 = vmatprep.subr.mxu0 0.0
    %335 = vmatpush1.msra.mxu0 0.0
    %336 = vmatprep.subr.mxu0 0.0
    %337 = vmatpush1.msra.mxu0 0.0
    %338 = vmatprep.subr.mxu0 0.0
    %339 = vmatpush1.msra.mxu0 0.0
    %340 = vmatprep.subr.mxu0 0.0
    %341 = vmatpush1.msra.mxu0 0.0
    %342 = vmatprep.mubr.f32.mxu0 0.0
    %343 = vmatmul.mubr.f32.gmra.mrb[0].mxu0 %v276
    %v344 = vpop.f32.mrb[0].mxu0
    %v345 = vadd.f32 0.0, %v344
    %v346 = vpop.f32.mrb[0].mxu0
    %347 = vdwg.mxu0
    %v349 = vrot.slane %v345, 6
    %v351 = vadd.f32 %v167, %v349
    %v352 = vxor.u32 %v351, 2147483648
    %v353 = vmul.f32 %v352, 1.442695
    %v354 = vpow.pop %v353
    %v355 = vadd.f32 %v354, 1.0
    %v356 = vrcp.pop %v355
    %v357 = vmul.f32 1.0, %v356
    %v358 = vtanh.pop %v351
    %v360 = vrot.slane %v266, 6
    %v362 = vmul.f32 %v357, %v360
    %364 = vrot.lane.b32.xlu0 %v358, 64
    %v365 = vpop.permute.xlu0 %364
    %v367 = vmul.f32 %v357, %v365
    %369 = vrot.lane.b32.xlu0 %v367, 32
    %v370 = vpop.permute.xlu0 %369
    %v372 = vadd.f32 %v362, %v370
    %v373 = vtanh.pop %v372
    %375 = vrot.lane.b32.xlu0 %v373, 64
    %v376 = vpop.permute.xlu0 %375
    %v378 = vmul.f32 %v357, %v376
    %v380 = vrot.slane %v378, 2
    %381 = vrot.lane.b32.xlu0 %v380, 32
    %v382 = vpop.permute.xlu0 %381
    %v383 = vsel %vm93, %v382, 0
    %385 = vmatprep.subr.mxu0 0.0
    %386 = vmatpush1.msra.mxu0 %v61
    %387 = vmatprep.subr.mxu0 0.0
    %388 = vmatpush1.msra.mxu0 %v62
    %389 = vmatprep.subr.mxu0 0.0
    %390 = vmatpush1.msra.mxu0 %v63
    %391 = vmatprep.subr.mxu0 0.0
    %392 = vmatpush1.msra.mxu0 %v64
    %393 = vmatprep.subr.mxu0 0.0
    %394 = vmatpush1.msra.mxu0 0.0
    %395 = vmatprep.subr.mxu0 0.0
    %396 = vmatpush1.msra.mxu0 0.0
    %397 = vmatprep.subr.mxu0 0.0
    %398 = vmatpush1.msra.mxu0 0.0
    %399 = vmatprep.subr.mxu0 0.0
    %400 = vmatpush1.msra.mxu0 0.0
    %401 = vmatprep.subr.mxu0 0.0
    %402 = vmatpush1.msra.mxu0 0.0
    %403 = vmatprep.subr.mxu0 0.0
    %404 = vmatpush1.msra.mxu0 0.0
    %405 = vmatprep.subr.mxu0 0.0
    %406 = vmatpush1.msra.mxu0 0.0
    %407 = vmatprep.subr.mxu0 0.0
    %408 = vmatpush1.msra.mxu0 0.0
    %409 = vmatprep.subr.mxu0 0.0
    %410 = vmatpush1.msra.mxu0 0.0
    %411 = vmatprep.subr.mxu0 0.0
    %412 = vmatpush1.msra.mxu0 0.0
    %413 = vmatprep.subr.mxu0 0.0
    %414 = vmatpush1.msra.mxu0 0.0
    %415 = vmatprep.subr.mxu0 0.0
    %416 = vmatpush1.msra.mxu0 0.0
    %417 = vmatprep.subr.mxu0 0.0
    %418 = vmatpush1.msra.mxu0 0.0
    %419 = vmatprep.subr.mxu0 0.0
    %420 = vmatpush1.msra.mxu0 0.0
    %421 = vmatprep.subr.mxu0 0.0
    %422 = vmatpush1.msra.mxu0 0.0
    %423 = vmatprep.subr.mxu0 0.0
    %424 = vmatpush1.msra.mxu0 0.0
    %425 = vmatprep.subr.mxu0 0.0
    %426 = vmatpush1.msra.mxu0 0.0
    %427 = vmatprep.subr.mxu0 0.0
    %428 = vmatpush1.msra.mxu0 0.0
    %429 = vmatprep.subr.mxu0 0.0
    %430 = vmatpush1.msra.mxu0 0.0
    %431 = vmatprep.subr.mxu0 0.0
    %432 = vmatpush1.msra.mxu0 0.0
    %433 = vmatprep.subr.mxu0 0.0
    %434 = vmatpush1.msra.mxu0 0.0
    %435 = vmatprep.subr.mxu0 0.0
    %436 = vmatpush1.msra.mxu0 0.0
    %437 = vmatprep.subr.mxu0 0.0
    %438 = vmatpush1.msra.mxu0 0.0
    %439 = vmatprep.subr.mxu0 0.0
    %440 = vmatpush1.msra.mxu0 0.0
    %441 = vmatprep.subr.mxu0 0.0
    %442 = vmatpush1.msra.mxu0 0.0
    %443 = vmatprep.subr.mxu0 0.0
    %444 = vmatpush1.msra.mxu0 0.0
    %445 = vmatprep.subr.mxu0 0.0
    %446 = vmatpush1.msra.mxu0 0.0
    %447 = vmatprep.subr.mxu0 0.0
    %448 = vmatpush1.msra.mxu0 0.0
    %449 = vmatprep.mubr.f32.mxu0 0.0
    %450 = vmatmul.mubr.f32.gmra.mrb[0].mxu0 %v383
    %v451 = vpop.f32.mrb[0].mxu0
    %v452 = vadd.f32 0.0, %v451
    %v453 = vpop.f32.mrb[0].mxu0
    %454 = vdwg.mxu0
    %v456 = vrot.slane %v452, 4
    %v458 = vadd.f32 %v167, %v456
    %v459 = vxor.u32 %v458, 2147483648
    %v460 = vmul.f32 %v459, 1.442695
    %v461 = vpow.pop %v460
    %v462 = vadd.f32 %v461, 1.0
    %v463 = vrcp.pop %v462
    %v464 = vmul.f32 1.0, %v463
    %v465 = vtanh.pop %v458
    %v467 = vrot.slane %v372, 6
    %v469 = vmul.f32 %v464, %v467
    %471 = vrot.lane.b32.xlu0 %v465, 64
    %v472 = vpop.permute.xlu0 %471
    %v474 = vmul.f32 %v464, %v472
    %476 = vrot.lane.b32.xlu0 %v474, 32
    %v477 = vpop.permute.xlu0 %476
    %v479 = vadd.f32 %v469, %v477
    %v480 = vtanh.pop %v479
    %482 = vrot.lane.b32.xlu0 %v480, 64
    %v483 = vpop.permute.xlu0 %482
    %v485 = vmul.f32 %v464, %v483
    %v487 = vrot.slane %v485, 4
    %488 = vrot.lane.b32.xlu0 %v487, 32
    %v489 = vpop.permute.xlu0 %488
    %v490 = vsel %vm93, %v489, 0
    %492 = vmatprep.subr.mxu0 0.0
    %493 = vmatpush1.msra.mxu0 %v61
    %494 = vmatprep.subr.mxu0 0.0
    %495 = vmatpush1.msra.mxu0 %v62
    %496 = vmatprep.subr.mxu0 0.0
    %497 = vmatpush1.msra.mxu0 %v63
    %498 = vmatprep.subr.mxu0 0.0
    %499 = vmatpush1.msra.mxu0 %v64
    %500 = vmatprep.subr.mxu0 0.0
    %501 = vmatpush1.msra.mxu0 0.0
    %502 = vmatprep.subr.mxu0 0.0
    %503 = vmatpush1.msra.mxu0 0.0
    %504 = vmatprep.subr.mxu0 0.0
    %505 = vmatpush1.msra.mxu0 0.0
    %506 = vmatprep.subr.mxu0 0.0
    %507 = vmatpush1.msra.mxu0 0.0
    %508 = vmatprep.subr.mxu0 0.0
    %509 = vmatpush1.msra.mxu0 0.0
    %510 = vmatprep.subr.mxu0 0.0
    %511 = vmatpush1.msra.mxu0 0.0
    %512 = vmatprep.subr.mxu0 0.0
    %513 = vmatpush1.msra.mxu0 0.0
    %514 = vmatprep.subr.mxu0 0.0
    %515 = vmatpush1.msra.mxu0 0.0
    %516 = vmatprep.subr.mxu0 0.0
    %517 = vmatpush1.msra.mxu0 0.0
    %518 = vmatprep.subr.mxu0 0.0
    %519 = vmatpush1.msra.mxu0 0.0
    %520 = vmatprep.subr.mxu0 0.0
    %521 = vmatpush1.msra.mxu0 0.0
    %522 = vmatprep.subr.mxu0 0.0
    %523 = vmatpush1.msra.mxu0 0.0
    %524 = vmatprep.subr.mxu0 0.0
    %525 = vmatpush1.msra.mxu0 0.0
    %526 = vmatprep.subr.mxu0 0.0
    %527 = vmatpush1.msra.mxu0 0.0
    %528 = vmatprep.subr.mxu0 0.0
    %529 = vmatpush1.msra.mxu0 0.0
    %530 = vmatprep.subr.mxu0 0.0
    %531 = vmatpush1.msra.mxu0 0.0
    %532 = vmatprep.subr.mxu0 0.0
    %533 = vmatpush1.msra.mxu0 0.0
    %534 = vmatprep.subr.mxu0 0.0
    %535 = vmatpush1.msra.mxu0 0.0
    %536 = vmatprep.subr.mxu0 0.0
    %537 = vmatpush1.msra.mxu0 0.0
    %538 = vmatprep.subr.mxu0 0.0
    %539 = vmatpush1.msra.mxu0 0.0
    %540 = vmatprep.subr.mxu0 0.0
    %541 = vmatpush1.msra.mxu0 0.0
    %542 = vmatprep.subr.mxu0 0.0
    %543 = vmatpush1.msra.mxu0 0.0
    %544 = vmatprep.subr.mxu0 0.0
    %545 = vmatpush1.msra.mxu0 0.0
    %546 = vmatprep.subr.mxu0 0.0
    %547 = vmatpush1.msra.mxu0 0.0
    %548 = vmatprep.subr.mxu0 0.0
    %549 = vmatpush1.msra.mxu0 0.0
    %550 = vmatprep.subr.mxu0 0.0
    %551 = vmatpush1.msra.mxu0 0.0
    %552 = vmatprep.subr.mxu0 0.0
    %553 = vmatpush1.msra.mxu0 0.0
    %554 = vmatprep.subr.mxu0 0.0
    %555 = vmatpush1.msra.mxu0 0.0
    %556 = vmatprep.mubr.f32.mxu0 0.0
    %557 = vmatmul.mubr.f32.gmra.mrb[0].mxu0 %v490
    %v558 = vpop.f32.mrb[0].mxu0
    %v559 = vadd.f32 0.0, %v558
    %v560 = vpop.f32.mrb[0].mxu0
    %561 = vdwg.mxu0
    %v563 = vrot.slane %v559, 2
    %v565 = vadd.f32 %v167, %v563
    %v566 = vxor.u32 %v565, 2147483648
    %v567 = vmul.f32 %v566, 1.442695
    %v568 = vpow.pop %v567
    %v569 = vadd.f32 %v568, 1.0
    %v570 = vrcp.pop %v569
    %v571 = vmul.f32 1.0, %v570
    %v572 = vtanh.pop %v565
    %v574 = vrot.slane %v479, 6
    %v576 = vmul.f32 %v571, %v574
    %578 = vrot.lane.b32.xlu0 %v572, 64
    %v579 = vpop.permute.xlu0 %578
    %v581 = vmul.f32 %v571, %v579
    %583 = vrot.lane.b32.xlu0 %v581, 32
    %v584 = vpop.permute.xlu0 %583
    %v586 = vadd.f32 %v576, %v584
    %v587 = vtanh.pop %v586
    %589 = vrot.lane.b32.xlu0 %v587, 64
    %v590 = vpop.permute.xlu0 %589
    %v592 = vmul.f32 %v571, %v590
    %v594 = vrot.slane %v592, 6
    %595 = vrot.lane.b32.xlu0 %v594, 32
    %v596 = vpop.permute.xlu0 %595
    %v597 = vsel %vm93, %v596, 0
    %599 = vmatprep.subr.mxu0 0.0
    %600 = vmatpush1.msra.mxu0 %v61
    %601 = vmatprep.subr.mxu0 0.0
    %602 = vmatpush1.msra.mxu0 %v62
    %603 = vmatprep.subr.mxu0 0.0
    %604 = vmatpush1.msra.mxu0 %v63
    %605 = vmatprep.subr.mxu0 0.0
    %606 = vmatpush1.msra.mxu0 %v64
    %607 = vmatprep.subr.mxu0 0.0
    %608 = vmatpush1.msra.mxu0 0.0
    %609 = vmatprep.subr.mxu0 0.0
    %610 = vmatpush1.msra.mxu0 0.0
    %611 = vmatprep.subr.mxu0 0.0
    %612 = vmatpush1.msra.mxu0 0.0
    %613 = vmatprep.subr.mxu0 0.0
    %614 = vmatpush1.msra.mxu0 0.0
    %615 = vmatprep.subr.mxu0 0.0
    %616 = vmatpush1.msra.mxu0 0.0
    %617 = vmatprep.subr.mxu0 0.0
    %618 = vmatpush1.msra.mxu0 0.0
    %619 = vmatprep.subr.mxu0 0.0
    %620 = vmatpush1.msra.mxu0 0.0
    %621 = vmatprep.subr.mxu0 0.0
    %622 = vmatpush1.msra.mxu0 0.0
    %623 = vmatprep.subr.mxu0 0.0
    %624 = vmatpush1.msra.mxu0 0.0
    %625 = vmatprep.subr.mxu0 0.0
    %626 = vmatpush1.msra.mxu0 0.0
    %627 = vmatprep.subr.mxu0 0.0
    %628 = vmatpush1.msra.mxu0 0.0
    %629 = vmatprep.subr.mxu0 0.0
    %630 = vmatpush1.msra.mxu0 0.0
    %631 = vmatprep.subr.mxu0 0.0
    %632 = vmatpush1.msra.mxu0 0.0
    %633 = vmatprep.subr.mxu0 0.0
    %634 = vmatpush1.msra.mxu0 0.0
    %635 = vmatprep.subr.mxu0 0.0
    %636 = vmatpush1.msra.mxu0 0.0
    %637 = vmatprep.subr.mxu0 0.0
    %638 = vmatpush1.msra.mxu0 0.0
    %639 = vmatprep.subr.mxu0 0.0
    %640 = vmatpush1.msra.mxu0 0.0
    %641 = vmatprep.subr.mxu0 0.0
    %642 = vmatpush1.msra.mxu0 0.0
    %643 = vmatprep.subr.mxu0 0.0
    %644 = vmatpush1.msra.mxu0 0.0
    %645 = vmatprep.subr.mxu0 0.0
    %646 = vmatpush1.msra.mxu0 0.0
    %647 = vmatprep.subr.mxu0 0.0
    %648 = vmatpush1.msra.mxu0 0.0
    %649 = vmatprep.subr.mxu0 0.0
    %650 = vmatpush1.msra.mxu0 0.0
    %651 = vmatprep.subr.mxu0 0.0
    %652 = vmatpush1.msra.mxu0 0.0
    %653 = vmatprep.subr.mxu0 0.0
    %654 = vmatpush1.msra.mxu0 0.0
    %655 = vmatprep.subr.mxu0 0.0
    %656 = vmatpush1.msra.mxu0 0.0
    %657 = vmatprep.subr.mxu0 0.0
    %658 = vmatpush1.msra.mxu0 0.0
    %659 = vmatprep.subr.mxu0 0.0
    %660 = vmatpush1.msra.mxu0 0.0
    %661 = vmatprep.subr.mxu0 0.0
    %662 = vmatpush1.msra.mxu0 0.0
    %663 = vmatprep.mubr.f32.mxu0 0.0
    %664 = vmatmul.mubr.f32.gmra.mrb[0].mxu0 %v597
    %v665 = vpop.f32.mrb[0].mxu0
    %v666 = vadd.f32 0.0, %v665
    %v667 = vpop.f32.mrb[0].mxu0
    %668 = vdwg.mxu0
    %v669 = vadd.f32 %v172, %v666
    %v670 = vxor.u32 %v669, 2147483648
    %v671 = vmul.f32 %v670, 1.442695
    %v672 = vpow.pop %v671
    %v673 = vadd.f32 %v672, 1.0
    %v674 = vrcp.pop %v673
    %v675 = vmul.f32 1.0, %v674
    %v676 = vtanh.pop %v669
    %v678 = vrot.slane %v586, 6
    %v680 = vmul.f32 %v675, %v678
    %682 = vrot.lane.b32.xlu0 %v676, 64
    %v683 = vpop.permute.xlu0 %682
    %v685 = vmul.f32 %v675, %v683
    %687 = vrot.lane.b32.xlu0 %v685, 32
    %v688 = vpop.permute.xlu0 %687
    %v690 = vadd.f32 %v680, %v688
    %v691 = vtanh.pop %v690
    %693 = vrot.lane.b32.xlu0 %v691, 64
    %v694 = vpop.permute.xlu0 %693
    %v696 = vmul.f32 %v675, %v694
    %698 = vrot.lane.b32.xlu0 %v696, 32
    %v699 = vpop.permute.xlu0 %698
    %v700 = vsel %vm93, %v699, 0
    %702 = vmatprep.subr.mxu0 0.0
    %703 = vmatpush1.msra.mxu0 %v61
    %704 = vmatprep.subr.mxu0 0.0
    %705 = vmatpush1.msra.mxu0 %v62
    %706 = vmatprep.subr.mxu0 0.0
    %707 = vmatpush1.msra.mxu0 %v63
    %708 = vmatprep.subr.mxu0 0.0
    %709 = vmatpush1.msra.mxu0 %v64
    %710 = vmatprep.subr.mxu0 0.0
    %711 = vmatpush1.msra.mxu0 0.0
    %712 = vmatprep.subr.mxu0 0.0
    %713 = vmatpush1.msra.mxu0 0.0
    %714 = vmatprep.subr.mxu0 0.0
    %715 = vmatpush1.msra.mxu0 0.0
    %716 = vmatprep.subr.mxu0 0.0
    %717 = vmatpush1.msra.mxu0 0.0
    %718 = vmatprep.subr.mxu0 0.0
    %719 = vmatpush1.msra.mxu0 0.0
    %720 = vmatprep.subr.mxu0 0.0
    %721 = vmatpush1.msra.mxu0 0.0
    %722 = vmatprep.subr.mxu0 0.0
    %723 = vmatpush1.msra.mxu0 0.0
    %724 = vmatprep.subr.mxu0 0.0
    %725 = vmatpush1.msra.mxu0 0.0
    %726 = vmatprep.subr.mxu0 0.0
    %727 = vmatpush1.msra.mxu0 0.0
    %728 = vmatprep.subr.mxu0 0.0
    %729 = vmatpush1.msra.mxu0 0.0
    %730 = vmatprep.subr.mxu0 0.0
    %731 = vmatpush1.msra.mxu0 0.0
    %732 = vmatprep.subr.mxu0 0.0
    %733 = vmatpush1.msra.mxu0 0.0
    %734 = vmatprep.subr.mxu0 0.0
    %735 = vmatpush1.msra.mxu0 0.0
    %736 = vmatprep.subr.mxu0 0.0
    %737 = vmatpush1.msra.mxu0 0.0
    %738 = vmatprep.subr.mxu0 0.0
    %739 = vmatpush1.msra.mxu0 0.0
    %740 = vmatprep.subr.mxu0 0.0
    %741 = vmatpush1.msra.mxu0 0.0
    %742 = vmatprep.subr.mxu0 0.0
    %743 = vmatpush1.msra.mxu0 0.0
    %744 = vmatprep.subr.mxu0 0.0
    %745 = vmatpush1.msra.mxu0 0.0
    %746 = vmatprep.subr.mxu0 0.0
    %747 = vmatpush1.msra.mxu0 0.0
    %748 = vmatprep.subr.mxu0 0.0
    %749 = vmatpush1.msra.mxu0 0.0
    %750 = vmatprep.subr.mxu0 0.0
    %751 = vmatpush1.msra.mxu0 0.0
    %752 = vmatprep.subr.mxu0 0.0
    %753 = vmatpush1.msra.mxu0 0.0
    %754 = vmatprep.subr.mxu0 0.0
    %755 = vmatpush1.msra.mxu0 0.0
    %756 = vmatprep.subr.mxu0 0.0
    %757 = vmatpush1.msra.mxu0 0.0
    %758 = vmatprep.subr.mxu0 0.0
    %759 = vmatpush1.msra.mxu0 0.0
    %760 = vmatprep.subr.mxu0 0.0
    %761 = vmatpush1.msra.mxu0 0.0
    %762 = vmatprep.subr.mxu0 0.0
    %763 = vmatpush1.msra.mxu0 0.0
    %764 = vmatprep.subr.mxu0 0.0
    %765 = vmatpush1.msra.mxu0 0.0
    %766 = vmatprep.mubr.f32.mxu0 0.0
    %767 = vmatmul.mubr.f32.gmra.mrb[0].mxu0 %v700
    %v768 = vpop.f32.mrb[0].mxu0
    %v769 = vadd.f32 0.0, %v768
    %v770 = vpop.f32.mrb[0].mxu0
    %771 = vdwg.mxu0
    %v773 = vrot.slane %v769, 6
    %v775 = vadd.f32 %v172, %v773
    %v776 = vxor.u32 %v775, 2147483648
    %v777 = vmul.f32 %v776, 1.442695
    %v778 = vpow.pop %v777
    %v779 = vadd.f32 %v778, 1.0
    %v780 = vrcp.pop %v779
    %v781 = vmul.f32 1.0, %v780
    %v782 = vtanh.pop %v775
    %v784 = vrot.slane %v690, 6
    %v786 = vmul.f32 %v781, %v784
    %788 = vrot.lane.b32.xlu0 %v782, 64
    %v789 = vpop.permute.xlu0 %788
    %v791 = vmul.f32 %v781, %v789
    %793 = vrot.lane.b32.xlu0 %v791, 32
    %v794 = vpop.permute.xlu0 %793
    %v796 = vadd.f32 %v786, %v794
    %v797 = vtanh.pop %v796
    %799 = vrot.lane.b32.xlu0 %v797, 64
    %v800 = vpop.permute.xlu0 %799
    %v802 = vmul.f32 %v781, %v800
    %v804 = vrot.slane %v802, 2
    %805 = vrot.lane.b32.xlu0 %v804, 32
    %v806 = vpop.permute.xlu0 %805
    %v807 = vsel %vm93, %v806, 0
    %809 = vmatprep.subr.mxu0 0.0
    %810 = vmatpush1.msra.mxu0 %v61
    %811 = vmatprep.subr.mxu0 0.0
    %812 = vmatpush1.msra.mxu0 %v62
    %813 = vmatprep.subr.mxu0 0.0
    %814 = vmatpush1.msra.mxu0 %v63
    %815 = vmatprep.subr.mxu0 0.0
    %816 = vmatpush1.msra.mxu0 %v64
    %817 = vmatprep.subr.mxu0 0.0
    %818 = vmatpush1.msra.mxu0 0.0
    %819 = vmatprep.subr.mxu0 0.0
    %820 = vmatpush1.msra.mxu0 0.0
    %821 = vmatprep.subr.mxu0 0.0
    %822 = vmatpush1.msra.mxu0 0.0
    %823 = vmatprep.subr.mxu0 0.0
    %824 = vmatpush1.msra.mxu0 0.0
    %825 = vmatprep.subr.mxu0 0.0
    %826 = vmatpush1.msra.mxu0 0.0
    %827 = vmatprep.subr.mxu0 0.0
    %828 = vmatpush1.msra.mxu0 0.0
    %829 = vmatprep.subr.mxu0 0.0
    %830 = vmatpush1.msra.mxu0 0.0
    %831 = vmatprep.subr.mxu0 0.0
    %832 = vmatpush1.msra.mxu0 0.0
    %833 = vmatprep.subr.mxu0 0.0
    %834 = vmatpush1.msra.mxu0 0.0
    %835 = vmatprep.subr.mxu0 0.0
    %836 = vmatpush1.msra.mxu0 0.0
    %837 = vmatprep.subr.mxu0 0.0
    %838 = vmatpush1.msra.mxu0 0.0
    %839 = vmatprep.subr.mxu0 0.0
    %840 = vmatpush1.msra.mxu0 0.0
    %841 = vmatprep.subr.mxu0 0.0
    %842 = vmatpush1.msra.mxu0 0.0
    %843 = vmatprep.subr.mxu0 0.0
    %844 = vmatpush1.msra.mxu0 0.0
    %845 = vmatprep.subr.mxu0 0.0
    %846 = vmatpush1.msra.mxu0 0.0
    %847 = vmatprep.subr.mxu0 0.0
    %848 = vmatpush1.msra.mxu0 0.0
    %849 = vmatprep.subr.mxu0 0.0
    %850 = vmatpush1.msra.mxu0 0.0
    %851 = vmatprep.subr.mxu0 0.0
    %852 = vmatpush1.msra.mxu0 0.0
    %853 = vmatprep.subr.mxu0 0.0
    %854 = vmatpush1.msra.mxu0 0.0
    %855 = vmatprep.subr.mxu0 0.0
    %856 = vmatpush1.msra.mxu0 0.0
    %857 = vmatprep.subr.mxu0 0.0
    %858 = vmatpush1.msra.mxu0 0.0
    %859 = vmatprep.subr.mxu0 0.0
    %860 = vmatpush1.msra.mxu0 0.0
    %861 = vmatprep.subr.mxu0 0.0
    %862 = vmatpush1.msra.mxu0 0.0
    %863 = vmatprep.subr.mxu0 0.0
    %864 = vmatpush1.msra.mxu0 0.0
    %865 = vmatprep.subr.mxu0 0.0
    %866 = vmatpush1.msra.mxu0 0.0
    %867 = vmatprep.subr.mxu0 0.0
    %868 = vmatpush1.msra.mxu0 0.0
    %869 = vmatprep.subr.mxu0 0.0
    %870 = vmatpush1.msra.mxu0 0.0
    %871 = vmatprep.subr.mxu0 0.0
    %872 = vmatpush1.msra.mxu0 0.0
    %873 = vmatprep.mubr.f32.mxu0 0.0
    %874 = vmatmul.mubr.f32.gmra.mrb[0].mxu0 %v807
    %v875 = vpop.f32.mrb[0].mxu0
    %v876 = vadd.f32 0.0, %v875
    %v877 = vpop.f32.mrb[0].mxu0
    %878 = vdwg.mxu0
    %v880 = vrot.slane %v876, 4
    %v882 = vadd.f32 %v172, %v880
    %v883 = vxor.u32 %v882, 2147483648
    %v884 = vmul.f32 %v883, 1.442695
    %v885 = vpow.pop %v884
    %v886 = vadd.f32 %v885, 1.0
    %v887 = vrcp.pop %v886
    %v888 = vmul.f32 1.0, %v887
    %v889 = vtanh.pop %v882
    %v891 = vrot.slane %v796, 6
    %v893 = vmul.f32 %v888, %v891
    %895 = vrot.lane.b32.xlu0 %v889, 64
    %v896 = vpop.permute.xlu0 %895
    %v898 = vmul.f32 %v888, %v896
    %900 = vrot.lane.b32.xlu0 %v898, 32
    %v901 = vpop.permute.xlu0 %900
    %v903 = vadd.f32 %v893, %v901
    %v904 = vtanh.pop %v903
    %906 = vrot.lane.b32.xlu0 %v904, 64
    %v907 = vpop.permute.xlu0 %906
    %v909 = vmul.f32 %v888, %v907
    %v911 = vrot.slane %v909, 4
    %912 = vrot.lane.b32.xlu0 %v911, 32
    %v913 = vpop.permute.xlu0 %912
    %v914 = vsel %vm93, %v913, 0
    %916 = vmatprep.subr.mxu0 0.0
    %917 = vmatpush1.msra.mxu0 %v61
    %918 = vmatprep.subr.mxu0 0.0
    %919 = vmatpush1.msra.mxu0 %v62
    %920 = vmatprep.subr.mxu0 0.0
    %921 = vmatpush1.msra.mxu0 %v63
    %922 = vmatprep.subr.mxu0 0.0
    %923 = vmatpush1.msra.mxu0 %v64
    %924 = vmatprep.subr.mxu0 0.0
    %925 = vmatpush1.msra.mxu0 0.0
    %926 = vmatprep.subr.mxu0 0.0
    %927 = vmatpush1.msra.mxu0 0.0
    %928 = vmatprep.subr.mxu0 0.0
    %929 = vmatpush1.msra.mxu0 0.0
    %930 = vmatprep.subr.mxu0 0.0
    %931 = vmatpush1.msra.mxu0 0.0
    %932 = vmatprep.subr.mxu0 0.0
    %933 = vmatpush1.msra.mxu0 0.0
    %934 = vmatprep.subr.mxu0 0.0
    %935 = vmatpush1.msra.mxu0 0.0
    %936 = vmatprep.subr.mxu0 0.0
    %937 = vmatpush1.msra.mxu0 0.0
    %938 = vmatprep.subr.mxu0 0.0
    %939 = vmatpush1.msra.mxu0 0.0
    %940 = vmatprep.subr.mxu0 0.0
    %941 = vmatpush1.msra.mxu0 0.0
    %942 = vmatprep.subr.mxu0 0.0
    %943 = vmatpush1.msra.mxu0 0.0
    %944 = vmatprep.subr.mxu0 0.0
    %945 = vmatpush1.msra.mxu0 0.0
    %946 = vmatprep.subr.mxu0 0.0
    %947 = vmatpush1.msra.mxu0 0.0
    %948 = vmatprep.subr.mxu0 0.0
    %949 = vmatpush1.msra.mxu0 0.0
    %950 = vmatprep.subr.mxu0 0.0
    %951 = vmatpush1.msra.mxu0 0.0
    %952 = vmatprep.subr.mxu0 0.0
    %953 = vmatpush1.msra.mxu0 0.0
    %954 = vmatprep.subr.mxu0 0.0
    %955 = vmatpush1.msra.mxu0 0.0
    %956 = vmatprep.subr.mxu0 0.0
    %957 = vmatpush1.msra.mxu0 0.0
    %958 = vmatprep.subr.mxu0 0.0
    %959 = vmatpush1.msra.mxu0 0.0
    %960 = vmatprep.subr.mxu0 0.0
    %961 = vmatpush1.msra.mxu0 0.0
    %962 = vmatprep.subr.mxu0 0.0
    %963 = vmatpush1.msra.mxu0 0.0
    %964 = vmatprep.subr.mxu0 0.0
    %965 = vmatpush1.msra.mxu0 0.0
    %966 = vmatprep.subr.mxu0 0.0
    %967 = vmatpush1.msra.mxu0 0.0
    %968 = vmatprep.subr.mxu0 0.0
    %969 = vmatpush1.msra.mxu0 0.0
    %970 = vmatprep.subr.mxu0 0.0
    %971 = vmatpush1.msra.mxu0 0.0
    %972 = vmatprep.subr.mxu0 0.0
    %973 = vmatpush1.msra.mxu0 0.0
    %974 = vmatprep.subr.mxu0 0.0
    %975 = vmatpush1.msra.mxu0 0.0
    %976 = vmatprep.subr.mxu0 0.0
    %977 = vmatpush1.msra.mxu0 0.0
    %978 = vmatprep.subr.mxu0 0.0
    %979 = vmatpush1.msra.mxu0 0.0
    %980 = vmatprep.mubr.f32.mxu0 0.0
    %981 = vmatmul.mubr.f32.gmra.mrb[0].mxu0 %v914
    %v982 = vpop.f32.mrb[0].mxu0
    %v983 = vadd.f32 0.0, %v982
    %v984 = vpop.f32.mrb[0].mxu0
    %985 = vdwg.mxu0
    %v987 = vrot.slane %v983, 2
    %v989 = vadd.f32 %v172, %v987
    %v990 = vxor.u32 %v989, 2147483648
    %v991 = vmul.f32 %v990, 1.442695
    %v992 = vpow.pop %v991
    %v993 = vadd.f32 %v992, 1.0
    %v994 = vrcp.pop %v993
    %v995 = vmul.f32 1.0, %v994
    %v996 = vtanh.pop %v989
    %v998 = vrot.slane %v903, 6
    %v1000 = vmul.f32 %v995, %v998
    %1002 = vrot.lane.b32.xlu0 %v996, 64
    %v1003 = vpop.permute.xlu0 %1002
    %v1005 = vmul.f32 %v995, %v1003
    %1007 = vrot.lane.b32.xlu0 %v1005, 32
    %v1008 = vpop.permute.xlu0 %1007
    %v1010 = vadd.f32 %v1000, %v1008
    %v1011 = vtanh.pop %v1010
    %1013 = vrot.lane.b32.xlu0 %v1011, 64
    %v1014 = vpop.permute.xlu0 %1013
    %v1016 = vmul.f32 %v995, %v1014
    %v1017 = vlaneseq
    %v1018 = vshrl.u32 %v1017, 7
    %vm1019 = vcmp.eq.s32.totalorder %v1018, 1
    %v1021 = vrot.slane %v1016, 6
    %1022 = vrot.lane.b32.xlu0 %v1021, 32
    %v1023 = vpop.permute.xlu0 %1022
    %v1025 = vsel %vm1019, %v1023, 0.0
    %v1027 = vrot.slane %v1010, 6
    %1028 = vrot.lane.b32.xlu0 %v1027, 96
    %v1029 = vpop.permute.xlu0 %1028
    %v1031 = vsel %vm1019, %v1029, 0.0
    %v1032 = vld [vmem:[%s1] sm:$0xff]
    %v1033 = vld [vmem:[%s1 + $0x8] sm:$0xff]
    %v1034 = vld [vmem:[%s1 + $0x10] sm:$0xff]
    %v1035 = vld [vmem:[%s1 + $0x18] sm:$0xff]
    %v1036 = vld [vmem:[%s1 + $0x20] sm:$0xff]
    %v1037 = vld [vmem:[%s1 + $0x28] sm:$0xff]
    %v1038 = vld [vmem:[%s1 + $0x30] sm:$0xff]
    %v1039 = vld [vmem:[%s1 + $0x38] sm:$0xff]
    %v1040 = vld [vmem:[#allocation5] sm:$0xff]
    %v1041 = vld [vmem:[#allocation5 + $0x8] sm:$0xff]
    %v1042 = vld [vmem:[#allocation5 + $0x10] sm:$0xff]
    %v1043 = vld [vmem:[#allocation5 + $0x18] sm:$0xff]
    %v1044 = vld [vmem:[%s6] sm:$0x1]
    %v1046 = vlaneseq
    %v1047 = vshrl.u32 %v1046, 7
    %v1048 = vsub.s32 0, %v1047
    %v1049 = vrot.slane %v1044, %v1048
    %v1052 = vsel %vm93, %v1032, 0
    %v1055 = vsel %vm93, %v1033, 0
    %v1058 = vsel %vm93, %v1034, 0
    %v1061 = vsel %vm93, %v1035, 0
    %v1064 = vsel %vm93, %v1036, 0
    %v1067 = vsel %vm93, %v1037, 0
    %v1070 = vsel %vm93, %v1038, 0
    %v1073 = vsel %vm93, %v1039, 0
    %1075 = vmatprep.subr.mxu0 0.0
    %1076 = vmatpush1.msra.mxu0 %v1040
    %1077 = vmatprep.subr.mxu0 0.0
    %1078 = vmatpush1.msra.mxu0 %v1041
    %1079 = vmatprep.subr.mxu0 0.0
    %1080 = vmatpush1.msra.mxu0 %v1042
    %1081 = vmatprep.subr.mxu0 0.0
    %1082 = vmatpush1.msra.mxu0 %v1043
    %1083 = vmatprep.subr.mxu0 0.0
    %1084 = vmatpush1.msra.mxu0 0.0
    %1085 = vmatprep.subr.mxu0 0.0
    %1086 = vmatpush1.msra.mxu0 0.0
    %1087 = vmatprep.subr.mxu0 0.0
    %1088 = vmatpush1.msra.mxu0 0.0
    %1089 = vmatprep.subr.mxu0 0.0
    %1090 = vmatpush1.msra.mxu0 0.0
    %1091 = vmatprep.subr.mxu0 0.0
    %1092 = vmatpush1.msra.mxu0 0.0
    %1093 = vmatprep.subr.mxu0 0.0
    %1094 = vmatpush1.msra.mxu0 0.0
    %1095 = vmatprep.subr.mxu0 0.0
    %1096 = vmatpush1.msra.mxu0 0.0
    %1097 = vmatprep.subr.mxu0 0.0
    %1098 = vmatpush1.msra.mxu0 0.0
    %1099 = vmatprep.subr.mxu0 0.0
    %1100 = vmatpush1.msra.mxu0 0.0
    %1101 = vmatprep.subr.mxu0 0.0
    %1102 = vmatpush1.msra.mxu0 0.0
    %1103 = vmatprep.subr.mxu0 0.0
    %1104 = vmatpush1.msra.mxu0 0.0
    %1105 = vmatprep.subr.mxu0 0.0
    %1106 = vmatpush1.msra.mxu0 0.0
    %1107 = vmatprep.subr.mxu0 0.0
    %1108 = vmatpush1.msra.mxu0 0.0
    %1109 = vmatprep.subr.mxu0 0.0
    %1110 = vmatpush1.msra.mxu0 0.0
    %1111 = vmatprep.subr.mxu0 0.0
    %1112 = vmatpush1.msra.mxu0 0.0
    %1113 = vmatprep.subr.mxu0 0.0
    %1114 = vmatpush1.msra.mxu0 0.0
    %1115 = vmatprep.subr.mxu0 0.0
    %1116 = vmatpush1.msra.mxu0 0.0
    %1117 = vmatprep.subr.mxu0 0.0
    %1118 = vmatpush1.msra.mxu0 0.0
    %1119 = vmatprep.subr.mxu0 0.0
    %1120 = vmatpush1.msra.mxu0 0.0
    %1121 = vmatprep.subr.mxu0 0.0
    %1122 = vmatpush1.msra.mxu0 0.0
    %1123 = vmatprep.subr.mxu0 0.0
    %1124 = vmatpush1.msra.mxu0 0.0
    %1125 = vmatprep.subr.mxu0 0.0
    %1126 = vmatpush1.msra.mxu0 0.0
    %1127 = vmatprep.subr.mxu0 0.0
    %1128 = vmatpush1.msra.mxu0 0.0
    %1129 = vmatprep.subr.mxu0 0.0
    %1130 = vmatpush1.msra.mxu0 0.0
    %1131 = vmatprep.subr.mxu0 0.0
    %1132 = vmatpush1.msra.mxu0 0.0
    %1133 = vmatprep.subr.mxu0 0.0
    %1134 = vmatpush1.msra.mxu0 0.0
    %1135 = vmatprep.subr.mxu0 0.0
    %1136 = vmatpush1.msra.mxu0 0.0
    %1137 = vmatprep.subr.mxu0 0.0
    %1138 = vmatpush1.msra.mxu0 0.0
    %1139 = vmatprep.mubr.f32.mxu0 0.0
    %1140 = vmatmul.mubr.f32.gmra.mrb[0].mxu0 %v1052
    %v1141 = vpop.f32.mrb[0].mxu0
    %v1142 = vadd.f32 %v1049, %v1141
    %v1143 = vpop.f32.mrb[0].mxu0
    %1144 = vmatprep.mubr.f32.mxu0 0.0
    %1145 = vmatmul.mubr.f32.gmra.mrb[0].mxu0 %v1055
    %v1146 = vpop.f32.mrb[0].mxu0
    %v1147 = vadd.f32 %v1049, %v1146
    %v1148 = vpop.f32.mrb[0].mxu0
    %1149 = vmatprep.mubr.f32.mxu0 0.0
    %1150 = vmatmul.mubr.f32.gmra.mrb[0].mxu0 %v1058
    %v1151 = vpop.f32.mrb[0].mxu0
    %v1152 = vadd.f32 %v1049, %v1151
    %v1153 = vpop.f32.mrb[0].mxu0
    %1154 = vmatprep.mubr.f32.mxu0 0.0
    %1155 = vmatmul.mubr.f32.gmra.mrb[0].mxu0 %v1061
    %v1156 = vpop.f32.mrb[0].mxu0
    %v1157 = vadd.f32 %v1049, %v1156
    %v1158 = vpop.f32.mrb[0].mxu0
    %1159 = vmatprep.mubr.f32.mxu0 0.0
    %1160 = vmatmul.mubr.f32.gmra.mrb[0].mxu0 %v1064
    %v1161 = vpop.f32.mrb[0].mxu0
    %v1162 = vadd.f32 %v1049, %v1161
    %v1163 = vpop.f32.mrb[0].mxu0
    %1164 = vmatprep.mubr.f32.mxu0 0.0
    %1165 = vmatmul.mubr.f32.gmra.mrb[0].mxu0 %v1067
    %v1166 = vpop.f32.mrb[0].mxu0
    %v1167 = vadd.f32 %v1049, %v1166
    %v1168 = vpop.f32.mrb[0].mxu0
    %1169 = vmatprep.mubr.f32.mxu0 0.0
    %1170 = vmatmul.mubr.f32.gmra.mrb[0].mxu0 %v1070
    %v1171 = vpop.f32.mrb[0].mxu0
    %v1172 = vadd.f32 %v1049, %v1171
    %v1173 = vpop.f32.mrb[0].mxu0
    %1174 = vmatprep.mubr.f32.mxu0 0.0
    %1175 = vmatmul.mubr.f32.gmra.mrb[0].mxu0 %v1073
    %v1176 = vpop.f32.mrb[0].mxu0
    %v1177 = vadd.f32 %v1049, %v1176
    %v1178 = vpop.f32.mrb[0].mxu0
    %1179 = vdwg.mxu0
    %v1181 = vsel %vm93, %v1025, 0
    %1183 = vmatprep.subr.mxu0 %v66
    %1184 = vmatpush1.msra.mxu0 %v65
    %1185 = vmatprep.subr.mxu0 %v68
    %1186 = vmatpush1.msra.mxu0 %v67
    %1187 = vmatprep.subr.mxu0 %v70
    %1188 = vmatpush1.msra.mxu0 %v69
    %1189 = vmatprep.subr.mxu0 %v72
    %1190 = vmatpush1.msra.mxu0 %v71
    %1191 = vmatprep.subr.mxu0 0.0
    %1192 = vmatpush1.msra.mxu0 0.0
    %1193 = vmatprep.subr.mxu0 0.0
    %1194 = vmatpush1.msra.mxu0 0.0
    %1195 = vmatprep.subr.mxu0 0.0
    %1196 = vmatpush1.msra.mxu0 0.0
    %1197 = vmatprep.subr.mxu0 0.0
    %1198 = vmatpush1.msra.mxu0 0.0
    %1199 = vmatprep.subr.mxu0 0.0
    %1200 = vmatpush1.msra.mxu0 0.0
    %1201 = vmatprep.subr.mxu0 0.0
    %1202 = vmatpush1.msra.mxu0 0.0
    %1203 = vmatprep.subr.mxu0 0.0
    %1204 = vmatpush1.msra.mxu0 0.0
    %1205 = vmatprep.subr.mxu0 0.0
    %1206 = vmatpush1.msra.mxu0 0.0
    %1207 = vmatprep.subr.mxu0 0.0
    %1208 = vmatpush1.msra.mxu0 0.0
    %1209 = vmatprep.subr.mxu0 0.0
    %1210 = vmatpush1.msra.mxu0 0.0
    %1211 = vmatprep.subr.mxu0 0.0
    %1212 = vmatpush1.msra.mxu0 0.0
    %1213 = vmatprep.subr.mxu0 0.0
    %1214 = vmatpush1.msra.mxu0 0.0
    %1215 = vmatprep.subr.mxu0 0.0
    %1216 = vmatpush1.msra.mxu0 0.0
    %1217 = vmatprep.subr.mxu0 0.0
    %1218 = vmatpush1.msra.mxu0 0.0
    %1219 = vmatprep.subr.mxu0 0.0
    %1220 = vmatpush1.msra.mxu0 0.0
    %1221 = vmatprep.subr.mxu0 0.0
    %1222 = vmatpush1.msra.mxu0 0.0
    %1223 = vmatprep.subr.mxu0 0.0
    %1224 = vmatpush1.msra.mxu0 0.0
    %1225 = vmatprep.subr.mxu0 0.0
    %1226 = vmatpush1.msra.mxu0 0.0
    %1227 = vmatprep.subr.mxu0 0.0
    %1228 = vmatpush1.msra.mxu0 0.0
    %1229 = vmatprep.subr.mxu0 0.0
    %1230 = vmatpush1.msra.mxu0 0.0
    %1231 = vmatprep.subr.mxu0 0.0
    %1232 = vmatpush1.msra.mxu0 0.0
    %1233 = vmatprep.subr.mxu0 0.0
    %1234 = vmatpush1.msra.mxu0 0.0
    %1235 = vmatprep.subr.mxu0 0.0
    %1236 = vmatpush1.msra.mxu0 0.0
    %1237 = vmatprep.subr.mxu0 0.0
    %1238 = vmatpush1.msra.mxu0 0.0
    %1239 = vmatprep.subr.mxu0 0.0
    %1240 = vmatpush1.msra.mxu0 0.0
    %1241 = vmatprep.subr.mxu0 0.0
    %1242 = vmatpush1.msra.mxu0 0.0
    %1243 = vmatprep.subr.mxu0 0.0
    %1244 = vmatpush1.msra.mxu0 0.0
    %1245 = vmatprep.subr.mxu0 0.0
    %1246 = vmatpush1.msra.mxu0 0.0
    %1247 = vmatprep.mubr.f32.mxu0 0.0
    %1248 = vmatmul.mubr.f32.gmra.mrb[0].mxu0 %v1181
    %v1249 = vpop.f32.mrb[0].mxu0
    %v1250 = vadd.f32 0.0, %v1249
    %v1251 = vpop.f32.mrb[0].mxu0
    %1252 = vdwg.mxu0
    %v1253 = vlaneseq
    %v1254 = vand.u32 %v1253, 127
    %vm1255 = vcmp.eq.s32.totalorder %v1254, 0
    %v1256 = vsel %vm1255, 1, 0
    %v1257 = vcvt.s32.f32 %v1256
    %vm1258 = vcmask 523264
    %v1260 = vsel %vm1258, %v1257, 0
    %1262 = vmatprep.subr.mxu0 0.0
    %1263 = vmatpush1.msra.mxu0 %v1142
    %1264 = vmatprep.subr.mxu0 0.0
    %1265 = vmatpush1.msra.mxu0 %v1147
    %1266 = vmatprep.subr.mxu0 0.0
    %1267 = vmatpush1.msra.mxu0 %v1152
    %1268 = vmatprep.subr.mxu0 0.0
    %1269 = vmatpush1.msra.mxu0 %v1157
    %1270 = vmatprep.subr.mxu0 0.0
    %1271 = vmatpush1.msra.mxu0 %v1162
    %1272 = vmatprep.subr.mxu0 0.0
    %1273 = vmatpush1.msra.mxu0 %v1167
    %1274 = vmatprep.subr.mxu0 0.0
    %1275 = vmatpush1.msra.mxu0 %v1172
    %1276 = vmatprep.subr.mxu0 0.0
    %1277 = vmatpush1.msra.mxu0 %v1177
    %1278 = vmatprep.subr.mxu0 0.0
    %1279 = vmatpush1.msra.mxu0 0.0
    %1280 = vmatprep.subr.mxu0 0.0
    %1281 = vmatpush1.msra.mxu0 0.0
    %1282 = vmatprep.subr.mxu0 0.0
    %1283 = vmatpush1.msra.mxu0 0.0
    %1284 = vmatprep.subr.mxu0 0.0
    %1285 = vmatpush1.msra.mxu0 0.0
    %1286 = vmatprep.subr.mxu0 0.0
    %1287 = vmatpush1.msra.mxu0 0.0
    %1288 = vmatprep.subr.mxu0 0.0
    %1289 = vmatpush1.msra.mxu0 0.0
    %1290 = vmatprep.subr.mxu0 0.0
    %1291 = vmatpush1.msra.mxu0 0.0
    %1292 = vmatprep.subr.mxu0 0.0
    %1293 = vmatpush1.msra.mxu0 0.0
    %1294 = vmatprep.subr.mxu0 0.0
    %1295 = vmatpush1.msra.mxu0 0.0
    %1296 = vmatprep.subr.mxu0 0.0
    %1297 = vmatpush1.msra.mxu0 0.0
    %1298 = vmatprep.subr.mxu0 0.0
    %1299 = vmatpush1.msra.mxu0 0.0
    %1300 = vmatprep.subr.mxu0 0.0
    %1301 = vmatpush1.msra.mxu0 0.0
    %1302 = vmatprep.subr.mxu0 0.0
    %1303 = vmatpush1.msra.mxu0 0.0
    %1304 = vmatprep.subr.mxu0 0.0
    %1305 = vmatpush1.msra.mxu0 0.0
    %1306 = vmatprep.subr.mxu0 0.0
    %1307 = vmatpush1.msra.mxu0 0.0
    %1308 = vmatprep.subr.mxu0 0.0
    %1309 = vmatpush1.msra.mxu0 0.0
    %1310 = vmatprep.subr.mxu0 0.0
    %1311 = vmatpush1.msra.mxu0 0.0
    %1312 = vmatprep.subr.mxu0 0.0
    %1313 = vmatpush1.msra.mxu0 0.0
    %1314 = vmatprep.subr.mxu0 0.0
    %1315 = vmatpush1.msra.mxu0 0.0
    %1316 = vmatprep.subr.mxu0 0.0
    %1317 = vmatpush1.msra.mxu0 0.0
    %1318 = vmatprep.subr.mxu0 0.0
    %1319 = vmatpush1.msra.mxu0 0.0
    %1320 = vmatprep.subr.mxu0 0.0
    %1321 = vmatpush1.msra.mxu0 0.0
    %1322 = vmatprep.subr.mxu0 0.0
    %1323 = vmatpush1.msra.mxu0 0.0
    %1324 = vmatprep.subr.mxu0 0.0
    %1325 = vmatpush1.msra.mxu0 0.0
    %1326 = vmatprep.mubr.f32.mxu0 0.0
    %1327 = vmatmul.mubr.f32.gmra.mrb[0].mxu0 %v1260
    %v1328 = vpop.f32.mrb[0].mxu0
    %v1329 = vadd.f32 %v1250, %v1328
    %v1330 = vpop.f32.mrb[0].mxu0
    %1331 = vdwg.mxu0
    %v1332 = vxor.u32 %v1329, 2147483648
    %v1333 = vmul.f32 %v1332, 1.442695
    %v1334 = vpow.pop %v1333
    %v1335 = vadd.f32 %v1334, 1.0
    %v1336 = vrcp.pop %v1335
    %v1337 = vmul.f32 1.0, %v1336
    %v1338 = vtanh.pop %v1329
    %1340 = vrot.lane.b32.xlu0 %v1031, 32
    %v1341 = vpop.permute.xlu0 %1340
    %v1343 = vmul.f32 %v1337, %v1341
    %1345 = vrot.lane.b32.xlu0 %v1338, 64
    %v1346 = vpop.permute.xlu0 %1345
    %v1348 = vmul.f32 %v1337, %v1346
    %1350 = vrot.lane.b32.xlu0 %v1348, 32
    %v1351 = vpop.permute.xlu0 %1350
    %v1353 = vadd.f32 %v1343, %v1351
    %v1354 = vtanh.pop %v1353
    %1356 = vrot.lane.b32.xlu0 %v1354, 64
    %v1357 = vpop.permute.xlu0 %1356
    %v1359 = vmul.f32 %v1337, %v1357
    %1361 = vrot.lane.b32.xlu0 %v1359, 32
    %v1362 = vpop.permute.xlu0 %1361
    %v1363 = vsel %vm93, %v1362, 0
    %1365 = vmatprep.subr.mxu0 %v66
    %1366 = vmatpush1.msra.mxu0 %v65
    %1367 = vmatprep.subr.mxu0 %v68
    %1368 = vmatpush1.msra.mxu0 %v67
    %1369 = vmatprep.subr.mxu0 %v70
    %1370 = vmatpush1.msra.mxu0 %v69
    %1371 = vmatprep.subr.mxu0 %v72
    %1372 = vmatpush1.msra.mxu0 %v71
    %1373 = vmatprep.subr.mxu0 0.0
    %1374 = vmatpush1.msra.mxu0 0.0
    %1375 = vmatprep.subr.mxu0 0.0
    %1376 = vmatpush1.msra.mxu0 0.0
    %1377 = vmatprep.subr.mxu0 0.0
    %1378 = vmatpush1.msra.mxu0 0.0
    %1379 = vmatprep.subr.mxu0 0.0
    %1380 = vmatpush1.msra.mxu0 0.0
    %1381 = vmatprep.subr.mxu0 0.0
    %1382 = vmatpush1.msra.mxu0 0.0
    %1383 = vmatprep.subr.mxu0 0.0
    %1384 = vmatpush1.msra.mxu0 0.0
    %1385 = vmatprep.subr.mxu0 0.0
    %1386 = vmatpush1.msra.mxu0 0.0
    %1387 = vmatprep.subr.mxu0 0.0
    %1388 = vmatpush1.msra.mxu0 0.0
    %1389 = vmatprep.subr.mxu0 0.0
    %1390 = vmatpush1.msra.mxu0 0.0
    %1391 = vmatprep.subr.mxu0 0.0
    %1392 = vmatpush1.msra.mxu0 0.0
    %1393 = vmatprep.subr.mxu0 0.0
    %1394 = vmatpush1.msra.mxu0 0.0
    %1395 = vmatprep.subr.mxu0 0.0
    %1396 = vmatpush1.msra.mxu0 0.0
    %1397 = vmatprep.subr.mxu0 0.0
    %1398 = vmatpush1.msra.mxu0 0.0
    %1399 = vmatprep.subr.mxu0 0.0
    %1400 = vmatpush1.msra.mxu0 0.0
    %1401 = vmatprep.subr.mxu0 0.0
    %1402 = vmatpush1.msra.mxu0 0.0
    %1403 = vmatprep.subr.mxu0 0.0
    %1404 = vmatpush1.msra.mxu0 0.0
    %1405 = vmatprep.subr.mxu0 0.0
    %1406 = vmatpush1.msra.mxu0 0.0
    %1407 = vmatprep.subr.mxu0 0.0
    %1408 = vmatpush1.msra.mxu0 0.0
    %1409 = vmatprep.subr.mxu0 0.0
    %1410 = vmatpush1.msra.mxu0 0.0
    %1411 = vmatprep.subr.mxu0 0.0
    %1412 = vmatpush1.msra.mxu0 0.0
    %1413 = vmatprep.subr.mxu0 0.0
    %1414 = vmatpush1.msra.mxu0 0.0
    %1415 = vmatprep.subr.mxu0 0.0
    %1416 = vmatpush1.msra.mxu0 0.0
    %1417 = vmatprep.subr.mxu0 0.0
    %1418 = vmatpush1.msra.mxu0 0.0
    %1419 = vmatprep.subr.mxu0 0.0
    %1420 = vmatpush1.msra.mxu0 0.0
    %1421 = vmatprep.subr.mxu0 0.0
    %1422 = vmatpush1.msra.mxu0 0.0
    %1423 = vmatprep.subr.mxu0 0.0
    %1424 = vmatpush1.msra.mxu0 0.0
    %1425 = vmatprep.subr.mxu0 0.0
    %1426 = vmatpush1.msra.mxu0 0.0
    %1427 = vmatprep.subr.mxu0 0.0
    %1428 = vmatpush1.msra.mxu0 0.0
    %1429 = vmatprep.mubr.f32.mxu0 0.0
    %1430 = vmatmul.mubr.f32.gmra.mrb[0].mxu0 %v1363
    %v1431 = vpop.f32.mrb[0].mxu0
    %v1432 = vadd.f32 0.0, %v1431
    %v1433 = vpop.f32.mrb[0].mxu0
    %v1434 = vadd.f32 0.0, %v1433
    %1435 = vdwg.mxu0
    %v1436 = vadd.f32 %v1434, %v78
    %v1439 = vunpack.c.l.s4 1966171168
    %v1440 = vunpack.c.0.s8 %v1439
    %v1441 = vlaneseq
    %v1442 = vshrl.u32 %v1441, 7
    %v1443 = vsub.s32 %v1440, %v1442
    %v1444 = vrot.slane %v1436, %v1443
    %v1445 = vcombine.high %v1444, %v1444
    %v1447 = vunpack.c.l.s4 1966171168
    %v1448 = vunpack.c.0.s8 %v1447
    %v1449 = vlaneseq
    %v1450 = vshrl.u32 %v1449, 7
    %v1451 = vsub.s32 %v1448, %v1450
    %v1452 = vrot.slane %v1444, %v1451
    %v1454 = vunpack.c.l.s4 1966171168
    %v1455 = vunpack.c.0.s8 %v1454
    %v1456 = vlaneseq
    %v1457 = vshrl.u32 %v1456, 7
    %v1458 = vsub.s32 %v1455, %v1457
    %v1459 = vrot.slane %v1445, %v1458
    %vm1462 = vcmask 253952
    %1463 = vst.msk [vmem:[#allocation7] sm:$0x1] %vm1462, %v1452
    %1464 = vst.msk [vmem:[#allocation7 + $0x8] sm:$0x1] %vm1462, %v1459
    %vm1465 = vcmask 254976
    %v1466 = vsel %vm1465, %v1436, -inf
    %1467 = vmax.index.xlane.f32.xlu0 %v1466
    %v1468 = vpop.xlane.xlu0 %1467
    %vm1469 = vcmp.eq.s32.totalorder %v1254, %v1468
    %v1470 = vsel %vm1469, 1, 0
    %v1471 = vcvt.s32.f32 %v1470
    %v1473 = vsel %vm1258, %v1471, 0
    %1475 = vmatprep.subr.mxu0 0.0
    %1476 = vmatpush1.msra.mxu0 %v1142
    %1477 = vmatprep.subr.mxu0 0.0
    %1478 = vmatpush1.msra.mxu0 %v1147
    %1479 = vmatprep.subr.mxu0 0.0
    %1480 = vmatpush1.msra.mxu0 %v1152
    %1481 = vmatprep.subr.mxu0 0.0
    %1482 = vmatpush1.msra.mxu0 %v1157
    %1483 = vmatprep.subr.mxu0 0.0
    %1484 = vmatpush1.msra.mxu0 %v1162
    %1485 = vmatprep.subr.mxu0 0.0
    %1486 = vmatpush1.msra.mxu0 %v1167
    %1487 = vmatprep.subr.mxu0 0.0
    %1488 = vmatpush1.msra.mxu0 %v1172
    %1489 = vmatprep.subr.mxu0 0.0
    %1490 = vmatpush1.msra.mxu0 %v1177
    %1491 = vmatprep.subr.mxu0 0.0
    %1492 = vmatpush1.msra.mxu0 0.0
    %1493 = vmatprep.subr.mxu0 0.0
    %1494 = vmatpush1.msra.mxu0 0.0
    %1495 = vmatprep.subr.mxu0 0.0
    %1496 = vmatpush1.msra.mxu0 0.0
    %1497 = vmatprep.subr.mxu0 0.0
    %1498 = vmatpush1.msra.mxu0 0.0
    %1499 = vmatprep.subr.mxu0 0.0
    %1500 = vmatpush1.msra.mxu0 0.0
    %1501 = vmatprep.subr.mxu0 0.0
    %1502 = vmatpush1.msra.mxu0 0.0
    %1503 = vmatprep.subr.mxu0 0.0
    %1504 = vmatpush1.msra.mxu0 0.0
    %1505 = vmatprep.subr.mxu0 0.0
    %1506 = vmatpush1.msra.mxu0 0.0
    %1507 = vmatprep.subr.mxu0 0.0
    %1508 = vmatpush1.msra.mxu0 0.0
    %1509 = vmatprep.subr.mxu0 0.0
    %1510 = vmatpush1.msra.mxu0 0.0
    %1511 = vmatprep.subr.mxu0 0.0
    %1512 = vmatpush1.msra.mxu0 0.0
    %1513 = vmatprep.subr.mxu0 0.0
    %1514 = vmatpush1.msra.mxu0 0.0
    %1515 = vmatprep.subr.mxu0 0.0
    %1516 = vmatpush1.msra.mxu0 0.0
    %1517 = vmatprep.subr.mxu0 0.0
    %1518 = vmatpush1.msra.mxu0 0.0
    %1519 = vmatprep.subr.mxu0 0.0
    %1520 = vmatpush1.msra.mxu0 0.0
    %1521 = vmatprep.subr.mxu0 0.0
    %1522 = vmatpush1.msra.mxu0 0.0
    %1523 = vmatprep.subr.mxu0 0.0
    %1524 = vmatpush1.msra.mxu0 0.0
    %1525 = vmatprep.subr.mxu0 0.0
    %1526 = vmatpush1.msra.mxu0 0.0
    %1527 = vmatprep.subr.mxu0 0.0
    %1528 = vmatpush1.msra.mxu0 0.0
    %1529 = vmatprep.subr.mxu0 0.0
    %1530 = vmatpush1.msra.mxu0 0.0
    %1531 = vmatprep.subr.mxu0 0.0
    %1532 = vmatpush1.msra.mxu0 0.0
    %1533 = vmatprep.subr.mxu0 0.0
    %1534 = vmatpush1.msra.mxu0 0.0
    %1535 = vmatprep.subr.mxu0 0.0
    %1536 = vmatpush1.msra.mxu0 0.0
    %1537 = vmatprep.subr.mxu0 0.0
    %1538 = vmatpush1.msra.mxu0 0.0
    %1539 = vmatprep.mubr.f32.mxu0 0.0
    %1540 = vmatmul.mubr.f32.gmra.mrb[0].mxu0 %v1473
    %v1541 = vpop.f32.mrb[0].mxu0
    %v1542 = vadd.f32 %v1432, %v1541
    %v1543 = vpop.f32.mrb[0].mxu0
    %1544 = vdwg.mxu0
    %v1545 = vxor.u32 %v1542, 2147483648
    %v1546 = vmul.f32 %v1545, 1.442695
    %v1547 = vpow.pop %v1546
    %v1548 = vadd.f32 %v1547, 1.0
    %v1549 = vrcp.pop %v1548
    %v1550 = vmul.f32 1.0, %v1549
    %v1551 = vtanh.pop %v1542
    %v1552 = vmul.f32 %v1550, %v1353
    %1554 = vrot.lane.b32.xlu0 %v1551, 64
    %v1555 = vpop.permute.xlu0 %1554
    %v1557 = vmul.f32 %v1550, %v1555
    %1559 = vrot.lane.b32.xlu0 %v1557, 32
    %v1560 = vpop.permute.xlu0 %1559
    %v1562 = vadd.f32 %v1552, %v1560
    %v1563 = vtanh.pop %v1562
    %1565 = vrot.lane.b32.xlu0 %v1563, 64
    %v1566 = vpop.permute.xlu0 %1565
    %v1568 = vmul.f32 %v1550, %v1566
    %1570 = vrot.lane.b32.xlu0 %v1568, 32
    %v1571 = vpop.permute.xlu0 %1570
    %v1572 = vsel %vm93, %v1571, 0
    %1574 = vmatprep.subr.mxu0 %v66
    %1575 = vmatpush1.msra.mxu0 %v65
    %1576 = vmatprep.subr.mxu0 %v68
    %1577 = vmatpush1.msra.mxu0 %v67
    %1578 = vmatprep.subr.mxu0 %v70
    %1579 = vmatpush1.msra.mxu0 %v69
    %1580 = vmatprep.subr.mxu0 %v72
    %1581 = vmatpush1.msra.mxu0 %v71
    %1582 = vmatprep.subr.mxu0 0.0
    %1583 = vmatpush1.msra.mxu0 0.0
    %1584 = vmatprep.subr.mxu0 0.0
    %1585 = vmatpush1.msra.mxu0 0.0
    %1586 = vmatprep.subr.mxu0 0.0
    %1587 = vmatpush1.msra.mxu0 0.0
    %1588 = vmatprep.subr.mxu0 0.0
    %1589 = vmatpush1.msra.mxu0 0.0
    %1590 = vmatprep.subr.mxu0 0.0
    %1591 = vmatpush1.msra.mxu0 0.0
    %1592 = vmatprep.subr.mxu0 0.0
    %1593 = vmatpush1.msra.mxu0 0.0
    %1594 = vmatprep.subr.mxu0 0.0
    %1595 = vmatpush1.msra.mxu0 0.0
    %1596 = vmatprep.subr.mxu0 0.0
    %1597 = vmatpush1.msra.mxu0 0.0
    %1598 = vmatprep.subr.mxu0 0.0
    %1599 = vmatpush1.msra.mxu0 0.0
    %1600 = vmatprep.subr.mxu0 0.0
    %1601 = vmatpush1.msra.mxu0 0.0
    %1602 = vmatprep.subr.mxu0 0.0
    %1603 = vmatpush1.msra.mxu0 0.0
    %1604 = vmatprep.subr.mxu0 0.0
    %1605 = vmatpush1.msra.mxu0 0.0
    %1606 = vmatprep.subr.mxu0 0.0
    %1607 = vmatpush1.msra.mxu0 0.0
    %1608 = vmatprep.subr.mxu0 0.0
    %1609 = vmatpush1.msra.mxu0 0.0
    %1610 = vmatprep.subr.mxu0 0.0
    %1611 = vmatpush1.msra.mxu0 0.0
    %1612 = vmatprep.subr.mxu0 0.0
    %1613 = vmatpush1.msra.mxu0 0.0
    %1614 = vmatprep.subr.mxu0 0.0
    %1615 = vmatpush1.msra.mxu0 0.0
    %1616 = vmatprep.subr.mxu0 0.0
    %1617 = vmatpush1.msra.mxu0 0.0
    %1618 = vmatprep.subr.mxu0 0.0
    %1619 = vmatpush1.msra.mxu0 0.0
    %1620 = vmatprep.subr.mxu0 0.0
    %1621 = vmatpush1.msra.mxu0 0.0
    %1622 = vmatprep.subr.mxu0 0.0
    %1623 = vmatpush1.msra.mxu0 0.0
    %1624 = vmatprep.subr.mxu0 0.0
    %1625 = vmatpush1.msra.mxu0 0.0
    %1626 = vmatprep.subr.mxu0 0.0
    %1627 = vmatpush1.msra.mxu0 0.0
    %1628 = vmatprep.subr.mxu0 0.0
    %1629 = vmatpush1.msra.mxu0 0.0
    %1630 = vmatprep.subr.mxu0 0.0
    %1631 = vmatpush1.msra.mxu0 0.0
    %1632 = vmatprep.subr.mxu0 0.0
    %1633 = vmatpush1.msra.mxu0 0.0
    %1634 = vmatprep.subr.mxu0 0.0
    %1635 = vmatpush1.msra.mxu0 0.0
    %1636 = vmatprep.subr.mxu0 0.0
    %1637 = vmatpush1.msra.mxu0 0.0
    %1638 = vmatprep.mubr.f32.mxu0 0.0
    %1639 = vmatmul.mubr.f32.gmra.mrb[0].mxu0 %v1572
    %v1640 = vpop.f32.mrb[0].mxu0
    %v1641 = vadd.f32 0.0, %v1640
    %v1642 = vpop.f32.mrb[0].mxu0
    %v1643 = vadd.f32 0.0, %v1642
    %1644 = vdwg.mxu0
    %v1645 = vadd.f32 %v1643, %v78
    %v1648 = vunpack.c.l.s4 1966171168
    %v1649 = vunpack.c.0.s8 %v1648
    %v1650 = vlaneseq
    %v1651 = vshrl.u32 %v1650, 7
    %v1652 = vsub.s32 %v1649, %v1651
    %v1653 = vrot.slane %v1645, %v1652
    %v1654 = vcombine.high %v1653, %v1653
    %v1656 = vunpack.c.l.s4 1966171168
    %v1657 = vunpack.c.0.s8 %v1656
    %v1658 = vlaneseq
    %v1659 = vshrl.u32 %v1658, 7
    %v1660 = vsub.s32 %v1657, %v1659
    %v1661 = vrot.slane %v1653, %v1660
    %v1663 = vunpack.c.l.s4 1966171168
    %v1664 = vunpack.c.0.s8 %v1663
    %v1665 = vlaneseq
    %v1666 = vshrl.u32 %v1665, 7
    %v1667 = vsub.s32 %v1664, %v1666
    %v1668 = vrot.slane %v1654, %v1667
    %1671 = vst.msk [vmem:[#allocation7 + $0x1] sm:$0x1] %vm1462, %v1661
    %1672 = vst.msk [vmem:[#allocation7 + $0x9] sm:$0x1] %vm1462, %v1668
    %v1673 = vsel %vm1465, %v1645, -inf
    %1674 = vmax.index.xlane.f32.xlu0 %v1673
    %v1675 = vpop.xlane.xlu0 %1674
    %vm1676 = vcmp.eq.s32.totalorder %v1254, %v1675
    %v1677 = vsel %vm1676, 1, 0
    %v1678 = vcvt.s32.f32 %v1677
    %v1680 = vsel %vm1258, %v1678, 0
    %1682 = vmatprep.subr.mxu0 0.0
    %1683 = vmatpush1.msra.mxu0 %v1142
    %1684 = vmatprep.subr.mxu0 0.0
    %1685 = vmatpush1.msra.mxu0 %v1147
    %1686 = vmatprep.subr.mxu0 0.0
    %1687 = vmatpush1.msra.mxu0 %v1152
    %1688 = vmatprep.subr.mxu0 0.0
    %1689 = vmatpush1.msra.mxu0 %v1157
    %1690 = vmatprep.subr.mxu0 0.0
    %1691 = vmatpush1.msra.mxu0 %v1162
    %1692 = vmatprep.subr.mxu0 0.0
    %1693 = vmatpush1.msra.mxu0 %v1167
    %1694 = vmatprep.subr.mxu0 0.0
    %1695 = vmatpush1.msra.mxu0 %v1172
    %1696 = vmatprep.subr.mxu0 0.0
    %1697 = vmatpush1.msra.mxu0 %v1177
    %1698 = vmatprep.subr.mxu0 0.0
    %1699 = vmatpush1.msra.mxu0 0.0
    %1700 = vmatprep.subr.mxu0 0.0
    %1701 = vmatpush1.msra.mxu0 0.0
    %1702 = vmatprep.subr.mxu0 0.0
    %1703 = vmatpush1.msra.mxu0 0.0
    %1704 = vmatprep.subr.mxu0 0.0
    %1705 = vmatpush1.msra.mxu0 0.0
    %1706 = vmatprep.subr.mxu0 0.0
    %1707 = vmatpush1.msra.mxu0 0.0
    %1708 = vmatprep.subr.mxu0 0.0
    %1709 = vmatpush1.msra.mxu0 0.0
    %1710 = vmatprep.subr.mxu0 0.0
    %1711 = vmatpush1.msra.mxu0 0.0
    %1712 = vmatprep.subr.mxu0 0.0
    %1713 = vmatpush1.msra.mxu0 0.0
    %1714 = vmatprep.subr.mxu0 0.0
    %1715 = vmatpush1.msra.mxu0 0.0
    %1716 = vmatprep.subr.mxu0 0.0
    %1717 = vmatpush1.msra.mxu0 0.0
    %1718 = vmatprep.subr.mxu0 0.0
    %1719 = vmatpush1.msra.mxu0 0.0
    %1720 = vmatprep.subr.mxu0 0.0
    %1721 = vmatpush1.msra.mxu0 0.0
    %1722 = vmatprep.subr.mxu0 0.0
    %1723 = vmatpush1.msra.mxu0 0.0
    %1724 = vmatprep.subr.mxu0 0.0
    %1725 = vmatpush1.msra.mxu0 0.0
    %1726 = vmatprep.subr.mxu0 0.0
    %1727 = vmatpush1.msra.mxu0 0.0
    %1728 = vmatprep.subr.mxu0 0.0
    %1729 = vmatpush1.msra.mxu0 0.0
    %1730 = vmatprep.subr.mxu0 0.0
    %1731 = vmatpush1.msra.mxu0 0.0
    %1732 = vmatprep.subr.mxu0 0.0
    %1733 = vmatpush1.msra.mxu0 0.0
    %1734 = vmatprep.subr.mxu0 0.0
    %1735 = vmatpush1.msra.mxu0 0.0
    %1736 = vmatprep.subr.mxu0 0.0
    %1737 = vmatpush1.msra.mxu0 0.0
    %1738 = vmatprep.subr.mxu0 0.0
    %1739 = vmatpush1.msra.mxu0 0.0
    %1740 = vmatprep.subr.mxu0 0.0
    %1741 = vmatpush1.msra.mxu0 0.0
    %1742 = vmatprep.subr.mxu0 0.0
    %1743 = vmatpush1.msra.mxu0 0.0
    %1744 = vmatprep.subr.mxu0 0.0
    %1745 = vmatpush1.msra.mxu0 0.0
    %1746 = vmatprep.mubr.f32.mxu0 0.0
    %1747 = vmatmul.mubr.f32.gmra.mrb[0].mxu0 %v1680
    %v1748 = vpop.f32.mrb[0].mxu0
    %v1749 = vadd.f32 %v1641, %v1748
    %v1750 = vpop.f32.mrb[0].mxu0
    %1751 = vdwg.mxu0
    %v1752 = vxor.u32 %v1749, 2147483648
    %v1753 = vmul.f32 %v1752, 1.442695
    %v1754 = vpow.pop %v1753
    %v1755 = vadd.f32 %v1754, 1.0
    %v1756 = vrcp.pop %v1755
    %v1757 = vmul.f32 1.0, %v1756
    %v1758 = vtanh.pop %v1749
    %v1759 = vmul.f32 %v1757, %v1562
    %1761 = vrot.lane.b32.xlu0 %v1758, 64
    %v1762 = vpop.permute.xlu0 %1761
    %v1764 = vmul.f32 %v1757, %v1762
    %1766 = vrot.lane.b32.xlu0 %v1764, 32
    %v1767 = vpop.permute.xlu0 %1766
    %v1769 = vadd.f32 %v1759, %v1767
    %v1770 = vtanh.pop %v1769
    %1772 = vrot.lane.b32.xlu0 %v1770, 64
    %v1773 = vpop.permute.xlu0 %1772
    %v1775 = vmul.f32 %v1757, %v1773
    %1777 = vrot.lane.b32.xlu0 %v1775, 32
    %v1778 = vpop.permute.xlu0 %1777
    %v1779 = vsel %vm93, %v1778, 0
    %1781 = vmatprep.subr.mxu0 %v66
    %1782 = vmatpush1.msra.mxu0 %v65
    %1783 = vmatprep.subr.mxu0 %v68
    %1784 = vmatpush1.msra.mxu0 %v67
    %1785 = vmatprep.subr.mxu0 %v70
    %1786 = vmatpush1.msra.mxu0 %v69
    %1787 = vmatprep.subr.mxu0 %v72
    %1788 = vmatpush1.msra.mxu0 %v71
    %1789 = vmatprep.subr.mxu0 0.0
    %1790 = vmatpush1.msra.mxu0 0.0
    %1791 = vmatprep.subr.mxu0 0.0
    %1792 = vmatpush1.msra.mxu0 0.0
    %1793 = vmatprep.subr.mxu0 0.0
    %1794 = vmatpush1.msra.mxu0 0.0
    %1795 = vmatprep.subr.mxu0 0.0
    %1796 = vmatpush1.msra.mxu0 0.0
    %1797 = vmatprep.subr.mxu0 0.0
    %1798 = vmatpush1.msra.mxu0 0.0
    %1799 = vmatprep.subr.mxu0 0.0
    %1800 = vmatpush1.msra.mxu0 0.0
    %1801 = vmatprep.subr.mxu0 0.0
    %1802 = vmatpush1.msra.mxu0 0.0
    %1803 = vmatprep.subr.mxu0 0.0
    %1804 = vmatpush1.msra.mxu0 0.0
    %1805 = vmatprep.subr.mxu0 0.0
    %1806 = vmatpush1.msra.mxu0 0.0
    %1807 = vmatprep.subr.mxu0 0.0
    %1808 = vmatpush1.msra.mxu0 0.0
    %1809 = vmatprep.subr.mxu0 0.0
    %1810 = vmatpush1.msra.mxu0 0.0
    %1811 = vmatprep.subr.mxu0 0.0
    %1812 = vmatpush1.msra.mxu0 0.0
    %1813 = vmatprep.subr.mxu0 0.0
    %1814 = vmatpush1.msra.mxu0 0.0
    %1815 = vmatprep.subr.mxu0 0.0
    %1816 = vmatpush1.msra.mxu0 0.0
    %1817 = vmatprep.subr.mxu0 0.0
    %1818 = vmatpush1.msra.mxu0 0.0
    %1819 = vmatprep.subr.mxu0 0.0
    %1820 = vmatpush1.msra.mxu0 0.0
    %1821 = vmatprep.subr.mxu0 0.0
    %1822 = vmatpush1.msra.mxu0 0.0
    %1823 = vmatprep.subr.mxu0 0.0
    %1824 = vmatpush1.msra.mxu0 0.0
    %1825 = vmatprep.subr.mxu0 0.0
    %1826 = vmatpush1.msra.mxu0 0.0
    %1827 = vmatprep.subr.mxu0 0.0
    %1828 = vmatpush1.msra.mxu0 0.0
    %1829 = vmatprep.subr.mxu0 0.0
    %1830 = vmatpush1.msra.mxu0 0.0
    %1831 = vmatprep.subr.mxu0 0.0
    %1832 = vmatpush1.msra.mxu0 0.0
    %1833 = vmatprep.subr.mxu0 0.0
    %1834 = vmatpush1.msra.mxu0 0.0
    %1835 = vmatprep.subr.mxu0 0.0
    %1836 = vmatpush1.msra.mxu0 0.0
    %1837 = vmatprep.subr.mxu0 0.0
    %1838 = vmatpush1.msra.mxu0 0.0
    %1839 = vmatprep.subr.mxu0 0.0
    %1840 = vmatpush1.msra.mxu0 0.0
    %1841 = vmatprep.subr.mxu0 0.0
    %1842 = vmatpush1.msra.mxu0 0.0
    %1843 = vmatprep.subr.mxu0 0.0
    %1844 = vmatpush1.msra.mxu0 0.0
    %1845 = vmatprep.mubr.f32.mxu0 0.0
    %1846 = vmatmul.mubr.f32.gmra.mrb[0].mxu0 %v1779
    %v1847 = vpop.f32.mrb[0].mxu0
    %v1848 = vadd.f32 0.0, %v1847
    %v1849 = vpop.f32.mrb[0].mxu0
    %v1850 = vadd.f32 0.0, %v1849
    %1851 = vdwg.mxu0
    %v1852 = vadd.f32 %v1850, %v78
    %v1855 = vunpack.c.l.s4 1966171168
    %v1856 = vunpack.c.0.s8 %v1855
    %v1857 = vlaneseq
    %v1858 = vshrl.u32 %v1857, 7
    %v1859 = vsub.s32 %v1856, %v1858
    %v1860 = vrot.slane %v1852, %v1859
    %v1861 = vcombine.high %v1860, %v1860
    %v1863 = vunpack.c.l.s4 1966171168
    %v1864 = vunpack.c.0.s8 %v1863
    %v1865 = vlaneseq
    %v1866 = vshrl.u32 %v1865, 7
    %v1867 = vsub.s32 %v1864, %v1866
    %v1868 = vrot.slane %v1860, %v1867
    %v1870 = vunpack.c.l.s4 1966171168
    %v1871 = vunpack.c.0.s8 %v1870
    %v1872 = vlaneseq
    %v1873 = vshrl.u32 %v1872, 7
    %v1874 = vsub.s32 %v1871, %v1873
    %v1875 = vrot.slane %v1861, %v1874
    %1878 = vst.msk [vmem:[#allocation7 + $0x2] sm:$0x1] %vm1462, %v1868
    %1879 = vst.msk [vmem:[#allocation7 + $0xa] sm:$0x1] %vm1462, %v1875
    %v1880 = vsel %vm1465, %v1852, -inf
    %1881 = vmax.index.xlane.f32.xlu0 %v1880
    %v1882 = vpop.xlane.xlu0 %1881
    %vm1883 = vcmp.eq.s32.totalorder %v1254, %v1882
    %v1884 = vsel %vm1883, 1, 0
    %v1885 = vcvt.s32.f32 %v1884
    %v1887 = vsel %vm1258, %v1885, 0
    %1889 = vmatprep.subr.mxu0 0.0
    %1890 = vmatpush1.msra.mxu0 %v1142
    %1891 = vmatprep.subr.mxu0 0.0
    %1892 = vmatpush1.msra.mxu0 %v1147
    %1893 = vmatprep.subr.mxu0 0.0
    %1894 = vmatpush1.msra.mxu0 %v1152
    %1895 = vmatprep.subr.mxu0 0.0
    %1896 = vmatpush1.msra.mxu0 %v1157
    %1897 = vmatprep.subr.mxu0 0.0
    %1898 = vmatpush1.msra.mxu0 %v1162
    %1899 = vmatprep.subr.mxu0 0.0
    %1900 = vmatpush1.msra.mxu0 %v1167
    %1901 = vmatprep.subr.mxu0 0.0
    %1902 = vmatpush1.msra.mxu0 %v1172
    %1903 = vmatprep.subr.mxu0 0.0
    %1904 = vmatpush1.msra.mxu0 %v1177
    %1905 = vmatprep.subr.mxu0 0.0
    %1906 = vmatpush1.msra.mxu0 0.0
    %1907 = vmatprep.subr.mxu0 0.0
    %1908 = vmatpush1.msra.mxu0 0.0
    %1909 = vmatprep.subr.mxu0 0.0
    %1910 = vmatpush1.msra.mxu0 0.0
    %1911 = vmatprep.subr.mxu0 0.0
    %1912 = vmatpush1.msra.mxu0 0.0
    %1913 = vmatprep.subr.mxu0 0.0
    %1914 = vmatpush1.msra.mxu0 0.0
    %1915 = vmatprep.subr.mxu0 0.0
    %1916 = vmatpush1.msra.mxu0 0.0
    %1917 = vmatprep.subr.mxu0 0.0
    %1918 = vmatpush1.msra.mxu0 0.0
    %1919 = vmatprep.subr.mxu0 0.0
    %1920 = vmatpush1.msra.mxu0 0.0
    %1921 = vmatprep.subr.mxu0 0.0
    %1922 = vmatpush1.msra.mxu0 0.0
    %1923 = vmatprep.subr.mxu0 0.0
    %1924 = vmatpush1.msra.mxu0 0.0
    %1925 = vmatprep.subr.mxu0 0.0
    %1926 = vmatpush1.msra.mxu0 0.0
    %1927 = vmatprep.subr.mxu0 0.0
    %1928 = vmatpush1.msra.mxu0 0.0
    %1929 = vmatprep.subr.mxu0 0.0
    %1930 = vmatpush1.msra.mxu0 0.0
    %1931 = vmatprep.subr.mxu0 0.0
    %1932 = vmatpush1.msra.mxu0 0.0
    %1933 = vmatprep.subr.mxu0 0.0
    %1934 = vmatpush1.msra.mxu0 0.0
    %1935 = vmatprep.subr.mxu0 0.0
    %1936 = vmatpush1.msra.mxu0 0.0
    %1937 = vmatprep.subr.mxu0 0.0
    %1938 = vmatpush1.msra.mxu0 0.0
    %1939 = vmatprep.subr.mxu0 0.0
    %1940 = vmatpush1.msra.mxu0 0.0
    %1941 = vmatprep.subr.mxu0 0.0
    %1942 = vmatpush1.msra.mxu0 0.0
    %1943 = vmatprep.subr.mxu0 0.0
    %1944 = vmatpush1.msra.mxu0 0.0
    %1945 = vmatprep.subr.mxu0 0.0
    %1946 = vmatpush1.msra.mxu0 0.0
    %1947 = vmatprep.subr.mxu0 0.0
    %1948 = vmatpush1.msra.mxu0 0.0
    %1949 = vmatprep.subr.mxu0 0.0
    %1950 = vmatpush1.msra.mxu0 0.0
    %1951 = vmatprep.subr.mxu0 0.0
    %1952 = vmatpush1.msra.mxu0 0.0
    %1953 = vmatprep.mubr.f32.mxu0 0.0
    %1954 = vmatmul.mubr.f32.gmra.mrb[0].mxu0 %v1887
    %v1955 = vpop.f32.mrb[0].mxu0
    %v1956 = vadd.f32 %v1848, %v1955
    %v1957 = vpop.f32.mrb[0].mxu0
    %1958 = vdwg.mxu0
    %v1959 = vxor.u32 %v1956, 2147483648
    %v1960 = vmul.f32 %v1959, 1.442695
    %v1961 = vpow.pop %v1960
    %v1962 = vadd.f32 %v1961, 1.0
    %v1963 = vrcp.pop %v1962
    %v1964 = vmul.f32 1.0, %v1963
    %v1965 = vtanh.pop %v1956
    %v1966 = vmul.f32 %v1964, %v1769
    %1968 = vrot.lane.b32.xlu0 %v1965, 64
    %v1969 = vpop.permute.xlu0 %1968
    %v1971 = vmul.f32 %v1964, %v1969
    %1973 = vrot.lane.b32.xlu0 %v1971, 32
    %v1974 = vpop.permute.xlu0 %1973
    %v1976 = vadd.f32 %v1966, %v1974
    %v1977 = vtanh.pop %v1976
    %1979 = vrot.lane.b32.xlu0 %v1977, 64
    %v1980 = vpop.permute.xlu0 %1979
    %v1982 = vmul.f32 %v1964, %v1980
    %1984 = vrot.lane.b32.xlu0 %v1982, 32
    %v1985 = vpop.permute.xlu0 %1984
    %v1986 = vsel %vm93, %v1985, 0
    %1988 = vmatprep.subr.mxu0 %v66
    %1989 = vmatpush1.msra.mxu0 %v65
    %1990 = vmatprep.subr.mxu0 %v68
    %1991 = vmatpush1.msra.mxu0 %v67
    %1992 = vmatprep.subr.mxu0 %v70
    %1993 = vmatpush1.msra.mxu0 %v69
    %1994 = vmatprep.subr.mxu0 %v72
    %1995 = vmatpush1.msra.mxu0 %v71
    %1996 = vmatprep.subr.mxu0 0.0
    %1997 = vmatpush1.msra.mxu0 0.0
    %1998 = vmatprep.subr.mxu0 0.0
    %1999 = vmatpush1.msra.mxu0 0.0
    %2000 = vmatprep.subr.mxu0 0.0
    %2001 = vmatpush1.msra.mxu0 0.0
    %2002 = vmatprep.subr.mxu0 0.0
    %2003 = vmatpush1.msra.mxu0 0.0
    %2004 = vmatprep.subr.mxu0 0.0
    %2005 = vmatpush1.msra.mxu0 0.0
    %2006 = vmatprep.subr.mxu0 0.0
    %2007 = vmatpush1.msra.mxu0 0.0
    %2008 = vmatprep.subr.mxu0 0.0
    %2009 = vmatpush1.msra.mxu0 0.0
    %2010 = vmatprep.subr.mxu0 0.0
    %2011 = vmatpush1.msra.mxu0 0.0
    %2012 = vmatprep.subr.mxu0 0.0
    %2013 = vmatpush1.msra.mxu0 0.0
    %2014 = vmatprep.subr.mxu0 0.0
    %2015 = vmatpush1.msra.mxu0 0.0
    %2016 = vmatprep.subr.mxu0 0.0
    %2017 = vmatpush1.msra.mxu0 0.0
    %2018 = vmatprep.subr.mxu0 0.0
    %2019 = vmatpush1.msra.mxu0 0.0
    %2020 = vmatprep.subr.mxu0 0.0
    %2021 = vmatpush1.msra.mxu0 0.0
    %2022 = vmatprep.subr.mxu0 0.0
    %2023 = vmatpush1.msra.mxu0 0.0
    %2024 = vmatprep.subr.mxu0 0.0
    %2025 = vmatpush1.msra.mxu0 0.0
    %2026 = vmatprep.subr.mxu0 0.0
    %2027 = vmatpush1.msra.mxu0 0.0
    %2028 = vmatprep.subr.mxu0 0.0
    %2029 = vmatpush1.msra.mxu0 0.0
    %2030 = vmatprep.subr.mxu0 0.0
    %2031 = vmatpush1.msra.mxu0 0.0
    %2032 = vmatprep.subr.mxu0 0.0
    %2033 = vmatpush1.msra.mxu0 0.0
    %2034 = vmatprep.subr.mxu0 0.0
    %2035 = vmatpush1.msra.mxu0 0.0
    %2036 = vmatprep.subr.mxu0 0.0
    %2037 = vmatpush1.msra.mxu0 0.0
    %2038 = vmatprep.subr.mxu0 0.0
    %2039 = vmatpush1.msra.mxu0 0.0
    %2040 = vmatprep.subr.mxu0 0.0
    %2041 = vmatpush1.msra.mxu0 0.0
    %2042 = vmatprep.subr.mxu0 0.0
    %2043 = vmatpush1.msra.mxu0 0.0
    %2044 = vmatprep.subr.mxu0 0.0
    %2045 = vmatpush1.msra.mxu0 0.0
    %2046 = vmatprep.subr.mxu0 0.0
    %2047 = vmatpush1.msra.mxu0 0.0
    %2048 = vmatprep.subr.mxu0 0.0
    %2049 = vmatpush1.msra.mxu0 0.0
    %2050 = vmatprep.subr.mxu0 0.0
    %2051 = vmatpush1.msra.mxu0 0.0
    %2052 = vmatprep.mubr.f32.mxu0 0.0
    %2053 = vmatmul.mubr.f32.gmra.mrb[0].mxu0 %v1986
    %v2054 = vpop.f32.mrb[0].mxu0
    %v2055 = vadd.f32 0.0, %v2054
    %v2056 = vpop.f32.mrb[0].mxu0
    %v2057 = vadd.f32 0.0, %v2056
    %2058 = vdwg.mxu0
    %v2059 = vadd.f32 %v2057, %v78
    %v2062 = vunpack.c.l.s4 1966171168
    %v2063 = vunpack.c.0.s8 %v2062
    %v2064 = vlaneseq
    %v2065 = vshrl.u32 %v2064, 7
    %v2066 = vsub.s32 %v2063, %v2065
    %v2067 = vrot.slane %v2059, %v2066
    %v2068 = vcombine.high %v2067, %v2067
    %v2070 = vunpack.c.l.s4 1966171168
    %v2071 = vunpack.c.0.s8 %v2070
    %v2072 = vlaneseq
    %v2073 = vshrl.u32 %v2072, 7
    %v2074 = vsub.s32 %v2071, %v2073
    %v2075 = vrot.slane %v2067, %v2074
    %v2077 = vunpack.c.l.s4 1966171168
    %v2078 = vunpack.c.0.s8 %v2077
    %v2079 = vlaneseq
    %v2080 = vshrl.u32 %v2079, 7
    %v2081 = vsub.s32 %v2078, %v2080
    %v2082 = vrot.slane %v2068, %v2081
    %2085 = vst.msk [vmem:[#allocation7 + $0x3] sm:$0x1] %vm1462, %v2075
    %2086 = vst.msk [vmem:[#allocation7 + $0xb] sm:$0x1] %vm1462, %v2082
    %v2087 = vsel %vm1465, %v2059, -inf
    %2088 = vmax.index.xlane.f32.xlu0 %v2087
    %v2089 = vpop.xlane.xlu0 %2088
    %vm2090 = vcmp.eq.s32.totalorder %v1254, %v2089
    %v2091 = vsel %vm2090, 1, 0
    %v2092 = vcvt.s32.f32 %v2091
    %v2094 = vsel %vm1258, %v2092, 0
    %2096 = vmatprep.subr.mxu0 0.0
    %2097 = vmatpush1.msra.mxu0 %v1142
    %2098 = vmatprep.subr.mxu0 0.0
    %2099 = vmatpush1.msra.mxu0 %v1147
    %2100 = vmatprep.subr.mxu0 0.0
    %2101 = vmatpush1.msra.mxu0 %v1152
    %2102 = vmatprep.subr.mxu0 0.0
    %2103 = vmatpush1.msra.mxu0 %v1157
    %2104 = vmatprep.subr.mxu0 0.0
    %2105 = vmatpush1.msra.mxu0 %v1162
    %2106 = vmatprep.subr.mxu0 0.0
    %2107 = vmatpush1.msra.mxu0 %v1167
    %2108 = vmatprep.subr.mxu0 0.0
    %2109 = vmatpush1.msra.mxu0 %v1172
    %2110 = vmatprep.subr.mxu0 0.0
    %2111 = vmatpush1.msra.mxu0 %v1177
    %2112 = vmatprep.subr.mxu0 0.0
    %2113 = vmatpush1.msra.mxu0 0.0
    %2114 = vmatprep.subr.mxu0 0.0
    %2115 = vmatpush1.msra.mxu0 0.0
    %2116 = vmatprep.subr.mxu0 0.0
    %2117 = vmatpush1.msra.mxu0 0.0
    %2118 = vmatprep.subr.mxu0 0.0
    %2119 = vmatpush1.msra.mxu0 0.0
    %2120 = vmatprep.subr.mxu0 0.0
    %2121 = vmatpush1.msra.mxu0 0.0
    %2122 = vmatprep.subr.mxu0 0.0
    %2123 = vmatpush1.msra.mxu0 0.0
    %2124 = vmatprep.subr.mxu0 0.0
    %2125 = vmatpush1.msra.mxu0 0.0
    %2126 = vmatprep.subr.mxu0 0.0
    %2127 = vmatpush1.msra.mxu0 0.0
    %2128 = vmatprep.subr.mxu0 0.0
    %2129 = vmatpush1.msra.mxu0 0.0
    %2130 = vmatprep.subr.mxu0 0.0
    %2131 = vmatpush1.msra.mxu0 0.0
    %2132 = vmatprep.subr.mxu0 0.0
    %2133 = vmatpush1.msra.mxu0 0.0
    %2134 = vmatprep.subr.mxu0 0.0
    %2135 = vmatpush1.msra.mxu0 0.0
    %2136 = vmatprep.subr.mxu0 0.0
    %2137 = vmatpush1.msra.mxu0 0.0
    %2138 = vmatprep.subr.mxu0 0.0
    %2139 = vmatpush1.msra.mxu0 0.0
    %2140 = vmatprep.subr.mxu0 0.0
    %2141 = vmatpush1.msra.mxu0 0.0
    %2142 = vmatprep.subr.mxu0 0.0
    %2143 = vmatpush1.msra.mxu0 0.0
    %2144 = vmatprep.subr.mxu0 0.0
    %2145 = vmatpush1.msra.mxu0 0.0
    %2146 = vmatprep.subr.mxu0 0.0
    %2147 = vmatpush1.msra.mxu0 0.0
    %2148 = vmatprep.subr.mxu0 0.0
    %2149 = vmatpush1.msra.mxu0 0.0
    %2150 = vmatprep.subr.mxu0 0.0
    %2151 = vmatpush1.msra.mxu0 0.0
    %2152 = vmatprep.subr.mxu0 0.0
    %2153 = vmatpush1.msra.mxu0 0.0
    %2154 = vmatprep.subr.mxu0 0.0
    %2155 = vmatpush1.msra.mxu0 0.0
    %2156 = vmatprep.subr.mxu0 0.0
    %2157 = vmatpush1.msra.mxu0 0.0
    %2158 = vmatprep.subr.mxu0 0.0
    %2159 = vmatpush1.msra.mxu0 0.0
    %2160 = vmatprep.mubr.f32.mxu0 0.0
    %2161 = vmatmul.mubr.f32.gmra.mrb[0].mxu0 %v2094
    %v2162 = vpop.f32.mrb[0].mxu0
    %v2163 = vadd.f32 %v2055, %v2162
    %v2164 = vpop.f32.mrb[0].mxu0
    %2165 = vdwg.mxu0
    %v2166 = vxor.u32 %v2163, 2147483648
    %v2167 = vmul.f32 %v2166, 1.442695
    %v2168 = vpow.pop %v2167
    %v2169 = vadd.f32 %v2168, 1.0
    %v2170 = vrcp.pop %v2169
    %v2171 = vmul.f32 1.0, %v2170
    %v2172 = vtanh.pop %v2163
    %v2173 = vmul.f32 %v2171, %v1976
    %2175 = vrot.lane.b32.xlu0 %v2172, 64
    %v2176 = vpop.permute.xlu0 %2175
    %v2178 = vmul.f32 %v2171, %v2176
    %2180 = vrot.lane.b32.xlu0 %v2178, 32
    %v2181 = vpop.permute.xlu0 %2180
    %v2183 = vadd.f32 %v2173, %v2181
    %v2184 = vtanh.pop %v2183
    %2186 = vrot.lane.b32.xlu0 %v2184, 64
    %v2187 = vpop.permute.xlu0 %2186
    %v2189 = vmul.f32 %v2171, %v2187
    %2191 = vrot.lane.b32.xlu0 %v2189, 32
    %v2192 = vpop.permute.xlu0 %2191
    %v2193 = vsel %vm93, %v2192, 0
    %2195 = vmatprep.subr.mxu0 %v66
    %2196 = vmatpush1.msra.mxu0 %v65
    %2197 = vmatprep.subr.mxu0 %v68
    %2198 = vmatpush1.msra.mxu0 %v67
    %2199 = vmatprep.subr.mxu0 %v70
    %2200 = vmatpush1.msra.mxu0 %v69
    %2201 = vmatprep.subr.mxu0 %v72
    %2202 = vmatpush1.msra.mxu0 %v71
    %2203 = vmatprep.subr.mxu0 0.0
    %2204 = vmatpush1.msra.mxu0 0.0
    %2205 = vmatprep.subr.mxu0 0.0
    %2206 = vmatpush1.msra.mxu0 0.0
    %2207 = vmatprep.subr.mxu0 0.0
    %2208 = vmatpush1.msra.mxu0 0.0
    %2209 = vmatprep.subr.mxu0 0.0
    %2210 = vmatpush1.msra.mxu0 0.0
    %2211 = vmatprep.subr.mxu0 0.0
    %2212 = vmatpush1.msra.mxu0 0.0
    %2213 = vmatprep.subr.mxu0 0.0
    %2214 = vmatpush1.msra.mxu0 0.0
    %2215 = vmatprep.subr.mxu0 0.0
    %2216 = vmatpush1.msra.mxu0 0.0
    %2217 = vmatprep.subr.mxu0 0.0
    %2218 = vmatpush1.msra.mxu0 0.0
    %2219 = vmatprep.subr.mxu0 0.0
    %2220 = vmatpush1.msra.mxu0 0.0
    %2221 = vmatprep.subr.mxu0 0.0
    %2222 = vmatpush1.msra.mxu0 0.0
    %2223 = vmatprep.subr.mxu0 0.0
    %2224 = vmatpush1.msra.mxu0 0.0
    %2225 = vmatprep.subr.mxu0 0.0
    %2226 = vmatpush1.msra.mxu0 0.0
    %2227 = vmatprep.subr.mxu0 0.0
    %2228 = vmatpush1.msra.mxu0 0.0
    %2229 = vmatprep.subr.mxu0 0.0
    %2230 = vmatpush1.msra.mxu0 0.0
    %2231 = vmatprep.subr.mxu0 0.0
    %2232 = vmatpush1.msra.mxu0 0.0
    %2233 = vmatprep.subr.mxu0 0.0
    %2234 = vmatpush1.msra.mxu0 0.0
    %2235 = vmatprep.subr.mxu0 0.0
    %2236 = vmatpush1.msra.mxu0 0.0
    %2237 = vmatprep.subr.mxu0 0.0
    %2238 = vmatpush1.msra.mxu0 0.0
    %2239 = vmatprep.subr.mxu0 0.0
    %2240 = vmatpush1.msra.mxu0 0.0
    %2241 = vmatprep.subr.mxu0 0.0
    %2242 = vmatpush1.msra.mxu0 0.0
    %2243 = vmatprep.subr.mxu0 0.0
    %2244 = vmatpush1.msra.mxu0 0.0
    %2245 = vmatprep.subr.mxu0 0.0
    %2246 = vmatpush1.msra.mxu0 0.0
    %2247 = vmatprep.subr.mxu0 0.0
    %2248 = vmatpush1.msra.mxu0 0.0
    %2249 = vmatprep.subr.mxu0 0.0
    %2250 = vmatpush1.msra.mxu0 0.0
    %2251 = vmatprep.subr.mxu0 0.0
    %2252 = vmatpush1.msra.mxu0 0.0
    %2253 = vmatprep.subr.mxu0 0.0
    %2254 = vmatpush1.msra.mxu0 0.0
    %2255 = vmatprep.subr.mxu0 0.0
    %2256 = vmatpush1.msra.mxu0 0.0
    %2257 = vmatprep.subr.mxu0 0.0
    %2258 = vmatpush1.msra.mxu0 0.0
    %2259 = vmatprep.mubr.f32.mxu0 0.0
    %2260 = vmatmul.mubr.f32.gmra.mrb[0].mxu0 %v2193
    %v2261 = vpop.f32.mrb[0].mxu0
    %v2262 = vadd.f32 0.0, %v2261
    %v2263 = vpop.f32.mrb[0].mxu0
    %v2264 = vadd.f32 0.0, %v2263
    %2265 = vdwg.mxu0
    %v2266 = vadd.f32 %v2264, %v78
    %v2269 = vunpack.c.l.s4 1966171168
    %v2270 = vunpack.c.0.s8 %v2269
    %v2271 = vlaneseq
    %v2272 = vshrl.u32 %v2271, 7
    %v2273 = vsub.s32 %v2270, %v2272
    %v2274 = vrot.slane %v2266, %v2273
    %v2275 = vcombine.high %v2274, %v2274
    %v2277 = vunpack.c.l.s4 1966171168
    %v2278 = vunpack.c.0.s8 %v2277
    %v2279 = vlaneseq
    %v2280 = vshrl.u32 %v2279, 7
    %v2281 = vsub.s32 %v2278, %v2280
    %v2282 = vrot.slane %v2274, %v2281
    %v2284 = vunpack.c.l.s4 1966171168
    %v2285 = vunpack.c.0.s8 %v2284
    %v2286 = vlaneseq
    %v2287 = vshrl.u32 %v2286, 7
    %v2288 = vsub.s32 %v2285, %v2287
    %v2289 = vrot.slane %v2275, %v2288
    %2292 = vst.msk [vmem:[#allocation7 + $0x4] sm:$0x1] %vm1462, %v2282
    %2293 = vst.msk [vmem:[#allocation7 + $0xc] sm:$0x1] %vm1462, %v2289
    %v2294 = vsel %vm1465, %v2266, -inf
    %2295 = vmax.index.xlane.f32.xlu0 %v2294
    %v2296 = vpop.xlane.xlu0 %2295
    %vm2297 = vcmp.eq.s32.totalorder %v1254, %v2296
    %v2298 = vsel %vm2297, 1, 0
    %v2299 = vcvt.s32.f32 %v2298
    %v2301 = vsel %vm1258, %v2299, 0
    %2303 = vmatprep.subr.mxu0 0.0
    %2304 = vmatpush1.msra.mxu0 %v1142
    %2305 = vmatprep.subr.mxu0 0.0
    %2306 = vmatpush1.msra.mxu0 %v1147
    %2307 = vmatprep.subr.mxu0 0.0
    %2308 = vmatpush1.msra.mxu0 %v1152
    %2309 = vmatprep.subr.mxu0 0.0
    %2310 = vmatpush1.msra.mxu0 %v1157
    %2311 = vmatprep.subr.mxu0 0.0
    %2312 = vmatpush1.msra.mxu0 %v1162
    %2313 = vmatprep.subr.mxu0 0.0
    %2314 = vmatpush1.msra.mxu0 %v1167
    %2315 = vmatprep.subr.mxu0 0.0
    %2316 = vmatpush1.msra.mxu0 %v1172
    %2317 = vmatprep.subr.mxu0 0.0
    %2318 = vmatpush1.msra.mxu0 %v1177
    %2319 = vmatprep.subr.mxu0 0.0
    %2320 = vmatpush1.msra.mxu0 0.0
    %2321 = vmatprep.subr.mxu0 0.0
    %2322 = vmatpush1.msra.mxu0 0.0
    %2323 = vmatprep.subr.mxu0 0.0
    %2324 = vmatpush1.msra.mxu0 0.0
    %2325 = vmatprep.subr.mxu0 0.0
    %2326 = vmatpush1.msra.mxu0 0.0
    %2327 = vmatprep.subr.mxu0 0.0
    %2328 = vmatpush1.msra.mxu0 0.0
    %2329 = vmatprep.subr.mxu0 0.0
    %2330 = vmatpush1.msra.mxu0 0.0
    %2331 = vmatprep.subr.mxu0 0.0
    %2332 = vmatpush1.msra.mxu0 0.0
    %2333 = vmatprep.subr.mxu0 0.0
    %2334 = vmatpush1.msra.mxu0 0.0
    %2335 = vmatprep.subr.mxu0 0.0
    %2336 = vmatpush1.msra.mxu0 0.0
    %2337 = vmatprep.subr.mxu0 0.0
    %2338 = vmatpush1.msra.mxu0 0.0
    %2339 = vmatprep.subr.mxu0 0.0
    %2340 = vmatpush1.msra.mxu0 0.0
    %2341 = vmatprep.subr.mxu0 0.0
    %2342 = vmatpush1.msra.mxu0 0.0
    %2343 = vmatprep.subr.mxu0 0.0
    %2344 = vmatpush1.msra.mxu0 0.0
    %2345 = vmatprep.subr.mxu0 0.0
    %2346 = vmatpush1.msra.mxu0 0.0
    %2347 = vmatprep.subr.mxu0 0.0
    %2348 = vmatpush1.msra.mxu0 0.0
    %2349 = vmatprep.subr.mxu0 0.0
    %2350 = vmatpush1.msra.mxu0 0.0
    %2351 = vmatprep.subr.mxu0 0.0
    %2352 = vmatpush1.msra.mxu0 0.0
    %2353 = vmatprep.subr.mxu0 0.0
    %2354 = vmatpush1.msra.mxu0 0.0
    %2355 = vmatprep.subr.mxu0 0.0
    %2356 = vmatpush1.msra.mxu0 0.0
    %2357 = vmatprep.subr.mxu0 0.0
    %2358 = vmatpush1.msra.mxu0 0.0
    %2359 = vmatprep.subr.mxu0 0.0
    %2360 = vmatpush1.msra.mxu0 0.0
    %2361 = vmatprep.subr.mxu0 0.0
    %2362 = vmatpush1.msra.mxu0 0.0
    %2363 = vmatprep.subr.mxu0 0.0
    %2364 = vmatpush1.msra.mxu0 0.0
    %2365 = vmatprep.subr.mxu0 0.0
    %2366 = vmatpush1.msra.mxu0 0.0
    %2367 = vmatprep.mubr.f32.mxu0 0.0
    %2368 = vmatmul.mubr.f32.gmra.mrb[0].mxu0 %v2301
    %v2369 = vpop.f32.mrb[0].mxu0
    %v2370 = vadd.f32 %v2262, %v2369
    %v2371 = vpop.f32.mrb[0].mxu0
    %2372 = vdwg.mxu0
    %v2373 = vxor.u32 %v2370, 2147483648
    %v2374 = vmul.f32 %v2373, 1.442695
    %v2375 = vpow.pop %v2374
    %v2376 = vadd.f32 %v2375, 1.0
    %v2377 = vrcp.pop %v2376
    %v2378 = vmul.f32 1.0, %v2377
    %v2379 = vtanh.pop %v2370
    %v2380 = vmul.f32 %v2378, %v2183
    %2382 = vrot.lane.b32.xlu0 %v2379, 64
    %v2383 = vpop.permute.xlu0 %2382
    %v2385 = vmul.f32 %v2378, %v2383
    %2387 = vrot.lane.b32.xlu0 %v2385, 32
    %v2388 = vpop.permute.xlu0 %2387
    %v2390 = vadd.f32 %v2380, %v2388
    %v2391 = vtanh.pop %v2390
    %2393 = vrot.lane.b32.xlu0 %v2391, 64
    %v2394 = vpop.permute.xlu0 %2393
    %v2396 = vmul.f32 %v2378, %v2394
    %2398 = vrot.lane.b32.xlu0 %v2396, 32
    %v2399 = vpop.permute.xlu0 %2398
    %v2400 = vsel %vm93, %v2399, 0
    %2402 = vmatprep.subr.mxu0 %v66
    %2403 = vmatpush1.msra.mxu0 %v65
    %2404 = vmatprep.subr.mxu0 %v68
    %2405 = vmatpush1.msra.mxu0 %v67
    %2406 = vmatprep.subr.mxu0 %v70
    %2407 = vmatpush1.msra.mxu0 %v69
    %2408 = vmatprep.subr.mxu0 %v72
    %2409 = vmatpush1.msra.mxu0 %v71
    %2410 = vmatprep.subr.mxu0 0.0
    %2411 = vmatpush1.msra.mxu0 0.0
    %2412 = vmatprep.subr.mxu0 0.0
    %2413 = vmatpush1.msra.mxu0 0.0
    %2414 = vmatprep.subr.mxu0 0.0
    %2415 = vmatpush1.msra.mxu0 0.0
    %2416 = vmatprep.subr.mxu0 0.0
    %2417 = vmatpush1.msra.mxu0 0.0
    %2418 = vmatprep.subr.mxu0 0.0
    %2419 = vmatpush1.msra.mxu0 0.0
    %2420 = vmatprep.subr.mxu0 0.0
    %2421 = vmatpush1.msra.mxu0 0.0
    %2422 = vmatprep.subr.mxu0 0.0
    %2423 = vmatpush1.msra.mxu0 0.0
    %2424 = vmatprep.subr.mxu0 0.0
    %2425 = vmatpush1.msra.mxu0 0.0
    %2426 = vmatprep.subr.mxu0 0.0
    %2427 = vmatpush1.msra.mxu0 0.0
    %2428 = vmatprep.subr.mxu0 0.0
    %2429 = vmatpush1.msra.mxu0 0.0
    %2430 = vmatprep.subr.mxu0 0.0
    %2431 = vmatpush1.msra.mxu0 0.0
    %2432 = vmatprep.subr.mxu0 0.0
    %2433 = vmatpush1.msra.mxu0 0.0
    %2434 = vmatprep.subr.mxu0 0.0
    %2435 = vmatpush1.msra.mxu0 0.0
    %2436 = vmatprep.subr.mxu0 0.0
    %2437 = vmatpush1.msra.mxu0 0.0
    %2438 = vmatprep.subr.mxu0 0.0
    %2439 = vmatpush1.msra.mxu0 0.0
    %2440 = vmatprep.subr.mxu0 0.0
    %2441 = vmatpush1.msra.mxu0 0.0
    %2442 = vmatprep.subr.mxu0 0.0
    %2443 = vmatpush1.msra.mxu0 0.0
    %2444 = vmatprep.subr.mxu0 0.0
    %2445 = vmatpush1.msra.mxu0 0.0
    %2446 = vmatprep.subr.mxu0 0.0
    %2447 = vmatpush1.msra.mxu0 0.0
    %2448 = vmatprep.subr.mxu0 0.0
    %2449 = vmatpush1.msra.mxu0 0.0
    %2450 = vmatprep.subr.mxu0 0.0
    %2451 = vmatpush1.msra.mxu0 0.0
    %2452 = vmatprep.subr.mxu0 0.0
    %2453 = vmatpush1.msra.mxu0 0.0
    %2454 = vmatprep.subr.mxu0 0.0
    %2455 = vmatpush1.msra.mxu0 0.0
    %2456 = vmatprep.subr.mxu0 0.0
    %2457 = vmatpush1.msra.mxu0 0.0
    %2458 = vmatprep.subr.mxu0 0.0
    %2459 = vmatpush1.msra.mxu0 0.0
    %2460 = vmatprep.subr.mxu0 0.0
    %2461 = vmatpush1.msra.mxu0 0.0
    %2462 = vmatprep.subr.mxu0 0.0
    %2463 = vmatpush1.msra.mxu0 0.0
    %2464 = vmatprep.subr.mxu0 0.0
    %2465 = vmatpush1.msra.mxu0 0.0
    %2466 = vmatprep.mubr.f32.mxu0 0.0
    %2467 = vmatmul.mubr.f32.gmra.mrb[0].mxu0 %v2400
    %v2468 = vpop.f32.mrb[0].mxu0
    %v2469 = vadd.f32 0.0, %v2468
    %v2470 = vpop.f32.mrb[0].mxu0
    %v2471 = vadd.f32 0.0, %v2470
    %2472 = vdwg.mxu0
    %v2473 = vadd.f32 %v2471, %v78
    %v2476 = vunpack.c.l.s4 1966171168
    %v2477 = vunpack.c.0.s8 %v2476
    %v2478 = vlaneseq
    %v2479 = vshrl.u32 %v2478, 7
    %v2480 = vsub.s32 %v2477, %v2479
    %v2481 = vrot.slane %v2473, %v2480
    %v2482 = vcombine.high %v2481, %v2481
    %v2484 = vunpack.c.l.s4 1966171168
    %v2485 = vunpack.c.0.s8 %v2484
    %v2486 = vlaneseq
    %v2487 = vshrl.u32 %v2486, 7
    %v2488 = vsub.s32 %v2485, %v2487
    %v2489 = vrot.slane %v2481, %v2488
    %v2491 = vunpack.c.l.s4 1966171168
    %v2492 = vunpack.c.0.s8 %v2491
    %v2493 = vlaneseq
    %v2494 = vshrl.u32 %v2493, 7
    %v2495 = vsub.s32 %v2492, %v2494
    %v2496 = vrot.slane %v2482, %v2495
    %2499 = vst.msk [vmem:[#allocation7 + $0x5] sm:$0x1] %vm1462, %v2489
    %2500 = vst.msk [vmem:[#allocation7 + $0xd] sm:$0x1] %vm1462, %v2496
    %v2501 = vsel %vm1465, %v2473, -inf
    %2502 = vmax.index.xlane.f32.xlu0 %v2501
    %v2503 = vpop.xlane.xlu0 %2502
    %vm2504 = vcmp.eq.s32.totalorder %v1254, %v2503
    %v2505 = vsel %vm2504, 1, 0
    %v2506 = vcvt.s32.f32 %v2505
    %v2508 = vsel %vm1258, %v2506, 0
    %2510 = vmatprep.subr.mxu0 0.0
    %2511 = vmatpush1.msra.mxu0 %v1142
    %2512 = vmatprep.subr.mxu0 0.0
    %2513 = vmatpush1.msra.mxu0 %v1147
    %2514 = vmatprep.subr.mxu0 0.0
    %2515 = vmatpush1.msra.mxu0 %v1152
    %2516 = vmatprep.subr.mxu0 0.0
    %2517 = vmatpush1.msra.mxu0 %v1157
    %2518 = vmatprep.subr.mxu0 0.0
    %2519 = vmatpush1.msra.mxu0 %v1162
    %2520 = vmatprep.subr.mxu0 0.0
    %2521 = vmatpush1.msra.mxu0 %v1167
    %2522 = vmatprep.subr.mxu0 0.0
    %2523 = vmatpush1.msra.mxu0 %v1172
    %2524 = vmatprep.subr.mxu0 0.0
    %2525 = vmatpush1.msra.mxu0 %v1177
    %2526 = vmatprep.subr.mxu0 0.0
    %2527 = vmatpush1.msra.mxu0 0.0
    %2528 = vmatprep.subr.mxu0 0.0
    %2529 = vmatpush1.msra.mxu0 0.0
    %2530 = vmatprep.subr.mxu0 0.0
    %2531 = vmatpush1.msra.mxu0 0.0
    %2532 = vmatprep.subr.mxu0 0.0
    %2533 = vmatpush1.msra.mxu0 0.0
    %2534 = vmatprep.subr.mxu0 0.0
    %2535 = vmatpush1.msra.mxu0 0.0
    %2536 = vmatprep.subr.mxu0 0.0
    %2537 = vmatpush1.msra.mxu0 0.0
    %2538 = vmatprep.subr.mxu0 0.0
    %2539 = vmatpush1.msra.mxu0 0.0
    %2540 = vmatprep.subr.mxu0 0.0
    %2541 = vmatpush1.msra.mxu0 0.0
    %2542 = vmatprep.subr.mxu0 0.0
    %2543 = vmatpush1.msra.mxu0 0.0
    %2544 = vmatprep.subr.mxu0 0.0
    %2545 = vmatpush1.msra.mxu0 0.0
    %2546 = vmatprep.subr.mxu0 0.0
    %2547 = vmatpush1.msra.mxu0 0.0
    %2548 = vmatprep.subr.mxu0 0.0
    %2549 = vmatpush1.msra.mxu0 0.0
    %2550 = vmatprep.subr.mxu0 0.0
    %2551 = vmatpush1.msra.mxu0 0.0
    %2552 = vmatprep.subr.mxu0 0.0
    %2553 = vmatpush1.msra.mxu0 0.0
    %2554 = vmatprep.subr.mxu0 0.0
    %2555 = vmatpush1.msra.mxu0 0.0
    %2556 = vmatprep.subr.mxu0 0.0
    %2557 = vmatpush1.msra.mxu0 0.0
    %2558 = vmatprep.subr.mxu0 0.0
    %2559 = vmatpush1.msra.mxu0 0.0
    %2560 = vmatprep.subr.mxu0 0.0
    %2561 = vmatpush1.msra.mxu0 0.0
    %2562 = vmatprep.subr.mxu0 0.0
    %2563 = vmatpush1.msra.mxu0 0.0
    %2564 = vmatprep.subr.mxu0 0.0
    %2565 = vmatpush1.msra.mxu0 0.0
    %2566 = vmatprep.subr.mxu0 0.0
    %2567 = vmatpush1.msra.mxu0 0.0
    %2568 = vmatprep.subr.mxu0 0.0
    %2569 = vmatpush1.msra.mxu0 0.0
    %2570 = vmatprep.subr.mxu0 0.0
    %2571 = vmatpush1.msra.mxu0 0.0
    %2572 = vmatprep.subr.mxu0 0.0
    %2573 = vmatpush1.msra.mxu0 0.0
    %2574 = vmatprep.mubr.f32.mxu0 0.0
    %2575 = vmatmul.mubr.f32.gmra.mrb[0].mxu0 %v2508
    %v2576 = vpop.f32.mrb[0].mxu0
    %v2577 = vadd.f32 %v2469, %v2576
    %v2578 = vpop.f32.mrb[0].mxu0
    %2579 = vdwg.mxu0
    %v2580 = vxor.u32 %v2577, 2147483648
    %v2581 = vmul.f32 %v2580, 1.442695
    %v2582 = vpow.pop %v2581
    %v2583 = vadd.f32 %v2582, 1.0
    %v2584 = vrcp.pop %v2583
    %v2585 = vmul.f32 1.0, %v2584
    %v2586 = vtanh.pop %v2577
    %v2587 = vmul.f32 %v2585, %v2390
    %2589 = vrot.lane.b32.xlu0 %v2586, 64
    %v2590 = vpop.permute.xlu0 %2589
    %v2592 = vmul.f32 %v2585, %v2590
    %2594 = vrot.lane.b32.xlu0 %v2592, 32
    %v2595 = vpop.permute.xlu0 %2594
    %v2597 = vadd.f32 %v2587, %v2595
    %v2598 = vtanh.pop %v2597
    %2600 = vrot.lane.b32.xlu0 %v2598, 64
    %v2601 = vpop.permute.xlu0 %2600
    %v2603 = vmul.f32 %v2585, %v2601
    %2605 = vrot.lane.b32.xlu0 %v2603, 32
    %v2606 = vpop.permute.xlu0 %2605
    %v2607 = vsel %vm93, %v2606, 0
    %2609 = vmatprep.subr.mxu0 %v66
    %2610 = vmatpush1.msra.mxu0 %v65
    %2611 = vmatprep.subr.mxu0 %v68
    %2612 = vmatpush1.msra.mxu0 %v67
    %2613 = vmatprep.subr.mxu0 %v70
    %2614 = vmatpush1.msra.mxu0 %v69
    %2615 = vmatprep.subr.mxu0 %v72
    %2616 = vmatpush1.msra.mxu0 %v71
    %2617 = vmatprep.subr.mxu0 0.0
    %2618 = vmatpush1.msra.mxu0 0.0
    %2619 = vmatprep.subr.mxu0 0.0
    %2620 = vmatpush1.msra.mxu0 0.0
    %2621 = vmatprep.subr.mxu0 0.0
    %2622 = vmatpush1.msra.mxu0 0.0
    %2623 = vmatprep.subr.mxu0 0.0
    %2624 = vmatpush1.msra.mxu0 0.0
    %2625 = vmatprep.subr.mxu0 0.0
    %2626 = vmatpush1.msra.mxu0 0.0
    %2627 = vmatprep.subr.mxu0 0.0
    %2628 = vmatpush1.msra.mxu0 0.0
    %2629 = vmatprep.subr.mxu0 0.0
    %2630 = vmatpush1.msra.mxu0 0.0
    %2631 = vmatprep.subr.mxu0 0.0
    %2632 = vmatpush1.msra.mxu0 0.0
    %2633 = vmatprep.subr.mxu0 0.0
    %2634 = vmatpush1.msra.mxu0 0.0
    %2635 = vmatprep.subr.mxu0 0.0
    %2636 = vmatpush1.msra.mxu0 0.0
    %2637 = vmatprep.subr.mxu0 0.0
    %2638 = vmatpush1.msra.mxu0 0.0
    %2639 = vmatprep.subr.mxu0 0.0
    %2640 = vmatpush1.msra.mxu0 0.0
    %2641 = vmatprep.subr.mxu0 0.0
    %2642 = vmatpush1.msra.mxu0 0.0
    %2643 = vmatprep.subr.mxu0 0.0
    %2644 = vmatpush1.msra.mxu0 0.0
    %2645 = vmatprep.subr.mxu0 0.0
    %2646 = vmatpush1.msra.mxu0 0.0
    %2647 = vmatprep.subr.mxu0 0.0
    %2648 = vmatpush1.msra.mxu0 0.0
    %2649 = vmatprep.subr.mxu0 0.0
    %2650 = vmatpush1.msra.mxu0 0.0
    %2651 = vmatprep.subr.mxu0 0.0
    %2652 = vmatpush1.msra.mxu0 0.0
    %2653 = vmatprep.subr.mxu0 0.0
    %2654 = vmatpush1.msra.mxu0 0.0
    %2655 = vmatprep.subr.mxu0 0.0
    %2656 = vmatpush1.msra.mxu0 0.0
    %2657 = vmatprep.subr.mxu0 0.0
    %2658 = vmatpush1.msra.mxu0 0.0
    %2659 = vmatprep.subr.mxu0 0.0
    %2660 = vmatpush1.msra.mxu0 0.0
    %2661 = vmatprep.subr.mxu0 0.0
    %2662 = vmatpush1.msra.mxu0 0.0
    %2663 = vmatprep.subr.mxu0 0.0
    %2664 = vmatpush1.msra.mxu0 0.0
    %2665 = vmatprep.subr.mxu0 0.0
    %2666 = vmatpush1.msra.mxu0 0.0
    %2667 = vmatprep.subr.mxu0 0.0
    %2668 = vmatpush1.msra.mxu0 0.0
    %2669 = vmatprep.subr.mxu0 0.0
    %2670 = vmatpush1.msra.mxu0 0.0
    %2671 = vmatprep.subr.mxu0 0.0
    %2672 = vmatpush1.msra.mxu0 0.0
    %2673 = vmatprep.mubr.f32.mxu0 0.0
    %2674 = vmatmul.mubr.f32.gmra.mrb[0].mxu0 %v2607
    %v2675 = vpop.f32.mrb[0].mxu0
    %v2676 = vadd.f32 0.0, %v2675
    %v2677 = vpop.f32.mrb[0].mxu0
    %v2678 = vadd.f32 0.0, %v2677
    %2679 = vdwg.mxu0
    %v2680 = vadd.f32 %v2678, %v78
    %v2683 = vunpack.c.l.s4 1966171168
    %v2684 = vunpack.c.0.s8 %v2683
    %v2685 = vlaneseq
    %v2686 = vshrl.u32 %v2685, 7
    %v2687 = vsub.s32 %v2684, %v2686
    %v2688 = vrot.slane %v2680, %v2687
    %v2689 = vcombine.high %v2688, %v2688
    %v2691 = vunpack.c.l.s4 1966171168
    %v2692 = vunpack.c.0.s8 %v2691
    %v2693 = vlaneseq
    %v2694 = vshrl.u32 %v2693, 7
    %v2695 = vsub.s32 %v2692, %v2694
    %v2696 = vrot.slane %v2688, %v2695
    %v2698 = vunpack.c.l.s4 1966171168
    %v2699 = vunpack.c.0.s8 %v2698
    %v2700 = vlaneseq
    %v2701 = vshrl.u32 %v2700, 7
    %v2702 = vsub.s32 %v2699, %v2701
    %v2703 = vrot.slane %v2689, %v2702
    %2706 = vst.msk [vmem:[#allocation7 + $0x6] sm:$0x1] %vm1462, %v2696
    %2707 = vst.msk [vmem:[#allocation7 + $0xe] sm:$0x1] %vm1462, %v2703
    %v2708 = vsel %vm1465, %v2680, -inf
    %2709 = vmax.index.xlane.f32.xlu0 %v2708
    %v2710 = vpop.xlane.xlu0 %2709
    %vm2711 = vcmp.eq.s32.totalorder %v1254, %v2710
    %v2712 = vsel %vm2711, 1, 0
    %v2713 = vcvt.s32.f32 %v2712
    %v2715 = vsel %vm1258, %v2713, 0
    %2717 = vmatprep.subr.mxu0 0.0
    %2718 = vmatpush1.msra.mxu0 %v1142
    %2719 = vmatprep.subr.mxu0 0.0
    %2720 = vmatpush1.msra.mxu0 %v1147
    %2721 = vmatprep.subr.mxu0 0.0
    %2722 = vmatpush1.msra.mxu0 %v1152
    %2723 = vmatprep.subr.mxu0 0.0
    %2724 = vmatpush1.msra.mxu0 %v1157
    %2725 = vmatprep.subr.mxu0 0.0
    %2726 = vmatpush1.msra.mxu0 %v1162
    %2727 = vmatprep.subr.mxu0 0.0
    %2728 = vmatpush1.msra.mxu0 %v1167
    %2729 = vmatprep.subr.mxu0 0.0
    %2730 = vmatpush1.msra.mxu0 %v1172
    %2731 = vmatprep.subr.mxu0 0.0
    %2732 = vmatpush1.msra.mxu0 %v1177
    %2733 = vmatprep.subr.mxu0 0.0
    %2734 = vmatpush1.msra.mxu0 0.0
    %2735 = vmatprep.subr.mxu0 0.0
    %2736 = vmatpush1.msra.mxu0 0.0
    %2737 = vmatprep.subr.mxu0 0.0
    %2738 = vmatpush1.msra.mxu0 0.0
    %2739 = vmatprep.subr.mxu0 0.0
    %2740 = vmatpush1.msra.mxu0 0.0
    %2741 = vmatprep.subr.mxu0 0.0
    %2742 = vmatpush1.msra.mxu0 0.0
    %2743 = vmatprep.subr.mxu0 0.0
    %2744 = vmatpush1.msra.mxu0 0.0
    %2745 = vmatprep.subr.mxu0 0.0
    %2746 = vmatpush1.msra.mxu0 0.0
    %2747 = vmatprep.subr.mxu0 0.0
    %2748 = vmatpush1.msra.mxu0 0.0
    %2749 = vmatprep.subr.mxu0 0.0
    %2750 = vmatpush1.msra.mxu0 0.0
    %2751 = vmatprep.subr.mxu0 0.0
    %2752 = vmatpush1.msra.mxu0 0.0
    %2753 = vmatprep.subr.mxu0 0.0
    %2754 = vmatpush1.msra.mxu0 0.0
    %2755 = vmatprep.subr.mxu0 0.0
    %2756 = vmatpush1.msra.mxu0 0.0
    %2757 = vmatprep.subr.mxu0 0.0
    %2758 = vmatpush1.msra.mxu0 0.0
    %2759 = vmatprep.subr.mxu0 0.0
    %2760 = vmatpush1.msra.mxu0 0.0
    %2761 = vmatprep.subr.mxu0 0.0
    %2762 = vmatpush1.msra.mxu0 0.0
    %2763 = vmatprep.subr.mxu0 0.0
    %2764 = vmatpush1.msra.mxu0 0.0
    %2765 = vmatprep.subr.mxu0 0.0
    %2766 = vmatpush1.msra.mxu0 0.0
    %2767 = vmatprep.subr.mxu0 0.0
    %2768 = vmatpush1.msra.mxu0 0.0
    %2769 = vmatprep.subr.mxu0 0.0
    %2770 = vmatpush1.msra.mxu0 0.0
    %2771 = vmatprep.subr.mxu0 0.0
    %2772 = vmatpush1.msra.mxu0 0.0
    %2773 = vmatprep.subr.mxu0 0.0
    %2774 = vmatpush1.msra.mxu0 0.0
    %2775 = vmatprep.subr.mxu0 0.0
    %2776 = vmatpush1.msra.mxu0 0.0
    %2777 = vmatprep.subr.mxu0 0.0
    %2778 = vmatpush1.msra.mxu0 0.0
    %2779 = vmatprep.subr.mxu0 0.0
    %2780 = vmatpush1.msra.mxu0 0.0
    %2781 = vmatprep.mubr.f32.mxu0 0.0
    %2782 = vmatmul.mubr.f32.gmra.mrb[0].mxu0 %v2715
    %v2783 = vpop.f32.mrb[0].mxu0
    %v2784 = vadd.f32 %v2676, %v2783
    %v2785 = vpop.f32.mrb[0].mxu0
    %2786 = vdwg.mxu0
    %v2787 = vxor.u32 %v2784, 2147483648
    %v2788 = vmul.f32 %v2787, 1.442695
    %v2789 = vpow.pop %v2788
    %v2790 = vadd.f32 %v2789, 1.0
    %v2791 = vrcp.pop %v2790
    %v2792 = vmul.f32 1.0, %v2791
    %v2793 = vtanh.pop %v2784
    %v2794 = vmul.f32 %v2792, %v2597
    %2796 = vrot.lane.b32.xlu0 %v2793, 64
    %v2797 = vpop.permute.xlu0 %2796
    %v2799 = vmul.f32 %v2792, %v2797
    %2801 = vrot.lane.b32.xlu0 %v2799, 32
    %v2802 = vpop.permute.xlu0 %2801
    %v2804 = vadd.f32 %v2794, %v2802
    %v2805 = vtanh.pop %v2804
    %2807 = vrot.lane.b32.xlu0 %v2805, 64
    %v2808 = vpop.permute.xlu0 %2807
    %v2810 = vmul.f32 %v2792, %v2808
    %2812 = vrot.lane.b32.xlu0 %v2810, 32
    %v2813 = vpop.permute.xlu0 %2812
    %v2814 = vsel %vm93, %v2813, 0
    %2816 = vmatprep.subr.mxu0 %v66
    %2817 = vmatpush1.msra.mxu0 %v65
    %2818 = vmatprep.subr.mxu0 %v68
    %2819 = vmatpush1.msra.mxu0 %v67
    %2820 = vmatprep.subr.mxu0 %v70
    %2821 = vmatpush1.msra.mxu0 %v69
    %2822 = vmatprep.subr.mxu0 %v72
    %2823 = vmatpush1.msra.mxu0 %v71
    %2824 = vmatprep.subr.mxu0 0.0
    %2825 = vmatpush1.msra.mxu0 0.0
    %2826 = vmatprep.subr.mxu0 0.0
    %2827 = vmatpush1.msra.mxu0 0.0
    %2828 = vmatprep.subr.mxu0 0.0
    %2829 = vmatpush1.msra.mxu0 0.0
    %2830 = vmatprep.subr.mxu0 0.0
    %2831 = vmatpush1.msra.mxu0 0.0
    %2832 = vmatprep.subr.mxu0 0.0
    %2833 = vmatpush1.msra.mxu0 0.0
    %2834 = vmatprep.subr.mxu0 0.0
    %2835 = vmatpush1.msra.mxu0 0.0
    %2836 = vmatprep.subr.mxu0 0.0
    %2837 = vmatpush1.msra.mxu0 0.0
    %2838 = vmatprep.subr.mxu0 0.0
    %2839 = vmatpush1.msra.mxu0 0.0
    %2840 = vmatprep.subr.mxu0 0.0
    %2841 = vmatpush1.msra.mxu0 0.0
    %2842 = vmatprep.subr.mxu0 0.0
    %2843 = vmatpush1.msra.mxu0 0.0
    %2844 = vmatprep.subr.mxu0 0.0
    %2845 = vmatpush1.msra.mxu0 0.0
    %2846 = vmatprep.subr.mxu0 0.0
    %2847 = vmatpush1.msra.mxu0 0.0
    %2848 = vmatprep.subr.mxu0 0.0
    %2849 = vmatpush1.msra.mxu0 0.0
    %2850 = vmatprep.subr.mxu0 0.0
    %2851 = vmatpush1.msra.mxu0 0.0
    %2852 = vmatprep.subr.mxu0 0.0
    %2853 = vmatpush1.msra.mxu0 0.0
    %2854 = vmatprep.subr.mxu0 0.0
    %2855 = vmatpush1.msra.mxu0 0.0
    %2856 = vmatprep.subr.mxu0 0.0
    %2857 = vmatpush1.msra.mxu0 0.0
    %2858 = vmatprep.subr.mxu0 0.0
    %2859 = vmatpush1.msra.mxu0 0.0
    %2860 = vmatprep.subr.mxu0 0.0
    %2861 = vmatpush1.msra.mxu0 0.0
    %2862 = vmatprep.subr.mxu0 0.0
    %2863 = vmatpush1.msra.mxu0 0.0
    %2864 = vmatprep.subr.mxu0 0.0
    %2865 = vmatpush1.msra.mxu0 0.0
    %2866 = vmatprep.subr.mxu0 0.0
    %2867 = vmatpush1.msra.mxu0 0.0
    %2868 = vmatprep.subr.mxu0 0.0
    %2869 = vmatpush1.msra.mxu0 0.0
    %2870 = vmatprep.subr.mxu0 0.0
    %2871 = vmatpush1.msra.mxu0 0.0
    %2872 = vmatprep.subr.mxu0 0.0
    %2873 = vmatpush1.msra.mxu0 0.0
    %2874 = vmatprep.subr.mxu0 0.0
    %2875 = vmatpush1.msra.mxu0 0.0
    %2876 = vmatprep.subr.mxu0 0.0
    %2877 = vmatpush1.msra.mxu0 0.0
    %2878 = vmatprep.subr.mxu0 0.0
    %2879 = vmatpush1.msra.mxu0 0.0
    %2880 = vmatprep.mubr.f32.mxu0 0.0
    %2881 = vmatmul.mubr.f32.gmra.mrb[0].mxu0 %v2814
    %v2882 = vpop.f32.mrb[0].mxu0
    %v2883 = vpop.f32.mrb[0].mxu0
    %v2884 = vadd.f32 0.0, %v2883
    %2885 = vdwg.mxu0
    %v2886 = vadd.f32 %v2884, %v78
    %v2889 = vunpack.c.l.s4 1966171168
    %v2890 = vunpack.c.0.s8 %v2889
    %v2891 = vlaneseq
    %v2892 = vshrl.u32 %v2891, 7
    %v2893 = vsub.s32 %v2890, %v2892
    %v2894 = vrot.slane %v2886, %v2893
    %v2895 = vcombine.high %v2894, %v2894
    %v2897 = vunpack.c.l.s4 1966171168
    %v2898 = vunpack.c.0.s8 %v2897
    %v2899 = vlaneseq
    %v2900 = vshrl.u32 %v2899, 7
    %v2901 = vsub.s32 %v2898, %v2900
    %v2902 = vrot.slane %v2894, %v2901
    %v2904 = vunpack.c.l.s4 1966171168
    %v2905 = vunpack.c.0.s8 %v2904
    %v2906 = vlaneseq
    %v2907 = vshrl.u32 %v2906, 7
    %v2908 = vsub.s32 %v2905, %v2907
    %v2909 = vrot.slane %v2895, %v2908
    %2912 = vst.msk [vmem:[#allocation7 + $0x7] sm:$0x1] %vm1462, %v2902
    %2913 = vst.msk [vmem:[#allocation7 + $0xf] sm:$0x1] %vm1462, %v2909
    // Predicated region
    $region46: #{tpu_custom_call.1} parent=1 // pred_check
      _
    $region47: #{tpu_custom_call.1} parent=1 // pred_check_branch
      %2915 = sbr.rel (0) target = $region49
    $region48: #{tpu_custom_call.1} parent=1 // pred_region
      %s2917 = ssub.s32 256, 256
      %2918 = vsyncadd [#allocation4], %s2917
      %s2919 = sshll.u32 [#allocation7], 4
      %s2920 = int_to_ptr.vmem [resolvable:$true] %s2919
      %2925 = dma.vmem_to_hbm [thread:$0]  %s2920, 256, %s9, [#allocation4], 128, 128, 8
    $region49: #{tpu_custom_call.1} parent=1 // pred_fallthru
      _
    // Predicated region
    $region50: #{tpu_custom_call.1} parent=1 // pred_check
      _
    $region51: #{tpu_custom_call.1} parent=1 // pred_check_branch
      %2927 = sbr.rel (0) target = $region53
    $region52: #{tpu_custom_call.1} parent=1 // pred_region
      %2928 = dma.done [#allocation4], 256
    $region53: #{tpu_custom_call.1} parent=1 // pred_fallthru
      _
    %2929 = vsyncpa [#allocation3], 1
    %2930 = vsyncpa [#allocation6], 1
    %2931 = vsyncpa [#allocation4], 1

</llo_original>
